<compile_context>
chip_gen: v6e
topology: v6e:2x2x1
jax: 0.10.0
libtpu: 0.0.40
codegen_flags: <defaults>
</compile_context>

<pallas_src>
import functools

import jax
import jax.numpy as jnp
from jax import lax
from jax.experimental import pallas as pl
from jax.experimental.pallas import tpu as pltpu

LANE = 128


def _round_up(x, m):
    return (x + m - 1) // m * m


def _basic_block_kernel(xp_ref, w1_ref, b1_ref, w2_ref, b2_ref,
                        o_ref, mid_ref, *, H, W, TH, Cp):
    """One (TH, W) row tile of one image per grid step.  Grid = (N, H // TH).

    xp_ref : (H+4, W+2, Cp) bf16  zero-padded NHWC input (2-row / 1-col halo),
                                  resident in VMEM for the whole image.
    w1_ref : (3, 3, Cp, Cp) bf16  conv1 weights (HWIO), BN1 scale folded in.
    b1_ref : (1, Cp) f32          folded BN1 bias.
    w2_ref : (3, 3, Cp, Cp) bf16  conv2 weights (HWIO), BN2 scale folded in.
    b2_ref : (1, Cp) f32          folded BN2 bias.
    o_ref  : (TH, W, Cp) f32      output row tile.
    mid_ref: (TH+2, W+2, Cp) bf16 scratch: conv1 activation tile + 1-px halo.
    """
    t = pl.program_id(1)
    num_t = pl.num_programs(1)
    MH = TH + 2
    r0 = pl.multiple_of(t * TH, TH)           # first output row of this tile

    # ---- conv1 (3x3, pad 1) on output rows [r0-1, r0+TH+1): 9 MXU matmuls --
    acc = None
    for ky in range(3):
        for kx in range(3):
            patch = xp_ref[pl.ds(r0 + ky, MH), kx:kx + W, :]
            term = jnp.dot(patch.reshape(MH * W, Cp), w1_ref[ky, kx],
                           preferred_element_type=jnp.float32)
            acc = term if acc is None else acc + term

    # ---- bn1 (bias only, scale folded into w1) + relu ----------------------
    out1 = jnp.maximum(acc + b1_ref[...], 0.0)
    mid_ref[:, 1:1 + W, :] = out1.reshape(MH, W, Cp).astype(mid_ref.dtype)

    # Left/right halo columns = conv2's zero padding (tiny writes, no bulk
    # scratch zeroing anywhere).
    zcol = jnp.zeros((MH, 1, Cp), mid_ref.dtype)
    mid_ref[:, 0:1, :] = zcol
    mid_ref[:, W + 1:W + 2, :] = zcol

    # Halo rows that fall outside the image = conv2's zero padding.
    zrow = jnp.zeros((1, W + 2, Cp), mid_ref.dtype)

    @pl.when(t == 0)
    def _():
        mid_ref[0:1, :, :] = zrow

    @pl.when(t == num_t - 1)
    def _():
        mid_ref[MH - 1:MH, :, :] = zrow

    # ---- conv2 (3x3, pad 1) on output rows [r0, r0+TH) ----------------------
    acc2 = None
    for ky in range(3):
        for kx in range(3):
            patch = mid_ref[ky:ky + TH, kx:kx + W, :]
            term = jnp.dot(patch.reshape(TH * W, Cp), w2_ref[ky, kx],
                           preferred_element_type=jnp.float32)
            acc2 = term if acc2 is None else acc2 + term

    # ---- bn2 (bias) + residual (read from the padded input interior) + relu
    identity = xp_ref[pl.ds(r0 + 2, TH), 1:1 + W, :]
    identity = identity.reshape(TH * W, Cp).astype(jnp.float32)
    out2 = acc2 + b2_ref[...] + identity
    o_ref[...] = jnp.maximum(out2, 0.0).reshape(TH, W, Cp).astype(o_ref.dtype)


@functools.partial(jax.jit, static_argnames=("eps",))
def basic_block_forward(x, w1, g1, be1, m1, v1, w2, g2, be2, m2, v2, eps=1e-5):
    """BasicBlock forward (stride=1, downsample=None), inference-mode BN.

    x : (N, Cin, H, W) f32 NCHW.  w1/w2: OIHW conv weights (bias=False).
    g/be/m/v: BatchNorm weight / bias / running_mean / running_var, shape (C,).
    Returns (N, Cout, H, W) f32.
    """
    N, Cin, H, W = x.shape
    Cout = w1.shape[0]
    assert Cin == Cout, "stride=1 / downsample=None BasicBlock requires Cin == Cout"

    Cp = _round_up(max(Cin, Cout), LANE)      # lane-dense channel padding
    TH = 8 if H % 8 == 0 else H               # row-tile height
    T = H // TH

    # Fold BN running stats into per-output-channel scale / bias (f32 math).
    s1 = g1 / jnp.sqrt(v1 + eps)
    b1 = be1 - m1 * s1
    s2 = g2 / jnp.sqrt(v2 + eps)
    b2 = be2 - m2 * s2

    def pad_c(v):
        return jnp.pad(v.astype(jnp.float32), (0, Cp - Cout)).reshape(1, Cp)

    b1p, b2p = pad_c(b1), pad_c(b2)

    # OIHW -> HWIO, fold BN scale into the output channels (f32), zero-pad
    # channels to Cp, cast to bf16 for the MXU.
    def prep_w(w, s):
        w = jnp.transpose(w, (2, 3, 1, 0)).astype(jnp.float32)   # (3, 3, I, O)
        w = w * s.reshape(1, 1, 1, -1)                            # fold BN scale
        w = jnp.pad(w, ((0, 0), (0, 0),
                        (0, Cp - w.shape[2]), (0, Cp - w.shape[3])))
        return w.astype(jnp.bfloat16)

    w1p, w2p = prep_w(w1, s1), prep_w(w2, s2)

    # NCHW -> NHWC, 2-row / 1-col zero halo, channel pad, bf16.
    # The residual branch is read back from the interior of this same tensor,
    # so no separate identity input is DMA'd into the kernel.
    # TODO(synk): the halo could be built in-kernel via manual DMA to avoid
    # materializing the padded copy in HBM; kept in XLA for simplicity.
    x_nhwc = jnp.transpose(x, (0, 2, 3, 1))
    xp = jnp.pad(x_nhwc, ((0, 0), (2, 2), (1, 1), (0, Cp - Cin))).astype(jnp.bfloat16)

    flops = 2 * 2 * 9 * N * H * W * Cp * Cp
    bytes_accessed = (xp.size * 2 + N * H * W * Cp * 4
                      + 2 * 9 * Cp * Cp * 2 + 2 * Cp * 4)

    kernel = functools.partial(_basic_block_kernel, H=H, W=W, TH=TH, Cp=Cp)

    out_nhwc = pl.pallas_call(
        kernel,
        out_shape=jax.ShapeDtypeStruct((N, H, W, Cp), jnp.float32),
        grid_spec=pltpu.PrefetchScalarGridSpec(
            num_scalar_prefetch=0,
            grid=(N, T),
            in_specs=[
                # Padded input: block index depends only on n -> resident
                # across all row tiles of the same image (one DMA per image).
                pl.BlockSpec((None, H + 4, W + 2, Cp), lambda n, t: (n, 0, 0, 0)),
                pl.BlockSpec((3, 3, Cp, Cp), lambda n, t: (0, 0, 0, 0)),
                pl.BlockSpec((1, Cp), lambda n, t: (0, 0)),
                pl.BlockSpec((3, 3, Cp, Cp), lambda n, t: (0, 0, 0, 0)),
                pl.BlockSpec((1, Cp), lambda n, t: (0, 0)),
            ],
            out_specs=pl.BlockSpec((None, TH, W, Cp), lambda n, t: (n, t, 0, 0)),
            scratch_shapes=[pltpu.VMEM((TH + 2, W + 2, Cp), jnp.bfloat16)],
        ),
        compiler_params=pltpu.CompilerParams(
            dimension_semantics=("parallel", "parallel")),
        cost_estimate=pl.CostEstimate(flops=flops, transcendentals=0,
                                      bytes_accessed=bytes_accessed),
    )(xp, w1p, b1p, w2p, b2p)

    out = out_nhwc[..., :Cout]                    # drop channel padding
    return jnp.transpose(out, (0, 3, 1, 2))       # back to NCHW


# ------------------------- plain-JAX reference -------------------------
def _ref_basic_block(x_nchw, w1_oihw, g1, be1, m1, v1,
                     w2_oihw, g2, be2, m2, v2, eps=1e-5):
    def conv(x, w):
        return lax.conv_general_dilated(
            x, w, window_strides=(1, 1), padding=((1, 1), (1, 1)),
            dimension_numbers=("NCHW", "OIHW", "NCHW"))

    def bn(x, g, b, m, v):
        g = g.reshape(1, -1, 1, 1); b = b.reshape(1, -1, 1, 1)
        m = m.reshape(1, -1, 1, 1); v = v.reshape(1, -1, 1, 1)
        return (x - m) / jnp.sqrt(v + eps) * g + b

    out = jax.nn.relu(bn(conv(x_nchw, w1_oihw), g1, be1, m1, v1))
    out = bn(conv(out, w2_oihw), g2, be2, m2, v2)
    return jax.nn.relu(out + x_nchw)


if __name__ == "__main__":
    # Small shapes consistent with BasicBlock(inplanes=4, planes=4, stride=1).
    N, C, H, W = 2, 4, 16, 16
    eps = 1e-5

    key = jax.random.PRNGKey(0)
    keys = jax.random.split(key, 12)

    x = jax.random.normal(keys[0], (N, C, H, W), jnp.float32)

    # conv weights, PyTorch OIHW layout (Cout, Cin, 3, 3), bias=False
    w1 = 0.1 * jax.random.normal(keys[1], (C, C, 3, 3), jnp.float32)
    w2 = 0.1 * jax.random.normal(keys[2], (C, C, 3, 3), jnp.float32)

    # BatchNorm parameters / running statistics (inference mode)
    g1 = 1.0 + 0.2 * jax.random.normal(keys[3], (C,), jnp.float32)
    be1 = 0.1 * jax.random.normal(keys[4], (C,), jnp.float32)
    m1 = 0.1 * jax.random.normal(keys[5], (C,), jnp.float32)
    v1 = 1.0 + 0.3 * jax.random.uniform(keys[6], (C,), jnp.float32)
    g2 = 1.0 + 0.2 * jax.random.normal(keys[7], (C,), jnp.float32)
    be2 = 0.1 * jax.random.normal(keys[8], (C,), jnp.float32)
    m2 = 0.1 * jax.random.normal(keys[9], (C,), jnp.float32)
    v2 = 1.0 + 0.3 * jax.random.uniform(keys[10], (C,), jnp.float32)

    out = basic_block_forward(x, w1, g1, be1, m1, v1, w2, g2, be2, m2, v2)
    out = jax.block_until_ready(out)

    ref = _ref_basic_block(x, w1, g1, be1, m1, v1, w2, g2, be2, m2, v2, eps)
    ref = jax.block_until_ready(ref)

    assert out.shape == (N, C, H, W), out.shape
    max_err = float(jnp.max(jnp.abs(out - ref)))
    # bf16 activations / weights (f32 accumulation) -> relaxed tolerance.
    assert jnp.allclose(out, ref, rtol=2e-2, atol=5e-2), max_err

    print("KERNEL_OK")
</pallas_src>

<mosaic_0001>
module attributes {stable_mosaic.version = 11 : i64} {
  func.func @_basic_block_kernel(%arg0: i32, %arg1: i32, %arg2: memref<1x20x18x128xbf16, #tpu.memory_space<vmem>>, %arg3: memref<3x3x128x128xbf16, #tpu.memory_space<vmem>>, %arg4: memref<1x128xf32, #tpu.memory_space<vmem>>, %arg5: memref<3x3x128x128xbf16, #tpu.memory_space<vmem>>, %arg6: memref<1x128xf32, #tpu.memory_space<vmem>>, %arg7: memref<1x8x16x128xf32, #tpu.memory_space<vmem>>, %arg8: memref<10x18x128xbf16, #tpu.memory_space<vmem>>) attributes {dimension_semantics = [#tpu.dimension_semantics<parallel>, #tpu.dimension_semantics<parallel>], iteration_bounds = array<i64: 2, 2>, scalar_prefetch = 0 : i64, scratch_operands = 1 : i64, tpu.core_type = #tpu.core_type<tc>, window_params = [{transform_indices = @transform_0, window_bounds = array<i64: 1, 20, 18, 128>}, {pipeline_mode = #tpu.pipeline_mode<synchronous>, transform_indices = @transform_1, window_bounds = array<i64: 3, 3, 128, 128>}, {pipeline_mode = #tpu.pipeline_mode<synchronous>, transform_indices = @transform_2, window_bounds = array<i64: 1, 128>}, {pipeline_mode = #tpu.pipeline_mode<synchronous>, transform_indices = @transform_3, window_bounds = array<i64: 3, 3, 128, 128>}, {pipeline_mode = #tpu.pipeline_mode<synchronous>, transform_indices = @transform_4, window_bounds = array<i64: 1, 128>}, {transform_indices = @transform_5, window_bounds = array<i64: 1, 8, 16, 128>}]} {
    %c8_i32 = arith.constant 8 : i32
    %0 = arith.muli %arg1, %c8_i32 : i32
    %1 = tpu.assume_multiple %0, 8 : i32
    %c0_i32 = arith.constant 0 : i32
    %2 = arith.addi %1, %c0_i32 : i32
    %c0 = arith.constant 0 : index
    %3 = arith.index_cast %2 : i32 to index
    %c0_0 = arith.constant 0 : index
    %c0_1 = arith.constant 0 : index
    %4 = vector.load %arg2[%c0, %3, %c0_0, %c0_1] : memref<1x20x18x128xbf16, #tpu.memory_space<vmem>>, vector<1x10x16x128xbf16>
    %5 = vector.shape_cast %4 : vector<1x10x16x128xbf16> to vector<10x16x128xbf16>
    %6 = vector.shape_cast %5 : vector<10x16x128xbf16> to vector<160x128xbf16>
    %c0_2 = arith.constant 0 : index
    %c0_3 = arith.constant 0 : index
    %c0_4 = arith.constant 0 : index
    %c0_5 = arith.constant 0 : index
    %7 = vector.load %arg3[%c0_2, %c0_3, %c0_4, %c0_5] : memref<3x3x128x128xbf16, #tpu.memory_space<vmem>>, vector<1x1x128x128xbf16>
    %8 = vector.shape_cast %7 : vector<1x1x128x128xbf16> to vector<128x128xbf16>
    %cst = arith.constant dense<0.000000e+00> : vector<160x128xf32>
    %9 = tpu.matmul %6, %8, %cst {dimension_numbers = #tpu.dot_dimension_numbers<[1], [0], [0], [1], [0, 0, 1, 1], [], []>} : vector<160x128xbf16>, vector<128x128xbf16>, vector<160x128xf32> -> vector<160x128xf32>
    %c0_i32_6 = arith.constant 0 : i32
    %10 = arith.addi %1, %c0_i32_6 : i32
    %c0_7 = arith.constant 0 : index
    %11 = arith.index_cast %10 : i32 to index
    %c1 = arith.constant 1 : index
    %c0_8 = arith.constant 0 : index
    %12 = vector.load %arg2[%c0_7, %11, %c1, %c0_8] : memref<1x20x18x128xbf16, #tpu.memory_space<vmem>>, vector<1x10x16x128xbf16>
    %13 = vector.shape_cast %12 : vector<1x10x16x128xbf16> to vector<10x16x128xbf16>
    %14 = vector.shape_cast %13 : vector<10x16x128xbf16> to vector<160x128xbf16>
    %c0_9 = arith.constant 0 : index
    %c1_10 = arith.constant 1 : index
    %c0_11 = arith.constant 0 : index
    %c0_12 = arith.constant 0 : index
    %15 = vector.load %arg3[%c0_9, %c1_10, %c0_11, %c0_12] : memref<3x3x128x128xbf16, #tpu.memory_space<vmem>>, vector<1x1x128x128xbf16>
    %16 = vector.shape_cast %15 : vector<1x1x128x128xbf16> to vector<128x128xbf16>
    %cst_13 = arith.constant dense<0.000000e+00> : vector<160x128xf32>
    %17 = tpu.matmul %14, %16, %cst_13 {dimension_numbers = #tpu.dot_dimension_numbers<[1], [0], [0], [1], [0, 0, 1, 1], [], []>} : vector<160x128xbf16>, vector<128x128xbf16>, vector<160x128xf32> -> vector<160x128xf32>
    %18 = arith.addf %9, %17 : vector<160x128xf32>
    %c0_i32_14 = arith.constant 0 : i32
    %19 = arith.addi %1, %c0_i32_14 : i32
    %c0_15 = arith.constant 0 : index
    %20 = arith.index_cast %19 : i32 to index
    %c2 = arith.constant 2 : index
    %c0_16 = arith.constant 0 : index
    %21 = vector.load %arg2[%c0_15, %20, %c2, %c0_16] : memref<1x20x18x128xbf16, #tpu.memory_space<vmem>>, vector<1x10x16x128xbf16>
    %22 = vector.shape_cast %21 : vector<1x10x16x128xbf16> to vector<10x16x128xbf16>
    %23 = vector.shape_cast %22 : vector<10x16x128xbf16> to vector<160x128xbf16>
    %c0_17 = arith.constant 0 : index
    %c2_18 = arith.constant 2 : index
    %c0_19 = arith.constant 0 : index
    %c0_20 = arith.constant 0 : index
    %24 = vector.load %arg3[%c0_17, %c2_18, %c0_19, %c0_20] : memref<3x3x128x128xbf16, #tpu.memory_space<vmem>>, vector<1x1x128x128xbf16>
    %25 = vector.shape_cast %24 : vector<1x1x128x128xbf16> to vector<128x128xbf16>
    %cst_21 = arith.constant dense<0.000000e+00> : vector<160x128xf32>
    %26 = tpu.matmul %23, %25, %cst_21 {dimension_numbers = #tpu.dot_dimension_numbers<[1], [0], [0], [1], [0, 0, 1, 1], [], []>} : vector<160x128xbf16>, vector<128x128xbf16>, vector<160x128xf32> -> vector<160x128xf32>
    %27 = arith.addf %18, %26 : vector<160x128xf32>
    %c1_i32 = arith.constant 1 : i32
    %28 = arith.addi %1, %c1_i32 : i32
    %c0_22 = arith.constant 0 : index
    %29 = arith.index_cast %28 : i32 to index
    %c0_23 = arith.constant 0 : index
    %c0_24 = arith.constant 0 : index
    %30 = vector.load %arg2[%c0_22, %29, %c0_23, %c0_24] : memref<1x20x18x128xbf16, #tpu.memory_space<vmem>>, vector<1x10x16x128xbf16>
    %31 = vector.shape_cast %30 : vector<1x10x16x128xbf16> to vector<10x16x128xbf16>
    %32 = vector.shape_cast %31 : vector<10x16x128xbf16> to vector<160x128xbf16>
    %c1_25 = arith.constant 1 : index
    %c0_26 = arith.constant 0 : index
    %c0_27 = arith.constant 0 : index
    %c0_28 = arith.constant 0 : index
    %33 = vector.load %arg3[%c1_25, %c0_26, %c0_27, %c0_28] : memref<3x3x128x128xbf16, #tpu.memory_space<vmem>>, vector<1x1x128x128xbf16>
    %34 = vector.shape_cast %33 : vector<1x1x128x128xbf16> to vector<128x128xbf16>
    %cst_29 = arith.constant dense<0.000000e+00> : vector<160x128xf32>
    %35 = tpu.matmul %32, %34, %cst_29 {dimension_numbers = #tpu.dot_dimension_numbers<[1], [0], [0], [1], [0, 0, 1, 1], [], []>} : vector<160x128xbf16>, vector<128x128xbf16>, vector<160x128xf32> -> vector<160x128xf32>
    %36 = arith.addf %27, %35 : vector<160x128xf32>
    %c1_i32_30 = arith.constant 1 : i32
    %37 = arith.addi %1, %c1_i32_30 : i32
    %c0_31 = arith.constant 0 : index
    %38 = arith.index_cast %37 : i32 to index
    %c1_32 = arith.constant 1 : index
    %c0_33 = arith.constant 0 : index
    %39 = vector.load %arg2[%c0_31, %38, %c1_32, %c0_33] : memref<1x20x18x128xbf16, #tpu.memory_space<vmem>>, vector<1x10x16x128xbf16>
    %40 = vector.shape_cast %39 : vector<1x10x16x128xbf16> to vector<10x16x128xbf16>
    %41 = vector.shape_cast %40 : vector<10x16x128xbf16> to vector<160x128xbf16>
    %c1_34 = arith.constant 1 : index
    %c1_35 = arith.constant 1 : index
    %c0_36 = arith.constant 0 : index
    %c0_37 = arith.constant 0 : index
    %42 = vector.load %arg3[%c1_34, %c1_35, %c0_36, %c0_37] : memref<3x3x128x128xbf16, #tpu.memory_space<vmem>>, vector<1x1x128x128xbf16>
    %43 = vector.shape_cast %42 : vector<1x1x128x128xbf16> to vector<128x128xbf16>
    %cst_38 = arith.constant dense<0.000000e+00> : vector<160x128xf32>
    %44 = tpu.matmul %41, %43, %cst_38 {dimension_numbers = #tpu.dot_dimension_numbers<[1], [0], [0], [1], [0, 0, 1, 1], [], []>} : vector<160x128xbf16>, vector<128x128xbf16>, vector<160x128xf32> -> vector<160x128xf32>
    %45 = arith.addf %36, %44 : vector<160x128xf32>
    %c1_i32_39 = arith.constant 1 : i32
    %46 = arith.addi %1, %c1_i32_39 : i32
    %c0_40 = arith.constant 0 : index
    %47 = arith.index_cast %46 : i32 to index
    %c2_41 = arith.constant 2 : index
    %c0_42 = arith.constant 0 : index
    %48 = vector.load %arg2[%c0_40, %47, %c2_41, %c0_42] : memref<1x20x18x128xbf16, #tpu.memory_space<vmem>>, vector<1x10x16x128xbf16>
    %49 = vector.shape_cast %48 : vector<1x10x16x128xbf16> to vector<10x16x128xbf16>
    %50 = vector.shape_cast %49 : vector<10x16x128xbf16> to vector<160x128xbf16>
    %c1_43 = arith.constant 1 : index
    %c2_44 = arith.constant 2 : index
    %c0_45 = arith.constant 0 : index
    %c0_46 = arith.constant 0 : index
    %51 = vector.load %arg3[%c1_43, %c2_44, %c0_45, %c0_46] : memref<3x3x128x128xbf16, #tpu.memory_space<vmem>>, vector<1x1x128x128xbf16>
    %52 = vector.shape_cast %51 : vector<1x1x128x128xbf16> to vector<128x128xbf16>
    %cst_47 = arith.constant dense<0.000000e+00> : vector<160x128xf32>
    %53 = tpu.matmul %50, %52, %cst_47 {dimension_numbers = #tpu.dot_dimension_numbers<[1], [0], [0], [1], [0, 0, 1, 1], [], []>} : vector<160x128xbf16>, vector<128x128xbf16>, vector<160x128xf32> -> vector<160x128xf32>
    %54 = arith.addf %45, %53 : vector<160x128xf32>
    %c2_i32 = arith.constant 2 : i32
    %55 = arith.addi %1, %c2_i32 : i32
    %c0_48 = arith.constant 0 : index
    %56 = arith.index_cast %55 : i32 to index
    %c0_49 = arith.constant 0 : index
    %c0_50 = arith.constant 0 : index
    %57 = vector.load %arg2[%c0_48, %56, %c0_49, %c0_50] : memref<1x20x18x128xbf16, #tpu.memory_space<vmem>>, vector<1x10x16x128xbf16>
    %58 = vector.shape_cast %57 : vector<1x10x16x128xbf16> to vector<10x16x128xbf16>
    %59 = vector.shape_cast %58 : vector<10x16x128xbf16> to vector<160x128xbf16>
    %c2_51 = arith.constant 2 : index
    %c0_52 = arith.constant 0 : index
    %c0_53 = arith.constant 0 : index
    %c0_54 = arith.constant 0 : index
    %60 = vector.load %arg3[%c2_51, %c0_52, %c0_53, %c0_54] : memref<3x3x128x128xbf16, #tpu.memory_space<vmem>>, vector<1x1x128x128xbf16>
    %61 = vector.shape_cast %60 : vector<1x1x128x128xbf16> to vector<128x128xbf16>
    %cst_55 = arith.constant dense<0.000000e+00> : vector<160x128xf32>
    %62 = tpu.matmul %59, %61, %cst_55 {dimension_numbers = #tpu.dot_dimension_numbers<[1], [0], [0], [1], [0, 0, 1, 1], [], []>} : vector<160x128xbf16>, vector<128x128xbf16>, vector<160x128xf32> -> vector<160x128xf32>
    %63 = arith.addf %54, %62 : vector<160x128xf32>
    %c2_i32_56 = arith.constant 2 : i32
    %64 = arith.addi %1, %c2_i32_56 : i32
    %c0_57 = arith.constant 0 : index
    %65 = arith.index_cast %64 : i32 to index
    %c1_58 = arith.constant 1 : index
    %c0_59 = arith.constant 0 : index
    %66 = vector.load %arg2[%c0_57, %65, %c1_58, %c0_59] : memref<1x20x18x128xbf16, #tpu.memory_space<vmem>>, vector<1x10x16x128xbf16>
    %67 = vector.shape_cast %66 : vector<1x10x16x128xbf16> to vector<10x16x128xbf16>
    %68 = vector.shape_cast %67 : vector<10x16x128xbf16> to vector<160x128xbf16>
    %c2_60 = arith.constant 2 : index
    %c1_61 = arith.constant 1 : index
    %c0_62 = arith.constant 0 : index
    %c0_63 = arith.constant 0 : index
    %69 = vector.load %arg3[%c2_60, %c1_61, %c0_62, %c0_63] : memref<3x3x128x128xbf16, #tpu.memory_space<vmem>>, vector<1x1x128x128xbf16>
    %70 = vector.shape_cast %69 : vector<1x1x128x128xbf16> to vector<128x128xbf16>
    %cst_64 = arith.constant dense<0.000000e+00> : vector<160x128xf32>
    %71 = tpu.matmul %68, %70, %cst_64 {dimension_numbers = #tpu.dot_dimension_numbers<[1], [0], [0], [1], [0, 0, 1, 1], [], []>} : vector<160x128xbf16>, vector<128x128xbf16>, vector<160x128xf32> -> vector<160x128xf32>
    %72 = arith.addf %63, %71 : vector<160x128xf32>
    %c2_i32_65 = arith.constant 2 : i32
    %73 = arith.addi %1, %c2_i32_65 : i32
    %c0_66 = arith.constant 0 : index
    %74 = arith.index_cast %73 : i32 to index
    %c2_67 = arith.constant 2 : index
    %c0_68 = arith.constant 0 : index
    %75 = vector.load %arg2[%c0_66, %74, %c2_67, %c0_68] : memref<1x20x18x128xbf16, #tpu.memory_space<vmem>>, vector<1x10x16x128xbf16>
    %76 = vector.shape_cast %75 : vector<1x10x16x128xbf16> to vector<10x16x128xbf16>
    %77 = vector.shape_cast %76 : vector<10x16x128xbf16> to vector<160x128xbf16>
    %c2_69 = arith.constant 2 : index
    %c2_70 = arith.constant 2 : index
    %c0_71 = arith.constant 0 : index
    %c0_72 = arith.constant 0 : index
    %78 = vector.load %arg3[%c2_69, %c2_70, %c0_71, %c0_72] : memref<3x3x128x128xbf16, #tpu.memory_space<vmem>>, vector<1x1x128x128xbf16>
    %79 = vector.shape_cast %78 : vector<1x1x128x128xbf16> to vector<128x128xbf16>
    %cst_73 = arith.constant dense<0.000000e+00> : vector<160x128xf32>
    %80 = tpu.matmul %77, %79, %cst_73 {dimension_numbers = #tpu.dot_dimension_numbers<[1], [0], [0], [1], [0, 0, 1, 1], [], []>} : vector<160x128xbf16>, vector<128x128xbf16>, vector<160x128xf32> -> vector<160x128xf32>
    %81 = arith.addf %72, %80 : vector<160x128xf32>
    %c0_74 = arith.constant 0 : index
    %c0_75 = arith.constant 0 : index
    %82 = vector.load %arg4[%c0_74, %c0_75] : memref<1x128xf32, #tpu.memory_space<vmem>>, vector<1x128xf32>
    %83 = vector.broadcast %82 : vector<1x128xf32> to vector<160x128xf32>
    %84 = arith.addf %81, %83 : vector<160x128xf32>
    %cst_76 = arith.constant 0.000000e+00 : f32
    %85 = vector.broadcast %cst_76 : f32 to vector<160x128xf32>
    %86 = arith.maximumf %84, %85 : vector<160x128xf32>
    %87 = vector.shape_cast %86 : vector<160x128xf32> to vector<10x16x128xf32>
    %88 = arith.truncf %87 : vector<10x16x128xf32> to vector<10x16x128xbf16>
    %c0_77 = arith.constant 0 : index
    %c1_78 = arith.constant 1 : index
    %c0_79 = arith.constant 0 : index
    %89 = vector.load %arg8[%c0_77, %c1_78, %c0_79] : memref<10x18x128xbf16, #tpu.memory_space<vmem>>, vector<10x16x128xbf16>
    tpu.vector_store %arg8[%c0_77, %c1_78, %c0_79], %88 {strides = array<i32>} : memref<10x18x128xbf16, #tpu.memory_space<vmem>>, vector<10x16x128xbf16>,
    %cst_80 = arith.constant 0.000000e+00 : bf16
    %90 = vector.broadcast %cst_80 : bf16 to vector<10x1x128xbf16>
    %c0_81 = arith.constant 0 : index
    %c0_82 = arith.constant 0 : index
    %c0_83 = arith.constant 0 : index
    %91 = vector.load %arg8[%c0_81, %c0_82, %c0_83] : memref<10x18x128xbf16, #tpu.memory_space<vmem>>, vector<10x1x128xbf16>
    tpu.vector_store %arg8[%c0_81, %c0_82, %c0_83], %90 {strides = array<i32>} : memref<10x18x128xbf16, #tpu.memory_space<vmem>>, vector<10x1x128xbf16>,
    %c0_84 = arith.constant 0 : index
    %c17 = arith.constant 17 : index
    %c0_85 = arith.constant 0 : index
    %92 = vector.load %arg8[%c0_84, %c17, %c0_85] : memref<10x18x128xbf16, #tpu.memory_space<vmem>>, vector<10x1x128xbf16>
    tpu.vector_store %arg8[%c0_84, %c17, %c0_85], %90 {strides = array<i32>} : memref<10x18x128xbf16, #tpu.memory_space<vmem>>, vector<10x1x128xbf16>,
    %cst_86 = arith.constant 0.000000e+00 : bf16
    %93 = vector.broadcast %cst_86 : bf16 to vector<1x18x128xbf16>
    %c0_i32_87 = arith.constant 0 : i32
    %94 = arith.cmpi eq, %arg1, %c0_i32_87 : i32
    %95 = arith.extui %94 : i1 to i32
    %c0_i32_88 = arith.constant 0 : i32
    %96 = arith.cmpi ne, %95, %c0_i32_88 : i32
    scf.if %96 {
      %c0_174 = arith.constant 0 : index
      %c0_175 = arith.constant 0 : index
      %c0_176 = arith.constant 0 : index
      %169 = vector.load %arg8[%c0_174, %c0_175, %c0_176] : memref<10x18x128xbf16, #tpu.memory_space<vmem>>, vector<1x18x128xbf16>
      tpu.vector_store %arg8[%c0_174, %c0_175, %c0_176], %93 {strides = array<i32>} : memref<10x18x128xbf16, #tpu.memory_space<vmem>>, vector<1x18x128xbf16>,
    } else {
    }
    %c1_i32_89 = arith.constant 1 : i32
    %97 = arith.cmpi eq, %arg1, %c1_i32_89 : i32
    %98 = arith.extui %97 : i1 to i32
    %c0_i32_90 = arith.constant 0 : i32
    %99 = arith.cmpi ne, %98, %c0_i32_90 : i32
    scf.if %99 {
      %c9 = arith.constant 9 : index
      %c0_174 = arith.constant 0 : index
      %c0_175 = arith.constant 0 : index
      %169 = vector.load %arg8[%c9, %c0_174, %c0_175] : memref<10x18x128xbf16, #tpu.memory_space<vmem>>, vector<1x18x128xbf16>
      tpu.vector_store %arg8[%c9, %c0_174, %c0_175], %93 {strides = array<i32>} : memref<10x18x128xbf16, #tpu.memory_space<vmem>>, vector<1x18x128xbf16>,
    } else {
    }
    %c0_91 = arith.constant 0 : index
    %c0_92 = arith.constant 0 : index
    %c0_93 = arith.constant 0 : index
    %100 = vector.load %arg8[%c0_91, %c0_92, %c0_93] : memref<10x18x128xbf16, #tpu.memory_space<vmem>>, vector<8x16x128xbf16>
    %101 = vector.shape_cast %100 : vector<8x16x128xbf16> to vector<128x128xbf16>
    %c0_94 = arith.constant 0 : index
    %c0_95 = arith.constant 0 : index
    %c0_96 = arith.constant 0 : index
    %c0_97 = arith.constant 0 : index
    %102 = vector.load %arg5[%c0_94, %c0_95, %c0_96, %c0_97] : memref<3x3x128x128xbf16, #tpu.memory_space<vmem>>, vector<1x1x128x128xbf16>
    %103 = vector.shape_cast %102 : vector<1x1x128x128xbf16> to vector<128x128xbf16>
    %cst_98 = arith.constant dense<0.000000e+00> : vector<128x128xf32>
    %104 = tpu.matmul %101, %103, %cst_98 {dimension_numbers = #tpu.dot_dimension_numbers<[1], [0], [0], [1], [0, 0, 1, 1], [], []>} : vector<128x128xbf16>, vector<128x128xbf16>, vector<128x128xf32> -> vector<128x128xf32>
    %c0_99 = arith.constant 0 : index
    %c1_100 = arith.constant 1 : index
    %c0_101 = arith.constant 0 : index
    %105 = vector.load %arg8[%c0_99, %c1_100, %c0_101] : memref<10x18x128xbf16, #tpu.memory_space<vmem>>, vector<8x16x128xbf16>
    %106 = vector.shape_cast %105 : vector<8x16x128xbf16> to vector<128x128xbf16>
    %c0_102 = arith.constant 0 : index
    %c1_103 = arith.constant 1 : index
    %c0_104 = arith.constant 0 : index
    %c0_105 = arith.constant 0 : index
    %107 = vector.load %arg5[%c0_102, %c1_103, %c0_104, %c0_105] : memref<3x3x128x128xbf16, #tpu.memory_space<vmem>>, vector<1x1x128x128xbf16>
    %108 = vector.shape_cast %107 : vector<1x1x128x128xbf16> to vector<128x128xbf16>
    %cst_106 = arith.constant dense<0.000000e+00> : vector<128x128xf32>
    %109 = tpu.matmul %106, %108, %cst_106 {dimension_numbers = #tpu.dot_dimension_numbers<[1], [0], [0], [1], [0, 0, 1, 1], [], []>} : vector<128x128xbf16>, vector<128x128xbf16>, vector<128x128xf32> -> vector<128x128xf32>
    %110 = arith.addf %104, %109 : vector<128x128xf32>
    %c0_107 = arith.constant 0 : index
    %c2_108 = arith.constant 2 : index
    %c0_109 = arith.constant 0 : index
    %111 = vector.load %arg8[%c0_107, %c2_108, %c0_109] : memref<10x18x128xbf16, #tpu.memory_space<vmem>>, vector<8x16x128xbf16>
    %112 = vector.shape_cast %111 : vector<8x16x128xbf16> to vector<128x128xbf16>
    %c0_110 = arith.constant 0 : index
    %c2_111 = arith.constant 2 : index
    %c0_112 = arith.constant 0 : index
    %c0_113 = arith.constant 0 : index
    %113 = vector.load %arg5[%c0_110, %c2_111, %c0_112, %c0_113] : memref<3x3x128x128xbf16, #tpu.memory_space<vmem>>, vector<1x1x128x128xbf16>
    %114 = vector.shape_cast %113 : vector<1x1x128x128xbf16> to vector<128x128xbf16>
    %cst_114 = arith.constant dense<0.000000e+00> : vector<128x128xf32>
    %115 = tpu.matmul %112, %114, %cst_114 {dimension_numbers = #tpu.dot_dimension_numbers<[1], [0], [0], [1], [0, 0, 1, 1], [], []>} : vector<128x128xbf16>, vector<128x128xbf16>, vector<128x128xf32> -> vector<128x128xf32>
    %116 = arith.addf %110, %115 : vector<128x128xf32>
    %c1_115 = arith.constant 1 : index
    %c0_116 = arith.constant 0 : index
    %c0_117 = arith.constant 0 : index
    %117 = vector.load %arg8[%c1_115, %c0_116, %c0_117] : memref<10x18x128xbf16, #tpu.memory_space<vmem>>, vector<8x16x128xbf16>
    %118 = vector.shape_cast %117 : vector<8x16x128xbf16> to vector<128x128xbf16>
    %c1_118 = arith.constant 1 : index
    %c0_119 = arith.constant 0 : index
    %c0_120 = arith.constant 0 : index
    %c0_121 = arith.constant 0 : index
    %119 = vector.load %arg5[%c1_118, %c0_119, %c0_120, %c0_121] : memref<3x3x128x128xbf16, #tpu.memory_space<vmem>>, vector<1x1x128x128xbf16>
    %120 = vector.shape_cast %119 : vector<1x1x128x128xbf16> to vector<128x128xbf16>
    %cst_122 = arith.constant dense<0.000000e+00> : vector<128x128xf32>
    %121 = tpu.matmul %118, %120, %cst_122 {dimension_numbers = #tpu.dot_dimension_numbers<[1], [0], [0], [1], [0, 0, 1, 1], [], []>} : vector<128x128xbf16>, vector<128x128xbf16>, vector<128x128xf32> -> vector<128x128xf32>
    %122 = arith.addf %116, %121 : vector<128x128xf32>
    %c1_123 = arith.constant 1 : index
    %c1_124 = arith.constant 1 : index
    %c0_125 = arith.constant 0 : index
    %123 = vector.load %arg8[%c1_123, %c1_124, %c0_125] : memref<10x18x128xbf16, #tpu.memory_space<vmem>>, vector<8x16x128xbf16>
    %124 = vector.shape_cast %123 : vector<8x16x128xbf16> to vector<128x128xbf16>
    %c1_126 = arith.constant 1 : index
    %c1_127 = arith.constant 1 : index
    %c0_128 = arith.constant 0 : index
    %c0_129 = arith.constant 0 : index
    %125 = vector.load %arg5[%c1_126, %c1_127, %c0_128, %c0_129] : memref<3x3x128x128xbf16, #tpu.memory_space<vmem>>, vector<1x1x128x128xbf16>
    %126 = vector.shape_cast %125 : vector<1x1x128x128xbf16> to vector<128x128xbf16>
    %cst_130 = arith.constant dense<0.000000e+00> : vector<128x128xf32>
    %127 = tpu.matmul %124, %126, %cst_130 {dimension_numbers = #tpu.dot_dimension_numbers<[1], [0], [0], [1], [0, 0, 1, 1], [], []>} : vector<128x128xbf16>, vector<128x128xbf16>, vector<128x128xf32> -> vector<128x128xf32>
    %128 = arith.addf %122, %127 : vector<128x128xf32>
    %c1_131 = arith.constant 1 : index
    %c2_132 = arith.constant 2 : index
    %c0_133 = arith.constant 0 : index
    %129 = vector.load %arg8[%c1_131, %c2_132, %c0_133] : memref<10x18x128xbf16, #tpu.memory_space<vmem>>, vector<8x16x128xbf16>
    %130 = vector.shape_cast %129 : vector<8x16x128xbf16> to vector<128x128xbf16>
    %c1_134 = arith.constant 1 : index
    %c2_135 = arith.constant 2 : index
    %c0_136 = arith.constant 0 : index
    %c0_137 = arith.constant 0 : index
    %131 = vector.load %arg5[%c1_134, %c2_135, %c0_136, %c0_137] : memref<3x3x128x128xbf16, #tpu.memory_space<vmem>>, vector<1x1x128x128xbf16>
    %132 = vector.shape_cast %131 : vector<1x1x128x128xbf16> to vector<128x128xbf16>
    %cst_138 = arith.constant dense<0.000000e+00> : vector<128x128xf32>
    %133 = tpu.matmul %130, %132, %cst_138 {dimension_numbers = #tpu.dot_dimension_numbers<[1], [0], [0], [1], [0, 0, 1, 1], [], []>} : vector<128x128xbf16>, vector<128x128xbf16>, vector<128x128xf32> -> vector<128x128xf32>
    %134 = arith.addf %128, %133 : vector<128x128xf32>
    %c2_139 = arith.constant 2 : index
    %c0_140 = arith.constant 0 : index
    %c0_141 = arith.constant 0 : index
    %135 = vector.load %arg8[%c2_139, %c0_140, %c0_141] : memref<10x18x128xbf16, #tpu.memory_space<vmem>>, vector<8x16x128xbf16>
    %136 = vector.shape_cast %135 : vector<8x16x128xbf16> to vector<128x128xbf16>
    %c2_142 = arith.constant 2 : index
    %c0_143 = arith.constant 0 : index
    %c0_144 = arith.constant 0 : index
    %c0_145 = arith.constant 0 : index
    %137 = vector.load %arg5[%c2_142, %c0_143, %c0_144, %c0_145] : memref<3x3x128x128xbf16, #tpu.memory_space<vmem>>, vector<1x1x128x128xbf16>
    %138 = vector.shape_cast %137 : vector<1x1x128x128xbf16> to vector<128x128xbf16>
    %cst_146 = arith.constant dense<0.000000e+00> : vector<128x128xf32>
    %139 = tpu.matmul %136, %138, %cst_146 {dimension_numbers = #tpu.dot_dimension_numbers<[1], [0], [0], [1], [0, 0, 1, 1], [], []>} : vector<128x128xbf16>, vector<128x128xbf16>, vector<128x128xf32> -> vector<128x128xf32>
    %140 = arith.addf %134, %139 : vector<128x128xf32>
    %c2_147 = arith.constant 2 : index
    %c1_148 = arith.constant 1 : index
    %c0_149 = arith.constant 0 : index
    %141 = vector.load %arg8[%c2_147, %c1_148, %c0_149] : memref<10x18x128xbf16, #tpu.memory_space<vmem>>, vector<8x16x128xbf16>
    %142 = vector.shape_cast %141 : vector<8x16x128xbf16> to vector<128x128xbf16>
    %c2_150 = arith.constant 2 : index
    %c1_151 = arith.constant 1 : index
    %c0_152 = arith.constant 0 : index
    %c0_153 = arith.constant 0 : index
    %143 = vector.load %arg5[%c2_150, %c1_151, %c0_152, %c0_153] : memref<3x3x128x128xbf16, #tpu.memory_space<vmem>>, vector<1x1x128x128xbf16>
    %144 = vector.shape_cast %143 : vector<1x1x128x128xbf16> to vector<128x128xbf16>
    %cst_154 = arith.constant dense<0.000000e+00> : vector<128x128xf32>
    %145 = tpu.matmul %142, %144, %cst_154 {dimension_numbers = #tpu.dot_dimension_numbers<[1], [0], [0], [1], [0, 0, 1, 1], [], []>} : vector<128x128xbf16>, vector<128x128xbf16>, vector<128x128xf32> -> vector<128x128xf32>
    %146 = arith.addf %140, %145 : vector<128x128xf32>
    %c2_155 = arith.constant 2 : index
    %c2_156 = arith.constant 2 : index
    %c0_157 = arith.constant 0 : index
    %147 = vector.load %arg8[%c2_155, %c2_156, %c0_157] : memref<10x18x128xbf16, #tpu.memory_space<vmem>>, vector<8x16x128xbf16>
    %148 = vector.shape_cast %147 : vector<8x16x128xbf16> to vector<128x128xbf16>
    %c2_158 = arith.constant 2 : index
    %c2_159 = arith.constant 2 : index
    %c0_160 = arith.constant 0 : index
    %c0_161 = arith.constant 0 : index
    %149 = vector.load %arg5[%c2_158, %c2_159, %c0_160, %c0_161] : memref<3x3x128x128xbf16, #tpu.memory_space<vmem>>, vector<1x1x128x128xbf16>
    %150 = vector.shape_cast %149 : vector<1x1x128x128xbf16> to vector<128x128xbf16>
    %cst_162 = arith.constant dense<0.000000e+00> : vector<128x128xf32>
    %151 = tpu.matmul %148, %150, %cst_162 {dimension_numbers = #tpu.dot_dimension_numbers<[1], [0], [0], [1], [0, 0, 1, 1], [], []>} : vector<128x128xbf16>, vector<128x128xbf16>, vector<128x128xf32> -> vector<128x128xf32>
    %152 = arith.addf %146, %151 : vector<128x128xf32>
    %c2_i32_163 = arith.constant 2 : i32
    %153 = arith.addi %1, %c2_i32_163 : i32
    %c0_164 = arith.constant 0 : index
    %154 = arith.index_cast %153 : i32 to index
    %c1_165 = arith.constant 1 : index
    %c0_166 = arith.constant 0 : index
    %155 = vector.load %arg2[%c0_164, %154, %c1_165, %c0_166] : memref<1x20x18x128xbf16, #tpu.memory_space<vmem>>, vector<1x8x16x128xbf16>
    %156 = vector.shape_cast %155 : vector<1x8x16x128xbf16> to vector<8x16x128xbf16>
    %157 = vector.shape_cast %156 : vector<8x16x128xbf16> to vector<128x128xbf16>
    %158 = arith.extf %157 : vector<128x128xbf16> to vector<128x128xf32>
    %c0_167 = arith.constant 0 : index
    %c0_168 = arith.constant 0 : index
    %159 = vector.load %arg6[%c0_167, %c0_168] : memref<1x128xf32, #tpu.memory_space<vmem>>, vector<1x128xf32>
    %160 = vector.broadcast %159 : vector<1x128xf32> to vector<128x128xf32>
    %161 = arith.addf %152, %160 : vector<128x128xf32>
    %162 = arith.addf %161, %158 : vector<128x128xf32>
    %cst_169 = arith.constant 0.000000e+00 : f32
    %163 = vector.broadcast %cst_169 : f32 to vector<128x128xf32>
    %164 = arith.maximumf %162, %163 : vector<128x128xf32>
    %165 = vector.shape_cast %164 : vector<128x128xf32> to vector<8x16x128xf32>
    %c0_170 = arith.constant 0 : index
    %c0_171 = arith.constant 0 : index
    %c0_172 = arith.constant 0 : index
    %c0_173 = arith.constant 0 : index
    %166 = vector.load %arg7[%c0_170, %c0_171, %c0_172, %c0_173] : memref<1x8x16x128xf32, #tpu.memory_space<vmem>>, vector<1x8x16x128xf32>
    %167 = vector.shape_cast %166 : vector<1x8x16x128xf32> to vector<8x16x128xf32>
    %168 = vector.shape_cast %165 : vector<8x16x128xf32> to vector<1x8x16x128xf32>
    tpu.vector_store %arg7[%c0_170, %c0_171, %c0_172, %c0_173], %168 {strides = array<i32>} : memref<1x8x16x128xf32, #tpu.memory_space<vmem>>, vector<1x8x16x128xf32>,
    return
  }
  func.func @transform_0(%arg0: i32, %arg1: i32) -> (i32, i32, i32, i32) {
    %c0_i32 = arith.constant 0 : i32
    %c0_i32_0 = arith.constant 0 : i32
    %c0_i32_1 = arith.constant 0 : i32
    %c0_i32_2 = arith.constant 0 : i32
    return %arg0, %c0_i32, %c0_i32_0, %c0_i32_1 : i32, i32, i32, i32
  }
  func.func @transform_1(%arg0: i32, %arg1: i32) -> (i32, i32, i32, i32) {
    %c0_i32 = arith.constant 0 : i32
    %c0_i32_0 = arith.constant 0 : i32
    %c0_i32_1 = arith.constant 0 : i32
    %c0_i32_2 = arith.constant 0 : i32
    %c0_i32_3 = arith.constant 0 : i32
    return %c0_i32, %c0_i32_0, %c0_i32_1, %c0_i32_2 : i32, i32, i32, i32
  }
  func.func @transform_2(%arg0: i32, %arg1: i32) -> (i32, i32) {
    %c0_i32 = arith.constant 0 : i32
    %c0_i32_0 = arith.constant 0 : i32
    %c0_i32_1 = arith.constant 0 : i32
    return %c0_i32, %c0_i32_0 : i32, i32
  }
  func.func @transform_3(%arg0: i32, %arg1: i32) -> (i32, i32, i32, i32) {
    %c0_i32 = arith.constant 0 : i32
    %c0_i32_0 = arith.constant 0 : i32
    %c0_i32_1 = arith.constant 0 : i32
    %c0_i32_2 = arith.constant 0 : i32
    %c0_i32_3 = arith.constant 0 : i32
    return %c0_i32, %c0_i32_0, %c0_i32_1, %c0_i32_2 : i32, i32, i32, i32
  }
  func.func @transform_4(%arg0: i32, %arg1: i32) -> (i32, i32) {
    %c0_i32 = arith.constant 0 : i32
    %c0_i32_0 = arith.constant 0 : i32
    %c0_i32_1 = arith.constant 0 : i32
    return %c0_i32, %c0_i32_0 : i32, i32
  }
  func.func @transform_5(%arg0: i32, %arg1: i32) -> (i32, i32, i32, i32) {
    %c0_i32 = arith.constant 0 : i32
    %c0_i32_0 = arith.constant 0 : i32
    %c0_i32_1 = arith.constant 0 : i32
    return %arg0, %arg1, %c0_i32, %c0_i32_0 : i32, i32, i32, i32
  }
}

</mosaic_0001>

<llo_original>
// kernel: basic_block_forward.1
$region0: #{basic_block_forward.1}
  #allocation0 [shape = 'u32[]', space=smem, size = 0x4, offset = 0x4, fixed_abs, tag = 'smem constant byte address 0x4 - core index']
  #allocation1 [shape = 'u32[144,128]{1,0:T(1,128)}', space=vmem, size = 0x12000, scoped, tag = 'internal scratch']
  #allocation2 [shape = 'bf16[10,18,128]{2,1,0:T(8,128)(2,1)}', space=vmem, size = 0xf000, scoped, tag = 'scratch operand']
  %s0 = inlined_call_operand.vmem [shape: bf16[2,20,18,128], index: 0, kind: input, shape index: {}]
  %s1 = inlined_call_operand.vmem [shape: bf16[3,3,128,128], index: 1, kind: input, shape index: {}]
  %s2 = inlined_call_operand.vmem [shape: f32[1,128], index: 2, kind: input, shape index: {}]
  %s3 = inlined_call_operand.vmem [shape: bf16[3,3,128,128], index: 3, kind: input, shape index: {}]
  %s4 = inlined_call_operand.vmem [shape: f32[1,128], index: 4, kind: input, shape index: {}]
  %s5 = inlined_call_operand.vmem [shape: f32[2,16,16,128], index: 5, kind: output, shape index: {}]
  %s6 = sld [smem:[#allocation0]]
  $region61: #{basic_block_forward.1} parent=0
    _
  %s8 = ssub.s32 1, %s6
  %s9 = scalar_select 0, %s8, %s6
  loop: start=0, step=1, limit=6
  $region2: #{basic_block_forward.1} parent=0 // loop_pre_header
    _
  $region3: #{basic_block_forward.1} parent=0 // loop_header
    %s11 = sphi 0, %s15
    %p12 = scmp.ge.s32.totalorder %s11, 6
    %s18 = sphi 0, %s30
    %s19 = sphi 0, %s26
    %s20 = sphi 0, %s18
    %s21 = sphi 0, %s19
    %s22 = sphi 0, %s20
    %s23 = sphi 0, %s21
    %s33 = sphi 0, %s35
    %s36 = sphi 0, %s33
    %s37 = sphi 0, %s36
    %s53 = sphi 0, %s37
    %s57 = sphi 0, %s57
    %s59 = sphi 0, %s57
    %s60 = sphi 0, %s59
    %s74 = sphi 0, %s60
    %s78 = sphi 0, %s78
    %s80 = sphi 0, %s78
    %s81 = sphi 0, %s80
    %s95 = sphi 0, %s81
    %s99 = sphi 0, %s99
    %s101 = sphi 0, %s99
    %s102 = sphi 0, %s101
    %s116 = sphi 0, %s102
    %s120 = sphi 0, %s120
    %s122 = sphi 0, %s120
    %s123 = sphi 0, %s122
    %s137 = sphi 0, %s123
    %s145 = sphi 0, %s147
    %s148 = sphi 0, %s145
    %s149 = sphi 0, %s148
    %s165 = sphi 0, %s149
  $region4: #{basic_block_forward.1} parent=0 // loop_header_branch
    %14 = sbr.rel (%p12) target = $region8
  $region5: #{basic_block_forward.1} parent=0 // loop_body
    %s16 = ssub.s32 %s11, 1
    %s17 = ssub.s32 %s11, 2
    %s24 = sadd.s32 1, %s19
    %p25 = scmp.ge.s32.totalorder %s24, 2
    %s26 = scalar_select %p25, 0, %s24
    %s27 = sadd.s32 1, %s18
    %s28 = scalar_select %p25, %s27, %s18
    %p29 = scmp.ge.s32.totalorder %s28, 2
    %s30 = scalar_select %p29, 0, %s28
    %s31 = ssub.s32 %s18, %s30
    %p32 = scmp.eq.s32.totalorder %s31, 0
    %s34 = sadd.s32 %s33, 1
    %s35 = scalar_select %p32, %s33, %s34
    %p38 = pneg %p32
    %p39 = scmp.eq.s32.totalorder %s11, 3
    %p40 = por %p38, %p39
    %p41 = scmp.ne.s32.totalorder %s33, %s36
    %p42 = scmp.eq.s32.totalorder %s11, 0
    %p43 = por %p41, %p42
    %p44 = scmp.ne.s32.totalorder %s33, %s36
    %p45 = scmp.eq.s32.totalorder %s16, 3
    %p46 = por %p44, %p45
    %p47 = scmp.ne.s32.totalorder %s36, %s37
    %p48 = scmp.eq.s32.totalorder %s16, 0
    %p49 = por %p47, %p48
    %p50 = scmp.ne.s32.totalorder %s36, %s37
    %p51 = scmp.eq.s32.totalorder %s17, 3
    %p52 = por %p50, %p51
    %p54 = scmp.ne.s32.totalorder %s37, %s53
    %p55 = scmp.eq.s32.totalorder %s17, 0
    %p56 = por %p54, %p55
    %s58 = sadd.s32 %s57, 1
    %p61 = scmp.eq.s32.totalorder %s11, 3
    %p62 = scmp.ne.s32.totalorder %s57, %s59
    %p63 = scmp.eq.s32.totalorder %s11, 0
    %p64 = por %p62, %p63
    %p65 = scmp.ne.s32.totalorder %s57, %s59
    %p66 = scmp.eq.s32.totalorder %s16, 3
    %p67 = por %p65, %p66
    %p68 = scmp.ne.s32.totalorder %s59, %s60
    %p69 = scmp.eq.s32.totalorder %s16, 0
    %p70 = por %p68, %p69
    %p71 = scmp.ne.s32.totalorder %s59, %s60
    %p72 = scmp.eq.s32.totalorder %s17, 3
    %p73 = por %p71, %p72
    %p75 = scmp.ne.s32.totalorder %s60, %s74
    %p76 = scmp.eq.s32.totalorder %s17, 0
    %p77 = por %p75, %p76
    %s79 = sadd.s32 %s78, 1
    %p82 = scmp.eq.s32.totalorder %s11, 3
    %p83 = scmp.ne.s32.totalorder %s78, %s80
    %p84 = scmp.eq.s32.totalorder %s11, 0
    %p85 = por %p83, %p84
    %p86 = scmp.ne.s32.totalorder %s78, %s80
    %p87 = scmp.eq.s32.totalorder %s16, 3
    %p88 = por %p86, %p87
    %p89 = scmp.ne.s32.totalorder %s80, %s81
    %p90 = scmp.eq.s32.totalorder %s16, 0
    %p91 = por %p89, %p90
    %p92 = scmp.ne.s32.totalorder %s80, %s81
    %p93 = scmp.eq.s32.totalorder %s17, 3
    %p94 = por %p92, %p93
    %p96 = scmp.ne.s32.totalorder %s81, %s95
    %p97 = scmp.eq.s32.totalorder %s17, 0
    %p98 = por %p96, %p97
    %s100 = sadd.s32 %s99, 1
    %p103 = scmp.eq.s32.totalorder %s11, 3
    %p104 = scmp.ne.s32.totalorder %s99, %s101
    %p105 = scmp.eq.s32.totalorder %s11, 0
    %p106 = por %p104, %p105
    %p107 = scmp.ne.s32.totalorder %s99, %s101
    %p108 = scmp.eq.s32.totalorder %s16, 3
    %p109 = por %p107, %p108
    %p110 = scmp.ne.s32.totalorder %s101, %s102
    %p111 = scmp.eq.s32.totalorder %s16, 0
    %p112 = por %p110, %p111
    %p113 = scmp.ne.s32.totalorder %s101, %s102
    %p114 = scmp.eq.s32.totalorder %s17, 3
    %p115 = por %p113, %p114
    %p117 = scmp.ne.s32.totalorder %s102, %s116
    %p118 = scmp.eq.s32.totalorder %s17, 0
    %p119 = por %p117, %p118
    %s121 = sadd.s32 %s120, 1
    %p124 = scmp.eq.s32.totalorder %s11, 3
    %p125 = scmp.ne.s32.totalorder %s120, %s122
    %p126 = scmp.eq.s32.totalorder %s11, 0
    %p127 = por %p125, %p126
    %p128 = scmp.ne.s32.totalorder %s120, %s122
    %p129 = scmp.eq.s32.totalorder %s16, 3
    %p130 = por %p128, %p129
    %p131 = scmp.ne.s32.totalorder %s122, %s123
    %p132 = scmp.eq.s32.totalorder %s16, 0
    %p133 = por %p131, %p132
    %p134 = scmp.ne.s32.totalorder %s122, %s123
    %p135 = scmp.eq.s32.totalorder %s17, 3
    %p136 = por %p134, %p135
    %p138 = scmp.ne.s32.totalorder %s123, %s137
    %p139 = scmp.eq.s32.totalorder %s17, 0
    %p140 = por %p138, %p139
    %s141 = ssub.s32 %s18, %s30
    %s142 = ssub.s32 %s19, %s26
    %s143 = sor.u32 %s141, %s142
    %p144 = scmp.eq.s32.totalorder %s143, 0
    %s146 = sadd.s32 %s145, 1
    %s147 = scalar_select %p144, %s145, %s146
    %p150 = pneg %p144
    %p151 = scmp.eq.s32.totalorder %s11, 3
    %p152 = por %p150, %p151
    %p153 = scmp.ne.s32.totalorder %s145, %s148
    %p154 = scmp.eq.s32.totalorder %s11, 0
    %p155 = por %p153, %p154
    %p156 = scmp.ne.s32.totalorder %s145, %s148
    %p157 = scmp.eq.s32.totalorder %s16, 3
    %p158 = por %p156, %p157
    %p159 = scmp.ne.s32.totalorder %s148, %s149
    %p160 = scmp.eq.s32.totalorder %s16, 0
    %p161 = por %p159, %p160
    %p162 = scmp.ne.s32.totalorder %s148, %s149
    %p163 = scmp.eq.s32.totalorder %s17, 3
    %p164 = por %p162, %p163
    %p166 = scmp.ne.s32.totalorder %s149, %s165
    %p167 = scmp.eq.s32.totalorder %s17, 0
    %p168 = por %p166, %p167
    %p169 = scmp.le.s32.totalorder 1, %s11
    %p170 = scmp.lt.s32.totalorder %s11, 5
    %p171 = pnand %p169, %p170
    %p172 = pneg %p171
    // Predicated region
    $region9: #{basic_block_forward.1} parent=5 // pred_check
      _
    $region10: #{basic_block_forward.1} parent=5 // pred_check_branch
      %174 = sbr.rel (%p171) target = $region12
    $region11: #{basic_block_forward.1} parent=5 // pred_region
      %s175 = ssub.s32 %s11, 1
      // Predicated region
      $region13: #{basic_block_forward.1} parent=11 // pred_check
        %p176 = pneg %p70
      $region14: #{basic_block_forward.1} parent=11 // pred_check_branch
        %178 = sbr.rel (%p176) target = $region16
      $region15: #{basic_block_forward.1} parent=11 // pred_region
        _
      $region16: #{basic_block_forward.1} parent=11 // pred_fallthru
        _
      // Predicated region
      $region17: #{basic_block_forward.1} parent=11 // pred_check
        %p179 = pneg %p91
      $region18: #{basic_block_forward.1} parent=11 // pred_check_branch
        %181 = sbr.rel (%p179) target = $region20
      $region19: #{basic_block_forward.1} parent=11 // pred_region
        _
      $region20: #{basic_block_forward.1} parent=11 // pred_fallthru
        _
      // Predicated region
      $region21: #{basic_block_forward.1} parent=11 // pred_check
        %p182 = pneg %p112
      $region22: #{basic_block_forward.1} parent=11 // pred_check_branch
        %184 = sbr.rel (%p182) target = $region24
      $region23: #{basic_block_forward.1} parent=11 // pred_region
        _
      $region24: #{basic_block_forward.1} parent=11 // pred_fallthru
        _
      // Predicated region
      $region25: #{basic_block_forward.1} parent=11 // pred_check
        %p185 = pneg %p133
      $region26: #{basic_block_forward.1} parent=11 // pred_check_branch
        %187 = sbr.rel (%p185) target = $region28
      $region27: #{basic_block_forward.1} parent=11 // pred_region
        _
      $region28: #{basic_block_forward.1} parent=11 // pred_fallthru
        _
    $region12: #{basic_block_forward.1} parent=5 // pred_fallthru
      _
    %p188 = scmp.lt.s32.totalorder %s11, 4
    // Predicated region
    $region29: #{basic_block_forward.1} parent=5 // pred_check
      %p189 = pneg %p188
    $region30: #{basic_block_forward.1} parent=5 // pred_check_branch
      %191 = sbr.rel (%p189) target = $region32
    $region31: #{basic_block_forward.1} parent=5 // pred_region
      // Predicated region
      $region33: #{basic_block_forward.1} parent=31 // pred_check
        %p192 = pneg %p43
      $region34: #{basic_block_forward.1} parent=31 // pred_check_branch
        %194 = sbr.rel (%p192) target = $region36
      $region35: #{basic_block_forward.1} parent=31 // pred_region
        %p195 = scmp.lt.s32.totalorder %s18, 1
        %s196 = scalar_select %p195, %s18, 1
        %s197 = smul.addr %s196, 60
        %s198 = smul.addr %s197, 4
        %s199 = scalar_lea.vmem %s0, %s198
      $region36: #{basic_block_forward.1} parent=31 // pred_fallthru
        _
    $region32: #{basic_block_forward.1} parent=5 // pred_fallthru
      _
    %p200 = scmp.le.s32.totalorder 1, %s11
    %p201 = scmp.lt.s32.totalorder %s11, 5
    %p202 = pnand %p200, %p201
    %p203 = pneg %p202
    // Predicated region
    $region37: #{basic_block_forward.1} parent=5 // pred_check
      _
    $region38: #{basic_block_forward.1} parent=5 // pred_check_branch
      %205 = sbr.rel (%p202) target = $region40
    $region39: #{basic_block_forward.1} parent=5 // pred_region
      %s206 = ssub.s32 %s11, 1
      %p207 = scmp.lt.s32.totalorder %s20, 1
      %s208 = scalar_select %p207, %s20, 1
      %s209 = smul.addr %s208, 60
      %s210 = smul.addr %s209, 4
      %s211 = scalar_lea.vmem %s0, %s210
      %p212 = pneg %p49
      %p213 = pneg %p46
      %p214 = pneg %p70
      %p215 = pneg %p67
      %p216 = pneg %p91
      %p217 = pneg %p88
      %p218 = pneg %p112
      %p219 = pneg %p109
      %p220 = pneg %p133
      %p221 = pneg %p130
      %p222 = pneg %p161
      %p223 = pneg %p158
      %s224 = smul.u32 8, %s21
      %p225 = scmp.lt.s32.totalorder %s20, 1
      %s226 = scalar_select %p225, %s20, 1
      %p227 = scmp.lt.s32.totalorder %s224, 15
      %s228 = scalar_select %p227, %s224, 15
      %s229 = smul.addr %s228, 2
      %s230 = smul.addr %s226, 32
      %s231 = sadd.s32 %s229, %s230
      %s232 = smul.addr %s231, 8
      %s233 = scalar_lea.vmem %s5, %s232
      %p234 = scmp.lt.s32.totalorder %s20, 1
      %s235 = scalar_select %p234, %s20, 1
      %s236 = smul.addr %s235, 60
      %s237 = smul.addr %s236, 4
      %s238 = scalar_lea.vmem %s0, %s237
      %s239 = smul.u32 8, %s21
      %p240 = scmp.lt.s32.totalorder %s20, 1
      %s241 = scalar_select %p240, %s20, 1
      %p242 = scmp.lt.s32.totalorder %s239, 15
      %s243 = scalar_select %p242, %s239, 15
      %s244 = smul.addr %s243, 2
      %s245 = smul.addr %s241, 32
      %s246 = sadd.s32 %s244, %s245
      %s247 = smul.addr %s246, 8
      %s248 = scalar_lea.vmem %s5, %s247
      %s249 = smul.u32 8, %s21
      %s251 = smul.u32 %s21, 8
      %s252 = smul.u32 %s251, 3
      %s253 = smul.addr %s252, 4
      %s254 = scalar_lea.vmem %s238, %s253
      %v255 = vld [vmem:[%s254] sm:$0xf]
      %v256 = vld [vmem:[%s254 + $0x4] sm:$0xf]
      %v257 = vld [vmem:[%s254 + $0xc] sm:$0xf]
      %v258 = vld [vmem:[%s254 + $0x10] sm:$0xf]
      %v259 = vld [vmem:[%s254 + $0x18] sm:$0xf]
      %v260 = vld [vmem:[%s254 + $0x1c] sm:$0xf]
      %v261 = vld [vmem:[%s254 + $0x24] sm:$0xf]
      %v262 = vld [vmem:[%s254 + $0x28] sm:$0xf]
      %v263 = vld [vmem:[%s254 + $0x30] sm:$0xf]
      %v264 = vld [vmem:[%s254 + $0x34] sm:$0xf]
      %v265 = vld [vmem:[%s254 + $0x3c] sm:$0xf]
      %v266 = vld [vmem:[%s254 + $0x40] sm:$0xf]
      %v267 = vld [vmem:[%s254 + $0x48] sm:$0xf]
      %v268 = vld [vmem:[%s254 + $0x4c] sm:$0xf]
      %v269 = vld [vmem:[%s254 + $0x54] sm:$0xf]
      %v270 = vld [vmem:[%s254 + $0x58] sm:$0xf]
      %v271 = vld [vmem:[%s254 + $0x60] sm:$0xf]
      %v272 = vld [vmem:[%s254 + $0x64] sm:$0xf]
      %v273 = vld [vmem:[%s254 + $0x6c] sm:$0xf]
      %v274 = vld [vmem:[%s254 + $0x70] sm:$0xf]
      %v275 = vld [vmem:[%s1] sm:$0xf]
      %v276 = vld [vmem:[%s1 + $0x4] sm:$0xf]
      %v277 = vld [vmem:[%s1 + $0x8] sm:$0xf]
      %v278 = vld [vmem:[%s1 + $0xc] sm:$0xf]
      %v279 = vld [vmem:[%s1 + $0x10] sm:$0xf]
      %v280 = vld [vmem:[%s1 + $0x14] sm:$0xf]
      %v281 = vld [vmem:[%s1 + $0x18] sm:$0xf]
      %v282 = vld [vmem:[%s1 + $0x1c] sm:$0xf]
      %v283 = vld [vmem:[%s1 + $0x20] sm:$0xf]
      %v284 = vld [vmem:[%s1 + $0x24] sm:$0xf]
      %v285 = vld [vmem:[%s1 + $0x28] sm:$0xf]
      %v286 = vld [vmem:[%s1 + $0x2c] sm:$0xf]
      %v287 = vld [vmem:[%s1 + $0x30] sm:$0xf]
      %v288 = vld [vmem:[%s1 + $0x34] sm:$0xf]
      %v289 = vld [vmem:[%s1 + $0x38] sm:$0xf]
      %v290 = vld [vmem:[%s1 + $0x3c] sm:$0xf]
      %v291 = vld [vmem:[%s254 + $0x8] sm:$0x1]
      %v292 = vld [vmem:[%s254 + $0x14] sm:$0x1]
      %v293 = vld [vmem:[%s254 + $0x20] sm:$0x1]
      %v294 = vld [vmem:[%s254 + $0x2c] sm:$0x1]
      %v295 = vld [vmem:[%s254 + $0x38] sm:$0x1]
      %v296 = vld [vmem:[%s254 + $0x44] sm:$0x1]
      %v297 = vld [vmem:[%s254 + $0x50] sm:$0x1]
      %v298 = vld [vmem:[%s254 + $0x5c] sm:$0x1]
      %v299 = vld [vmem:[%s254 + $0x68] sm:$0x1]
      %v300 = vld [vmem:[%s254 + $0x74] sm:$0x1]
      %vm301 = vsmask.f32 3328
      %vm302 = vsmask.f32 7440
      %vm303 = vmor %vm301, %vm302
      %v305 = vshrl.u32 %v255, 16
      %v307 = vrot.slane %v305, 4
      %v308 = vshll.u32 %v255, 16
      %v310 = vrot.slane %v308, 5
      %v311 = vor.u32 %v307, %v310
      %v312 = vrot.slane %v311, 4
      %v314 = vshll.u32 %v256, 16
      %v316 = vrot.slane %v314, 5
      %v317 = vsel %vm303, %v312, %v316
      %v318 = vshrl.u32 %v256, 16
      %v320 = vrot.slane %v318, 4
      %v321 = vor.u32 %v320, %v316
      %v322 = vrot.slane %v321, 4
      %v324 = vshll.u32 %v291, 16
      %v326 = vrot.slane %v324, 5
      %v327 = vsel %vm303, %v322, %v326
      %v329 = vshrl.u32 %v257, 16
      %v331 = vrot.slane %v329, 4
      %v332 = vshll.u32 %v257, 16
      %v334 = vrot.slane %v332, 5
      %v335 = vor.u32 %v331, %v334
      %v336 = vrot.slane %v335, 4
      %v338 = vshll.u32 %v258, 16
      %v340 = vrot.slane %v338, 5
      %v341 = vsel %vm303, %v336, %v340
      %v342 = vshrl.u32 %v258, 16
      %v344 = vrot.slane %v342, 4
      %v345 = vor.u32 %v344, %v340
      %v346 = vrot.slane %v345, 4
      %v348 = vshll.u32 %v292, 16
      %v350 = vrot.slane %v348, 5
      %v351 = vsel %vm303, %v346, %v350
      %v353 = vshrl.u32 %v259, 16
      %v355 = vrot.slane %v353, 4
      %v356 = vshll.u32 %v259, 16
      %v358 = vrot.slane %v356, 5
      %v359 = vor.u32 %v355, %v358
      %v360 = vrot.slane %v359, 4
      %v362 = vshll.u32 %v260, 16
      %v364 = vrot.slane %v362, 5
      %v365 = vsel %vm303, %v360, %v364
      %v366 = vshrl.u32 %v260, 16
      %v368 = vrot.slane %v366, 4
      %v369 = vor.u32 %v368, %v364
      %v370 = vrot.slane %v369, 4
      %v372 = vshll.u32 %v293, 16
      %v374 = vrot.slane %v372, 5
      %v375 = vsel %vm303, %v370, %v374
      %v377 = vshrl.u32 %v261, 16
      %v379 = vrot.slane %v377, 4
      %v380 = vshll.u32 %v261, 16
      %v382 = vrot.slane %v380, 5
      %v383 = vor.u32 %v379, %v382
      %v384 = vrot.slane %v383, 4
      %v386 = vshll.u32 %v262, 16
      %v388 = vrot.slane %v386, 5
      %v389 = vsel %vm303, %v384, %v388
      %v390 = vshrl.u32 %v262, 16
      %v392 = vrot.slane %v390, 4
      %v393 = vor.u32 %v392, %v388
      %v394 = vrot.slane %v393, 4
      %v396 = vshll.u32 %v294, 16
      %v398 = vrot.slane %v396, 5
      %v399 = vsel %vm303, %v394, %v398
      %v401 = vshrl.u32 %v263, 16
      %v403 = vrot.slane %v401, 4
      %v404 = vshll.u32 %v263, 16
      %v406 = vrot.slane %v404, 5
      %v407 = vor.u32 %v403, %v406
      %v408 = vrot.slane %v407, 4
      %v410 = vshll.u32 %v264, 16
      %v412 = vrot.slane %v410, 5
      %v413 = vsel %vm303, %v408, %v412
      %v414 = vshrl.u32 %v264, 16
      %v416 = vrot.slane %v414, 4
      %v417 = vor.u32 %v416, %v412
      %v418 = vrot.slane %v417, 4
      %v420 = vshll.u32 %v295, 16
      %v422 = vrot.slane %v420, 5
      %v423 = vsel %vm303, %v418, %v422
      %v425 = vshrl.u32 %v265, 16
      %v427 = vrot.slane %v425, 4
      %v428 = vshll.u32 %v265, 16
      %v430 = vrot.slane %v428, 5
      %v431 = vor.u32 %v427, %v430
      %v432 = vrot.slane %v431, 4
      %v434 = vshll.u32 %v266, 16
      %v436 = vrot.slane %v434, 5
      %v437 = vsel %vm303, %v432, %v436
      %v438 = vshrl.u32 %v266, 16
      %v440 = vrot.slane %v438, 4
      %v441 = vor.u32 %v440, %v436
      %v442 = vrot.slane %v441, 4
      %v444 = vshll.u32 %v296, 16
      %v446 = vrot.slane %v444, 5
      %v447 = vsel %vm303, %v442, %v446
      %v449 = vshrl.u32 %v267, 16
      %v451 = vrot.slane %v449, 4
      %v452 = vshll.u32 %v267, 16
      %v454 = vrot.slane %v452, 5
      %v455 = vor.u32 %v451, %v454
      %v456 = vrot.slane %v455, 4
      %v458 = vshll.u32 %v268, 16
      %v460 = vrot.slane %v458, 5
      %v461 = vsel %vm303, %v456, %v460
      %v462 = vshrl.u32 %v268, 16
      %v464 = vrot.slane %v462, 4
      %v465 = vor.u32 %v464, %v460
      %v466 = vrot.slane %v465, 4
      %v468 = vshll.u32 %v297, 16
      %v470 = vrot.slane %v468, 5
      %v471 = vsel %vm303, %v466, %v470
      %v473 = vshrl.u32 %v269, 16
      %v475 = vrot.slane %v473, 4
      %v476 = vshll.u32 %v269, 16
      %v478 = vrot.slane %v476, 5
      %v479 = vor.u32 %v475, %v478
      %v480 = vrot.slane %v479, 4
      %v482 = vshll.u32 %v270, 16
      %v484 = vrot.slane %v482, 5
      %v485 = vsel %vm303, %v480, %v484
      %v486 = vshrl.u32 %v270, 16
      %v488 = vrot.slane %v486, 4
      %v489 = vor.u32 %v488, %v484
      %v490 = vrot.slane %v489, 4
      %v492 = vshll.u32 %v298, 16
      %v494 = vrot.slane %v492, 5
      %v495 = vsel %vm303, %v490, %v494
      %v497 = vshrl.u32 %v271, 16
      %v499 = vrot.slane %v497, 4
      %v500 = vshll.u32 %v271, 16
      %v502 = vrot.slane %v500, 5
      %v503 = vor.u32 %v499, %v502
      %v504 = vrot.slane %v503, 4
      %v506 = vshll.u32 %v272, 16
      %v508 = vrot.slane %v506, 5
      %v509 = vsel %vm303, %v504, %v508
      %v510 = vshrl.u32 %v272, 16
      %v512 = vrot.slane %v510, 4
      %v513 = vor.u32 %v512, %v508
      %v514 = vrot.slane %v513, 4
      %v516 = vshll.u32 %v299, 16
      %v518 = vrot.slane %v516, 5
      %v519 = vsel %vm303, %v514, %v518
      %v521 = vshrl.u32 %v273, 16
      %v523 = vrot.slane %v521, 4
      %v524 = vshll.u32 %v273, 16
      %v526 = vrot.slane %v524, 5
      %v527 = vor.u32 %v523, %v526
      %v528 = vrot.slane %v527, 4
      %v530 = vshll.u32 %v274, 16
      %v532 = vrot.slane %v530, 5
      %v533 = vsel %vm303, %v528, %v532
      %v534 = vshrl.u32 %v274, 16
      %v536 = vrot.slane %v534, 4
      %v537 = vor.u32 %v536, %v532
      %v538 = vrot.slane %v537, 4
      %v540 = vshll.u32 %v300, 16
      %v542 = vrot.slane %v540, 5
      %v543 = vsel %vm303, %v538, %v542
      %s544 = scalar_lea.vmem %s1, 64
      %v545 = vld [vmem:[%s544] sm:$0xf]
      %v546 = vld [vmem:[%s544 + $0x4] sm:$0xf]
      %v547 = vld [vmem:[%s544 + $0x8] sm:$0xf]
      %v548 = vld [vmem:[%s544 + $0xc] sm:$0xf]
      %v549 = vld [vmem:[%s544 + $0x10] sm:$0xf]
      %v550 = vld [vmem:[%s544 + $0x14] sm:$0xf]
      %v551 = vld [vmem:[%s544 + $0x18] sm:$0xf]
      %v552 = vld [vmem:[%s544 + $0x1c] sm:$0xf]
      %v553 = vld [vmem:[%s544 + $0x20] sm:$0xf]
      %v554 = vld [vmem:[%s544 + $0x24] sm:$0xf]
      %v555 = vld [vmem:[%s544 + $0x28] sm:$0xf]
      %v556 = vld [vmem:[%s544 + $0x2c] sm:$0xf]
      %v557 = vld [vmem:[%s544 + $0x30] sm:$0xf]
      %v558 = vld [vmem:[%s544 + $0x34] sm:$0xf]
      %v559 = vld [vmem:[%s544 + $0x38] sm:$0xf]
      %v560 = vld [vmem:[%s544 + $0x3c] sm:$0xf]
      %v561 = vunpack.c.l.b16 %v317
      %v562 = vunpack.c.l.b16 %v327
      %v563 = vunpack.c.l.b16 %v341
      %v564 = vunpack.c.l.b16 %v351
      %v565 = vunpack.c.l.b16 %v365
      %v566 = vunpack.c.l.b16 %v375
      %v567 = vunpack.c.l.b16 %v389
      %v568 = vunpack.c.l.b16 %v399
      %v569 = vunpack.c.l.b16 %v413
      %v570 = vunpack.c.l.b16 %v423
      %v571 = vunpack.c.l.b16 %v437
      %v572 = vunpack.c.l.b16 %v447
      %v573 = vunpack.c.l.b16 %v461
      %v574 = vunpack.c.l.b16 %v471
      %v575 = vunpack.c.l.b16 %v485
      %v576 = vunpack.c.l.b16 %v495
      %v577 = vunpack.c.l.b16 %v509
      %v578 = vunpack.c.l.b16 %v519
      %v579 = vunpack.c.l.b16 %v533
      %v580 = vunpack.c.l.b16 %v543
      %v581 = vpack.c.b16 %v562, %v561
      %v582 = vpack.c.b16 %v564, %v563
      %v583 = vpack.c.b16 %v566, %v565
      %v584 = vpack.c.b16 %v568, %v567
      %v585 = vpack.c.b16 %v570, %v569
      %v586 = vpack.c.b16 %v572, %v571
      %v587 = vpack.c.b16 %v574, %v573
      %v588 = vpack.c.b16 %v576, %v575
      %v589 = vpack.c.b16 %v578, %v577
      %v590 = vpack.c.b16 %v580, %v579
      %v617 = vunpack.c.l.b16 %v545
      %v618 = vunpack.c.l.b16 %v546
      %v619 = vunpack.c.l.b16 %v547
      %v620 = vunpack.c.l.b16 %v548
      %v621 = vunpack.c.l.b16 %v549
      %v622 = vunpack.c.l.b16 %v550
      %v623 = vunpack.c.l.b16 %v551
      %v624 = vunpack.c.l.b16 %v552
      %v625 = vunpack.c.l.b16 %v553
      %v626 = vunpack.c.l.b16 %v554
      %v627 = vunpack.c.l.b16 %v555
      %v628 = vunpack.c.l.b16 %v556
      %v629 = vunpack.c.l.b16 %v557
      %v630 = vunpack.c.l.b16 %v558
      %v631 = vunpack.c.l.b16 %v559
      %v632 = vunpack.c.l.b16 %v560
      %v633 = vpack.c.b16 %v618, %v617
      %v634 = vpack.c.b16 %v620, %v619
      %v635 = vpack.c.b16 %v622, %v621
      %v636 = vpack.c.b16 %v624, %v623
      %v637 = vpack.c.b16 %v626, %v625
      %v638 = vpack.c.b16 %v628, %v627
      %v639 = vpack.c.b16 %v630, %v629
      %v640 = vpack.c.b16 %v632, %v631
      %649 = vmatprep.subr.bf16.mxu0 0
      %650 = vmatpush1.bf16.msra.mxu0 %v640
      %651 = vmatprep.subr.bf16.mxu0 0
      %652 = vmatpush1.bf16.msra.mxu0 %v639
      %653 = vmatprep.subr.bf16.mxu0 0
      %654 = vmatpush1.bf16.msra.mxu0 %v638
      %655 = vmatprep.subr.bf16.mxu0 0
      %656 = vmatpush1.bf16.msra.mxu0 %v637
      %657 = vmatprep.subr.bf16.mxu0 0
      %658 = vmatpush1.bf16.msra.mxu0 %v636
      %659 = vmatprep.subr.bf16.mxu0 0
      %660 = vmatpush1.bf16.msra.mxu0 %v635
      %661 = vmatprep.subr.bf16.mxu0 0
      %662 = vmatpush1.bf16.msra.mxu0 %v634
      %663 = vmatprep.subr.bf16.mxu0 0
      %664 = vmatpush1.bf16.msra.mxu0 %v633
      %665 = vmatprep.subr.bf16.mxu0 0
      %666 = vmatpush2.bf16.msra.mxu0 0
      %667 = vmatprep.subr.bf16.mxu0 0
      %668 = vmatpush2.bf16.msra.mxu0 0
      %669 = vmatprep.subr.bf16.mxu0 0
      %670 = vmatpush2.bf16.msra.mxu0 0
      %671 = vmatprep.subr.bf16.mxu0 0
      %672 = vmatpush2.bf16.msra.mxu0 0
      %673 = vmatprep.subr.bf16.mxu0 0
      %674 = vmatpush2.bf16.msra.mxu0 0
      %675 = vmatprep.subr.bf16.mxu0 0
      %676 = vmatpush2.bf16.msra.mxu0 0
      %677 = vmatprep.subr.bf16.mxu0 0
      %678 = vmatpush2.bf16.msra.mxu0 0
      %679 = vmatprep.subr.bf16.mxu0 0
      %680 = vmatpush2.bf16.msra.mxu0 0
      %681 = vmatprep.mubr.bf16.mxu0 0
      %682 = vmatmul.mubr.bf16.gmra.mxu0 %v581
      %v683 = vpop.f32.mrf.mxu0
      %v684 = vadd.f32 0.0, %v683
      %v685 = vpop.f32.mrf.mxu0
      %v686 = vpop.f32.mrf.mxu0
      %v687 = vadd.f32 0.0, %v686
      %v688 = vpop.f32.mrf.mxu0
      %689 = vmatprep.mubr.bf16.mxu0 0
      %690 = vmatmul.mubr.bf16.gmra.mxu0 %v582
      %v691 = vpop.f32.mrf.mxu0
      %v692 = vadd.f32 0.0, %v691
      %v693 = vpop.f32.mrf.mxu0
      %v694 = vpop.f32.mrf.mxu0
      %v695 = vadd.f32 0.0, %v694
      %v696 = vpop.f32.mrf.mxu0
      %697 = vmatprep.mubr.bf16.mxu0 0
      %698 = vmatmul.mubr.bf16.gmra.mxu0 %v583
      %v699 = vpop.f32.mrf.mxu0
      %v700 = vadd.f32 0.0, %v699
      %v701 = vpop.f32.mrf.mxu0
      %v702 = vpop.f32.mrf.mxu0
      %v703 = vadd.f32 0.0, %v702
      %v704 = vpop.f32.mrf.mxu0
      %705 = vmatprep.mubr.bf16.mxu0 0
      %706 = vmatmul.mubr.bf16.gmra.mxu0 %v584
      %v707 = vpop.f32.mrf.mxu0
      %v708 = vadd.f32 0.0, %v707
      %v709 = vpop.f32.mrf.mxu0
      %v710 = vpop.f32.mrf.mxu0
      %v711 = vadd.f32 0.0, %v710
      %v712 = vpop.f32.mrf.mxu0
      %713 = vmatprep.mubr.bf16.mxu0 0
      %714 = vmatmul.mubr.bf16.gmra.mxu0 %v585
      %v715 = vpop.f32.mrf.mxu0
      %v716 = vadd.f32 0.0, %v715
      %v717 = vpop.f32.mrf.mxu0
      %v718 = vpop.f32.mrf.mxu0
      %v719 = vadd.f32 0.0, %v718
      %v720 = vpop.f32.mrf.mxu0
      %721 = vmatprep.mubr.bf16.mxu0 0
      %722 = vmatmul.mubr.bf16.gmra.mxu0 %v586
      %v723 = vpop.f32.mrf.mxu0
      %v724 = vadd.f32 0.0, %v723
      %v725 = vpop.f32.mrf.mxu0
      %v726 = vpop.f32.mrf.mxu0
      %v727 = vadd.f32 0.0, %v726
      %v728 = vpop.f32.mrf.mxu0
      %729 = vmatprep.mubr.bf16.mxu0 0
      %730 = vmatmul.mubr.bf16.gmra.mxu0 %v587
      %v731 = vpop.f32.mrf.mxu0
      %v732 = vadd.f32 0.0, %v731
      %v733 = vpop.f32.mrf.mxu0
      %v734 = vpop.f32.mrf.mxu0
      %v735 = vadd.f32 0.0, %v734
      %v736 = vpop.f32.mrf.mxu0
      %737 = vmatprep.mubr.bf16.mxu0 0
      %738 = vmatmul.mubr.bf16.gmra.mxu0 %v588
      %v739 = vpop.f32.mrf.mxu0
      %v740 = vadd.f32 0.0, %v739
      %v741 = vpop.f32.mrf.mxu0
      %v742 = vpop.f32.mrf.mxu0
      %v743 = vadd.f32 0.0, %v742
      %v744 = vpop.f32.mrf.mxu0
      %745 = vmatprep.mubr.bf16.mxu0 0
      %746 = vmatmul.mubr.bf16.gmra.mxu0 %v589
      %v747 = vpop.f32.mrf.mxu0
      %v748 = vadd.f32 0.0, %v747
      %v749 = vpop.f32.mrf.mxu0
      %v750 = vpop.f32.mrf.mxu0
      %v751 = vadd.f32 0.0, %v750
      %v752 = vpop.f32.mrf.mxu0
      %753 = vmatprep.mubr.bf16.mxu0 0
      %754 = vmatmul.mubr.bf16.gmra.mxu0 %v590
      %v755 = vpop.f32.mrf.mxu0
      %v756 = vadd.f32 0.0, %v755
      %v757 = vpop.f32.mrf.mxu0
      %v758 = vpop.f32.mrf.mxu0
      %v759 = vadd.f32 0.0, %v758
      %v760 = vpop.f32.mrf.mxu0
      %761 = vdwg.mxu0
      %v782 = vunpack.c.l.b16 %v255
      %v783 = vunpack.c.l.b16 %v256
      %v784 = vunpack.c.l.b16 %v257
      %v785 = vunpack.c.l.b16 %v258
      %v786 = vunpack.c.l.b16 %v259
      %v787 = vunpack.c.l.b16 %v260
      %v788 = vunpack.c.l.b16 %v261
      %v789 = vunpack.c.l.b16 %v262
      %v790 = vunpack.c.l.b16 %v263
      %v791 = vunpack.c.l.b16 %v264
      %v792 = vunpack.c.l.b16 %v265
      %v793 = vunpack.c.l.b16 %v266
      %v794 = vunpack.c.l.b16 %v267
      %v795 = vunpack.c.l.b16 %v268
      %v796 = vunpack.c.l.b16 %v269
      %v797 = vunpack.c.l.b16 %v270
      %v798 = vunpack.c.l.b16 %v271
      %v799 = vunpack.c.l.b16 %v272
      %v800 = vunpack.c.l.b16 %v273
      %v801 = vunpack.c.l.b16 %v274
      %v802 = vpack.c.b16 %v783, %v782
      %v803 = vpack.c.b16 %v785, %v784
      %v804 = vpack.c.b16 %v787, %v786
      %v805 = vpack.c.b16 %v789, %v788
      %v806 = vpack.c.b16 %v791, %v790
      %v807 = vpack.c.b16 %v793, %v792
      %v808 = vpack.c.b16 %v795, %v794
      %v809 = vpack.c.b16 %v797, %v796
      %v810 = vpack.c.b16 %v799, %v798
      %v811 = vpack.c.b16 %v801, %v800
      %v838 = vunpack.c.l.b16 %v275
      %v839 = vunpack.c.l.b16 %v276
      %v840 = vunpack.c.l.b16 %v277
      %v841 = vunpack.c.l.b16 %v278
      %v842 = vunpack.c.l.b16 %v279
      %v843 = vunpack.c.l.b16 %v280
      %v844 = vunpack.c.l.b16 %v281
      %v845 = vunpack.c.l.b16 %v282
      %v846 = vunpack.c.l.b16 %v283
      %v847 = vunpack.c.l.b16 %v284
      %v848 = vunpack.c.l.b16 %v285
      %v849 = vunpack.c.l.b16 %v286
      %v850 = vunpack.c.l.b16 %v287
      %v851 = vunpack.c.l.b16 %v288
      %v852 = vunpack.c.l.b16 %v289
      %v853 = vunpack.c.l.b16 %v290
      %v854 = vpack.c.b16 %v839, %v838
      %v855 = vpack.c.b16 %v841, %v840
      %v856 = vpack.c.b16 %v843, %v842
      %v857 = vpack.c.b16 %v845, %v844
      %v858 = vpack.c.b16 %v847, %v846
      %v859 = vpack.c.b16 %v849, %v848
      %v860 = vpack.c.b16 %v851, %v850
      %v861 = vpack.c.b16 %v853, %v852
      %870 = vmatprep.subr.bf16.mxu0 0
      %871 = vmatpush1.bf16.msra.mxu0 %v861
      %872 = vmatprep.subr.bf16.mxu0 0
      %873 = vmatpush1.bf16.msra.mxu0 %v860
      %874 = vmatprep.subr.bf16.mxu0 0
      %875 = vmatpush1.bf16.msra.mxu0 %v859
      %876 = vmatprep.subr.bf16.mxu0 0
      %877 = vmatpush1.bf16.msra.mxu0 %v858
      %878 = vmatprep.subr.bf16.mxu0 0
      %879 = vmatpush1.bf16.msra.mxu0 %v857
      %880 = vmatprep.subr.bf16.mxu0 0
      %881 = vmatpush1.bf16.msra.mxu0 %v856
      %882 = vmatprep.subr.bf16.mxu0 0
      %883 = vmatpush1.bf16.msra.mxu0 %v855
      %884 = vmatprep.subr.bf16.mxu0 0
      %885 = vmatpush1.bf16.msra.mxu0 %v854
      %886 = vmatprep.subr.bf16.mxu0 0
      %887 = vmatpush2.bf16.msra.mxu0 0
      %888 = vmatprep.subr.bf16.mxu0 0
      %889 = vmatpush2.bf16.msra.mxu0 0
      %890 = vmatprep.subr.bf16.mxu0 0
      %891 = vmatpush2.bf16.msra.mxu0 0
      %892 = vmatprep.subr.bf16.mxu0 0
      %893 = vmatpush2.bf16.msra.mxu0 0
      %894 = vmatprep.subr.bf16.mxu0 0
      %895 = vmatpush2.bf16.msra.mxu0 0
      %896 = vmatprep.subr.bf16.mxu0 0
      %897 = vmatpush2.bf16.msra.mxu0 0
      %898 = vmatprep.subr.bf16.mxu0 0
      %899 = vmatpush2.bf16.msra.mxu0 0
      %900 = vmatprep.subr.bf16.mxu0 0
      %901 = vmatpush2.bf16.msra.mxu0 0
      %902 = vmatprep.mubr.bf16.mxu0 0
      %903 = vmatmul.mubr.bf16.gmra.mxu0 %v802
      %v904 = vpop.f32.mrf.mxu0
      %v905 = vadd.f32 %v684, %v904
      %v906 = vpop.f32.mrf.mxu0
      %v907 = vpop.f32.mrf.mxu0
      %v908 = vadd.f32 %v687, %v907
      %v909 = vpop.f32.mrf.mxu0
      %910 = vmatprep.mubr.bf16.mxu0 0
      %911 = vmatmul.mubr.bf16.gmra.mxu0 %v803
      %v912 = vpop.f32.mrf.mxu0
      %v913 = vadd.f32 %v692, %v912
      %v914 = vpop.f32.mrf.mxu0
      %v915 = vpop.f32.mrf.mxu0
      %v916 = vadd.f32 %v695, %v915
      %v917 = vpop.f32.mrf.mxu0
      %918 = vmatprep.mubr.bf16.mxu0 0
      %919 = vmatmul.mubr.bf16.gmra.mxu0 %v804
      %v920 = vpop.f32.mrf.mxu0
      %v921 = vadd.f32 %v700, %v920
      %v922 = vpop.f32.mrf.mxu0
      %v923 = vpop.f32.mrf.mxu0
      %v924 = vadd.f32 %v703, %v923
      %v925 = vpop.f32.mrf.mxu0
      %926 = vmatprep.mubr.bf16.mxu0 0
      %927 = vmatmul.mubr.bf16.gmra.mxu0 %v805
      %v928 = vpop.f32.mrf.mxu0
      %v929 = vadd.f32 %v708, %v928
      %v930 = vpop.f32.mrf.mxu0
      %v931 = vpop.f32.mrf.mxu0
      %v932 = vadd.f32 %v711, %v931
      %v933 = vpop.f32.mrf.mxu0
      %934 = vmatprep.mubr.bf16.mxu0 0
      %935 = vmatmul.mubr.bf16.gmra.mxu0 %v806
      %v936 = vpop.f32.mrf.mxu0
      %v937 = vadd.f32 %v716, %v936
      %v938 = vpop.f32.mrf.mxu0
      %v939 = vpop.f32.mrf.mxu0
      %v940 = vadd.f32 %v719, %v939
      %v941 = vpop.f32.mrf.mxu0
      %942 = vmatprep.mubr.bf16.mxu0 0
      %943 = vmatmul.mubr.bf16.gmra.mxu0 %v807
      %v944 = vpop.f32.mrf.mxu0
      %v945 = vadd.f32 %v724, %v944
      %v946 = vpop.f32.mrf.mxu0
      %v947 = vpop.f32.mrf.mxu0
      %v948 = vadd.f32 %v727, %v947
      %v949 = vpop.f32.mrf.mxu0
      %950 = vmatprep.mubr.bf16.mxu0 0
      %951 = vmatmul.mubr.bf16.gmra.mxu0 %v808
      %v952 = vpop.f32.mrf.mxu0
      %v953 = vadd.f32 %v732, %v952
      %v954 = vpop.f32.mrf.mxu0
      %v955 = vpop.f32.mrf.mxu0
      %v956 = vadd.f32 %v735, %v955
      %v957 = vpop.f32.mrf.mxu0
      %958 = vmatprep.mubr.bf16.mxu0 0
      %959 = vmatmul.mubr.bf16.gmra.mxu0 %v809
      %v960 = vpop.f32.mrf.mxu0
      %v961 = vadd.f32 %v740, %v960
      %v962 = vpop.f32.mrf.mxu0
      %v963 = vpop.f32.mrf.mxu0
      %v964 = vadd.f32 %v743, %v963
      %v965 = vpop.f32.mrf.mxu0
      %966 = vmatprep.mubr.bf16.mxu0 0
      %967 = vmatmul.mubr.bf16.gmra.mxu0 %v810
      %v968 = vpop.f32.mrf.mxu0
      %v969 = vadd.f32 %v748, %v968
      %v970 = vpop.f32.mrf.mxu0
      %v971 = vpop.f32.mrf.mxu0
      %v972 = vadd.f32 %v751, %v971
      %v973 = vpop.f32.mrf.mxu0
      %974 = vmatprep.mubr.bf16.mxu0 0
      %975 = vmatmul.mubr.bf16.gmra.mxu0 %v811
      %v976 = vpop.f32.mrf.mxu0
      %v977 = vadd.f32 %v756, %v976
      %v978 = vpop.f32.mrf.mxu0
      %v979 = vpop.f32.mrf.mxu0
      %v980 = vadd.f32 %v759, %v979
      %v981 = vpop.f32.mrf.mxu0
      %982 = vdwg.mxu0
      %v983 = vld [vmem:[%s254] sm:$0xe]
      %v984 = vld [vmem:[%s254 + $0xc] sm:$0xe]
      %v985 = vld [vmem:[%s254 + $0x18] sm:$0xe]
      %v986 = vld [vmem:[%s254 + $0x24] sm:$0xe]
      %v987 = vld [vmem:[%s254 + $0x30] sm:$0xe]
      %v988 = vld [vmem:[%s254 + $0x3c] sm:$0xe]
      %v989 = vld [vmem:[%s254 + $0x48] sm:$0xe]
      %v990 = vld [vmem:[%s254 + $0x54] sm:$0xe]
      %v991 = vld [vmem:[%s254 + $0x60] sm:$0xe]
      %v992 = vld [vmem:[%s254 + $0x6c] sm:$0xe]
      %vm1013 = vcmask 1042432
      %vm1014 = vcmask 1046532
      %vm1015 = vmor %vm1013, %vm1014
      %v1016 = vrot.slane %v983, 5
      %v1017 = vrot.slane %v1016, 4
      %v1018 = vrot.slane %v256, 5
      %v1019 = vsel %vm1015, %v1017, %v1018
      %v1020 = vrot.slane %v1018, 4
      %v1021 = vrot.slane %v291, 5
      %v1022 = vsel %vm1015, %v1020, %v1021
      %v1023 = vrot.slane %v984, 5
      %v1024 = vrot.slane %v1023, 4
      %v1025 = vrot.slane %v258, 5
      %v1026 = vsel %vm1015, %v1024, %v1025
      %v1027 = vrot.slane %v1025, 4
      %v1028 = vrot.slane %v292, 5
      %v1029 = vsel %vm1015, %v1027, %v1028
      %v1030 = vrot.slane %v985, 5
      %v1031 = vrot.slane %v1030, 4
      %v1032 = vrot.slane %v260, 5
      %v1033 = vsel %vm1015, %v1031, %v1032
      %v1034 = vrot.slane %v1032, 4
      %v1035 = vrot.slane %v293, 5
      %v1036 = vsel %vm1015, %v1034, %v1035
      %v1037 = vrot.slane %v986, 5
      %v1038 = vrot.slane %v1037, 4
      %v1039 = vrot.slane %v262, 5
      %v1040 = vsel %vm1015, %v1038, %v1039
      %v1041 = vrot.slane %v1039, 4
      %v1042 = vrot.slane %v294, 5
      %v1043 = vsel %vm1015, %v1041, %v1042
      %v1044 = vrot.slane %v987, 5
      %v1045 = vrot.slane %v1044, 4
      %v1046 = vrot.slane %v264, 5
      %v1047 = vsel %vm1015, %v1045, %v1046
      %v1048 = vrot.slane %v1046, 4
      %v1049 = vrot.slane %v295, 5
      %v1050 = vsel %vm1015, %v1048, %v1049
      %v1051 = vrot.slane %v988, 5
      %v1052 = vrot.slane %v1051, 4
      %v1053 = vrot.slane %v266, 5
      %v1054 = vsel %vm1015, %v1052, %v1053
      %v1055 = vrot.slane %v1053, 4
      %v1056 = vrot.slane %v296, 5
      %v1057 = vsel %vm1015, %v1055, %v1056
      %v1058 = vrot.slane %v989, 5
      %v1059 = vrot.slane %v1058, 4
      %v1060 = vrot.slane %v268, 5
      %v1061 = vsel %vm1015, %v1059, %v1060
      %v1062 = vrot.slane %v1060, 4
      %v1063 = vrot.slane %v297, 5
      %v1064 = vsel %vm1015, %v1062, %v1063
      %v1065 = vrot.slane %v990, 5
      %v1066 = vrot.slane %v1065, 4
      %v1067 = vrot.slane %v270, 5
      %v1068 = vsel %vm1015, %v1066, %v1067
      %v1069 = vrot.slane %v1067, 4
      %v1070 = vrot.slane %v298, 5
      %v1071 = vsel %vm1015, %v1069, %v1070
      %v1072 = vrot.slane %v991, 5
      %v1073 = vrot.slane %v1072, 4
      %v1074 = vrot.slane %v272, 5
      %v1075 = vsel %vm1015, %v1073, %v1074
      %v1076 = vrot.slane %v1074, 4
      %v1077 = vrot.slane %v299, 5
      %v1078 = vsel %vm1015, %v1076, %v1077
      %v1079 = vrot.slane %v992, 5
      %v1080 = vrot.slane %v1079, 4
      %v1081 = vrot.slane %v274, 5
      %v1082 = vsel %vm1015, %v1080, %v1081
      %v1083 = vrot.slane %v1081, 4
      %v1084 = vrot.slane %v300, 5
      %v1085 = vsel %vm1015, %v1083, %v1084
      %s1086 = scalar_lea.vmem %s1, 128
      %v1087 = vld [vmem:[%s1086] sm:$0xf]
      %v1088 = vld [vmem:[%s1086 + $0x4] sm:$0xf]
      %v1089 = vld [vmem:[%s1086 + $0x8] sm:$0xf]
      %v1090 = vld [vmem:[%s1086 + $0xc] sm:$0xf]
      %v1091 = vld [vmem:[%s1086 + $0x10] sm:$0xf]
      %v1092 = vld [vmem:[%s1086 + $0x14] sm:$0xf]
      %v1093 = vld [vmem:[%s1086 + $0x18] sm:$0xf]
      %v1094 = vld [vmem:[%s1086 + $0x1c] sm:$0xf]
      %v1095 = vld [vmem:[%s1086 + $0x20] sm:$0xf]
      %v1096 = vld [vmem:[%s1086 + $0x24] sm:$0xf]
      %v1097 = vld [vmem:[%s1086 + $0x28] sm:$0xf]
      %v1098 = vld [vmem:[%s1086 + $0x2c] sm:$0xf]
      %v1099 = vld [vmem:[%s1086 + $0x30] sm:$0xf]
      %v1100 = vld [vmem:[%s1086 + $0x34] sm:$0xf]
      %v1101 = vld [vmem:[%s1086 + $0x38] sm:$0xf]
      %v1102 = vld [vmem:[%s1086 + $0x3c] sm:$0xf]
      %v1103 = vunpack.c.l.b16 %v1019
      %v1104 = vunpack.c.l.b16 %v1022
      %v1105 = vunpack.c.l.b16 %v1026
      %v1106 = vunpack.c.l.b16 %v1029
      %v1107 = vunpack.c.l.b16 %v1033
      %v1108 = vunpack.c.l.b16 %v1036
      %v1109 = vunpack.c.l.b16 %v1040
      %v1110 = vunpack.c.l.b16 %v1043
      %v1111 = vunpack.c.l.b16 %v1047
      %v1112 = vunpack.c.l.b16 %v1050
      %v1113 = vunpack.c.l.b16 %v1054
      %v1114 = vunpack.c.l.b16 %v1057
      %v1115 = vunpack.c.l.b16 %v1061
      %v1116 = vunpack.c.l.b16 %v1064
      %v1117 = vunpack.c.l.b16 %v1068
      %v1118 = vunpack.c.l.b16 %v1071
      %v1119 = vunpack.c.l.b16 %v1075
      %v1120 = vunpack.c.l.b16 %v1078
      %v1121 = vunpack.c.l.b16 %v1082
      %v1122 = vunpack.c.l.b16 %v1085
      %v1123 = vpack.c.b16 %v1104, %v1103
      %v1124 = vpack.c.b16 %v1106, %v1105
      %v1125 = vpack.c.b16 %v1108, %v1107
      %v1126 = vpack.c.b16 %v1110, %v1109
      %v1127 = vpack.c.b16 %v1112, %v1111
      %v1128 = vpack.c.b16 %v1114, %v1113
      %v1129 = vpack.c.b16 %v1116, %v1115
      %v1130 = vpack.c.b16 %v1118, %v1117
      %v1131 = vpack.c.b16 %v1120, %v1119
      %v1132 = vpack.c.b16 %v1122, %v1121
      %v1159 = vunpack.c.l.b16 %v1087
      %v1160 = vunpack.c.l.b16 %v1088
      %v1161 = vunpack.c.l.b16 %v1089
      %v1162 = vunpack.c.l.b16 %v1090
      %v1163 = vunpack.c.l.b16 %v1091
      %v1164 = vunpack.c.l.b16 %v1092
      %v1165 = vunpack.c.l.b16 %v1093
      %v1166 = vunpack.c.l.b16 %v1094
      %v1167 = vunpack.c.l.b16 %v1095
      %v1168 = vunpack.c.l.b16 %v1096
      %v1169 = vunpack.c.l.b16 %v1097
      %v1170 = vunpack.c.l.b16 %v1098
      %v1171 = vunpack.c.l.b16 %v1099
      %v1172 = vunpack.c.l.b16 %v1100
      %v1173 = vunpack.c.l.b16 %v1101
      %v1174 = vunpack.c.l.b16 %v1102
      %v1175 = vpack.c.b16 %v1160, %v1159
      %v1176 = vpack.c.b16 %v1162, %v1161
      %v1177 = vpack.c.b16 %v1164, %v1163
      %v1178 = vpack.c.b16 %v1166, %v1165
      %v1179 = vpack.c.b16 %v1168, %v1167
      %v1180 = vpack.c.b16 %v1170, %v1169
      %v1181 = vpack.c.b16 %v1172, %v1171
      %v1182 = vpack.c.b16 %v1174, %v1173
      %1191 = vmatprep.subr.bf16.mxu0 0
      %1192 = vmatpush1.bf16.msra.mxu0 %v1182
      %1193 = vmatprep.subr.bf16.mxu0 0
      %1194 = vmatpush1.bf16.msra.mxu0 %v1181
      %1195 = vmatprep.subr.bf16.mxu0 0
      %1196 = vmatpush1.bf16.msra.mxu0 %v1180
      %1197 = vmatprep.subr.bf16.mxu0 0
      %1198 = vmatpush1.bf16.msra.mxu0 %v1179
      %1199 = vmatprep.subr.bf16.mxu0 0
      %1200 = vmatpush1.bf16.msra.mxu0 %v1178
      %1201 = vmatprep.subr.bf16.mxu0 0
      %1202 = vmatpush1.bf16.msra.mxu0 %v1177
      %1203 = vmatprep.subr.bf16.mxu0 0
      %1204 = vmatpush1.bf16.msra.mxu0 %v1176
      %1205 = vmatprep.subr.bf16.mxu0 0
      %1206 = vmatpush1.bf16.msra.mxu0 %v1175
      %1207 = vmatprep.subr.bf16.mxu0 0
      %1208 = vmatpush2.bf16.msra.mxu0 0
      %1209 = vmatprep.subr.bf16.mxu0 0
      %1210 = vmatpush2.bf16.msra.mxu0 0
      %1211 = vmatprep.subr.bf16.mxu0 0
      %1212 = vmatpush2.bf16.msra.mxu0 0
      %1213 = vmatprep.subr.bf16.mxu0 0
      %1214 = vmatpush2.bf16.msra.mxu0 0
      %1215 = vmatprep.subr.bf16.mxu0 0
      %1216 = vmatpush2.bf16.msra.mxu0 0
      %1217 = vmatprep.subr.bf16.mxu0 0
      %1218 = vmatpush2.bf16.msra.mxu0 0
      %1219 = vmatprep.subr.bf16.mxu0 0
      %1220 = vmatpush2.bf16.msra.mxu0 0
      %1221 = vmatprep.subr.bf16.mxu0 0
      %1222 = vmatpush2.bf16.msra.mxu0 0
      %1223 = vmatprep.mubr.bf16.mxu0 0
      %1224 = vmatmul.mubr.bf16.gmra.mxu0 %v1123
      %v1225 = vpop.f32.mrf.mxu0
      %v1226 = vadd.f32 0.0, %v1225
      %v1227 = vpop.f32.mrf.mxu0
      %v1228 = vpop.f32.mrf.mxu0
      %v1229 = vadd.f32 0.0, %v1228
      %v1230 = vpop.f32.mrf.mxu0
      %1231 = vmatprep.mubr.bf16.mxu0 0
      %1232 = vmatmul.mubr.bf16.gmra.mxu0 %v1124
      %v1233 = vpop.f32.mrf.mxu0
      %v1234 = vadd.f32 0.0, %v1233
      %v1235 = vpop.f32.mrf.mxu0
      %v1236 = vpop.f32.mrf.mxu0
      %v1237 = vadd.f32 0.0, %v1236
      %v1238 = vpop.f32.mrf.mxu0
      %1239 = vmatprep.mubr.bf16.mxu0 0
      %1240 = vmatmul.mubr.bf16.gmra.mxu0 %v1125
      %v1241 = vpop.f32.mrf.mxu0
      %v1242 = vadd.f32 0.0, %v1241
      %v1243 = vpop.f32.mrf.mxu0
      %v1244 = vpop.f32.mrf.mxu0
      %v1245 = vadd.f32 0.0, %v1244
      %v1246 = vpop.f32.mrf.mxu0
      %1247 = vmatprep.mubr.bf16.mxu0 0
      %1248 = vmatmul.mubr.bf16.gmra.mxu0 %v1126
      %v1249 = vpop.f32.mrf.mxu0
      %v1250 = vadd.f32 0.0, %v1249
      %v1251 = vpop.f32.mrf.mxu0
      %v1252 = vpop.f32.mrf.mxu0
      %v1253 = vadd.f32 0.0, %v1252
      %v1254 = vpop.f32.mrf.mxu0
      %1255 = vmatprep.mubr.bf16.mxu0 0
      %1256 = vmatmul.mubr.bf16.gmra.mxu0 %v1127
      %v1257 = vpop.f32.mrf.mxu0
      %v1258 = vadd.f32 0.0, %v1257
      %v1259 = vpop.f32.mrf.mxu0
      %v1260 = vpop.f32.mrf.mxu0
      %v1261 = vadd.f32 0.0, %v1260
      %v1262 = vpop.f32.mrf.mxu0
      %1263 = vmatprep.mubr.bf16.mxu0 0
      %1264 = vmatmul.mubr.bf16.gmra.mxu0 %v1128
      %v1265 = vpop.f32.mrf.mxu0
      %v1266 = vadd.f32 0.0, %v1265
      %v1267 = vpop.f32.mrf.mxu0
      %v1268 = vpop.f32.mrf.mxu0
      %v1269 = vadd.f32 0.0, %v1268
      %v1270 = vpop.f32.mrf.mxu0
      %1271 = vmatprep.mubr.bf16.mxu0 0
      %1272 = vmatmul.mubr.bf16.gmra.mxu0 %v1129
      %v1273 = vpop.f32.mrf.mxu0
      %v1274 = vadd.f32 0.0, %v1273
      %v1275 = vpop.f32.mrf.mxu0
      %v1276 = vpop.f32.mrf.mxu0
      %v1277 = vadd.f32 0.0, %v1276
      %v1278 = vpop.f32.mrf.mxu0
      %1279 = vmatprep.mubr.bf16.mxu0 0
      %1280 = vmatmul.mubr.bf16.gmra.mxu0 %v1130
      %v1281 = vpop.f32.mrf.mxu0
      %v1282 = vadd.f32 0.0, %v1281
      %v1283 = vpop.f32.mrf.mxu0
      %v1284 = vpop.f32.mrf.mxu0
      %v1285 = vadd.f32 0.0, %v1284
      %v1286 = vpop.f32.mrf.mxu0
      %1287 = vmatprep.mubr.bf16.mxu0 0
      %1288 = vmatmul.mubr.bf16.gmra.mxu0 %v1131
      %v1289 = vpop.f32.mrf.mxu0
      %v1290 = vadd.f32 0.0, %v1289
      %v1291 = vpop.f32.mrf.mxu0
      %v1292 = vpop.f32.mrf.mxu0
      %v1293 = vadd.f32 0.0, %v1292
      %v1294 = vpop.f32.mrf.mxu0
      %1295 = vmatprep.mubr.bf16.mxu0 0
      %1296 = vmatmul.mubr.bf16.gmra.mxu0 %v1132
      %v1297 = vpop.f32.mrf.mxu0
      %v1298 = vadd.f32 0.0, %v1297
      %v1299 = vpop.f32.mrf.mxu0
      %v1300 = vpop.f32.mrf.mxu0
      %v1301 = vadd.f32 0.0, %v1300
      %v1302 = vpop.f32.mrf.mxu0
      %1303 = vdwg.mxu0
      %v1304 = vadd.f32 %v905, %v1226
      %v1305 = vadd.f32 %v908, %v1229
      %v1306 = vadd.f32 %v913, %v1234
      %v1307 = vadd.f32 %v916, %v1237
      %v1308 = vadd.f32 %v921, %v1242
      %v1309 = vadd.f32 %v924, %v1245
      %v1310 = vadd.f32 %v929, %v1250
      %v1311 = vadd.f32 %v932, %v1253
      %v1312 = vadd.f32 %v937, %v1258
      %v1313 = vadd.f32 %v940, %v1261
      %v1314 = vadd.f32 %v945, %v1266
      %v1315 = vadd.f32 %v948, %v1269
      %v1316 = vadd.f32 %v953, %v1274
      %v1317 = vadd.f32 %v956, %v1277
      %v1318 = vadd.f32 %v961, %v1282
      %v1319 = vadd.f32 %v964, %v1285
      %v1320 = vadd.f32 %v969, %v1290
      %v1321 = vadd.f32 %v972, %v1293
      %v1322 = vadd.f32 %v977, %v1298
      %v1323 = vadd.f32 %v980, %v1301
      %s1324 = sadd.s32 %s251, 1
      %s1325 = smul.u32 %s1324, 3
      %s1326 = smul.addr %s1325, 4
      %s1327 = scalar_lea.vmem %s238, %s1326
      %v1328 = vld [vmem:[%s1327] sm:$0xf]
      %v1329 = vld [vmem:[%s1327 + $0x4] sm:$0xf]
      %v1330 = vld [vmem:[%s1327 + $0xc] sm:$0xf]
      %v1331 = vld [vmem:[%s1327 + $0x10] sm:$0xf]
      %v1332 = vld [vmem:[%s1327 + $0x18] sm:$0xf]
      %v1333 = vld [vmem:[%s1327 + $0x1c] sm:$0xf]
      %v1334 = vld [vmem:[%s1327 + $0x24] sm:$0xf]
      %v1335 = vld [vmem:[%s1327 + $0x28] sm:$0xf]
      %v1336 = vld [vmem:[%s1327 + $0x30] sm:$0xf]
      %v1337 = vld [vmem:[%s1327 + $0x34] sm:$0xf]
      %v1338 = vld [vmem:[%s1327 + $0x3c] sm:$0xf]
      %v1339 = vld [vmem:[%s1327 + $0x40] sm:$0xf]
      %v1340 = vld [vmem:[%s1327 + $0x48] sm:$0xf]
      %v1341 = vld [vmem:[%s1327 + $0x4c] sm:$0xf]
      %v1342 = vld [vmem:[%s1327 + $0x54] sm:$0xf]
      %v1343 = vld [vmem:[%s1327 + $0x58] sm:$0xf]
      %v1344 = vld [vmem:[%s1327 + $0x60] sm:$0xf]
      %v1345 = vld [vmem:[%s1327 + $0x64] sm:$0xf]
      %v1346 = vld [vmem:[%s1327 + $0x6c] sm:$0xf]
      %v1347 = vld [vmem:[%s1327 + $0x70] sm:$0xf]
      %s1348 = scalar_lea.vmem %s1, 192
      %v1349 = vld [vmem:[%s1348] sm:$0xf]
      %v1350 = vld [vmem:[%s1348 + $0x4] sm:$0xf]
      %v1351 = vld [vmem:[%s1348 + $0x8] sm:$0xf]
      %v1352 = vld [vmem:[%s1348 + $0xc] sm:$0xf]
      %v1353 = vld [vmem:[%s1348 + $0x10] sm:$0xf]
      %v1354 = vld [vmem:[%s1348 + $0x14] sm:$0xf]
      %v1355 = vld [vmem:[%s1348 + $0x18] sm:$0xf]
      %v1356 = vld [vmem:[%s1348 + $0x1c] sm:$0xf]
      %v1357 = vld [vmem:[%s1348 + $0x20] sm:$0xf]
      %v1358 = vld [vmem:[%s1348 + $0x24] sm:$0xf]
      %v1359 = vld [vmem:[%s1348 + $0x28] sm:$0xf]
      %v1360 = vld [vmem:[%s1348 + $0x2c] sm:$0xf]
      %v1361 = vld [vmem:[%s1348 + $0x30] sm:$0xf]
      %v1362 = vld [vmem:[%s1348 + $0x34] sm:$0xf]
      %v1363 = vld [vmem:[%s1348 + $0x38] sm:$0xf]
      %v1364 = vld [vmem:[%s1348 + $0x3c] sm:$0xf]
      %v1385 = vunpack.c.l.b16 %v1328
      %v1386 = vunpack.c.l.b16 %v1329
      %v1387 = vunpack.c.l.b16 %v1330
      %v1388 = vunpack.c.l.b16 %v1331
      %v1389 = vunpack.c.l.b16 %v1332
      %v1390 = vunpack.c.l.b16 %v1333
      %v1391 = vunpack.c.l.b16 %v1334
      %v1392 = vunpack.c.l.b16 %v1335
      %v1393 = vunpack.c.l.b16 %v1336
      %v1394 = vunpack.c.l.b16 %v1337
      %v1395 = vunpack.c.l.b16 %v1338
      %v1396 = vunpack.c.l.b16 %v1339
      %v1397 = vunpack.c.l.b16 %v1340
      %v1398 = vunpack.c.l.b16 %v1341
      %v1399 = vunpack.c.l.b16 %v1342
      %v1400 = vunpack.c.l.b16 %v1343
      %v1401 = vunpack.c.l.b16 %v1344
      %v1402 = vunpack.c.l.b16 %v1345
      %v1403 = vunpack.c.l.b16 %v1346
      %v1404 = vunpack.c.l.b16 %v1347
      %v1405 = vpack.c.b16 %v1386, %v1385
      %v1406 = vpack.c.b16 %v1388, %v1387
      %v1407 = vpack.c.b16 %v1390, %v1389
      %v1408 = vpack.c.b16 %v1392, %v1391
      %v1409 = vpack.c.b16 %v1394, %v1393
      %v1410 = vpack.c.b16 %v1396, %v1395
      %v1411 = vpack.c.b16 %v1398, %v1397
      %v1412 = vpack.c.b16 %v1400, %v1399
      %v1413 = vpack.c.b16 %v1402, %v1401
      %v1414 = vpack.c.b16 %v1404, %v1403
      %v1441 = vunpack.c.l.b16 %v1349
      %v1442 = vunpack.c.l.b16 %v1350
      %v1443 = vunpack.c.l.b16 %v1351
      %v1444 = vunpack.c.l.b16 %v1352
      %v1445 = vunpack.c.l.b16 %v1353
      %v1446 = vunpack.c.l.b16 %v1354
      %v1447 = vunpack.c.l.b16 %v1355
      %v1448 = vunpack.c.l.b16 %v1356
      %v1449 = vunpack.c.l.b16 %v1357
      %v1450 = vunpack.c.l.b16 %v1358
      %v1451 = vunpack.c.l.b16 %v1359
      %v1452 = vunpack.c.l.b16 %v1360
      %v1453 = vunpack.c.l.b16 %v1361
      %v1454 = vunpack.c.l.b16 %v1362
      %v1455 = vunpack.c.l.b16 %v1363
      %v1456 = vunpack.c.l.b16 %v1364
      %v1457 = vpack.c.b16 %v1442, %v1441
      %v1458 = vpack.c.b16 %v1444, %v1443
      %v1459 = vpack.c.b16 %v1446, %v1445
      %v1460 = vpack.c.b16 %v1448, %v1447
      %v1461 = vpack.c.b16 %v1450, %v1449
      %v1462 = vpack.c.b16 %v1452, %v1451
      %v1463 = vpack.c.b16 %v1454, %v1453
      %v1464 = vpack.c.b16 %v1456, %v1455
      %1473 = vmatprep.subr.bf16.mxu0 0
      %1474 = vmatpush1.bf16.msra.mxu0 %v1464
      %1475 = vmatprep.subr.bf16.mxu0 0
      %1476 = vmatpush1.bf16.msra.mxu0 %v1463
      %1477 = vmatprep.subr.bf16.mxu0 0
      %1478 = vmatpush1.bf16.msra.mxu0 %v1462
      %1479 = vmatprep.subr.bf16.mxu0 0
      %1480 = vmatpush1.bf16.msra.mxu0 %v1461
      %1481 = vmatprep.subr.bf16.mxu0 0
      %1482 = vmatpush1.bf16.msra.mxu0 %v1460
      %1483 = vmatprep.subr.bf16.mxu0 0
      %1484 = vmatpush1.bf16.msra.mxu0 %v1459
      %1485 = vmatprep.subr.bf16.mxu0 0
      %1486 = vmatpush1.bf16.msra.mxu0 %v1458
      %1487 = vmatprep.subr.bf16.mxu0 0
      %1488 = vmatpush1.bf16.msra.mxu0 %v1457
      %1489 = vmatprep.subr.bf16.mxu0 0
      %1490 = vmatpush2.bf16.msra.mxu0 0
      %1491 = vmatprep.subr.bf16.mxu0 0
      %1492 = vmatpush2.bf16.msra.mxu0 0
      %1493 = vmatprep.subr.bf16.mxu0 0
      %1494 = vmatpush2.bf16.msra.mxu0 0
      %1495 = vmatprep.subr.bf16.mxu0 0
      %1496 = vmatpush2.bf16.msra.mxu0 0
      %1497 = vmatprep.subr.bf16.mxu0 0
      %1498 = vmatpush2.bf16.msra.mxu0 0
      %1499 = vmatprep.subr.bf16.mxu0 0
      %1500 = vmatpush2.bf16.msra.mxu0 0
      %1501 = vmatprep.subr.bf16.mxu0 0
      %1502 = vmatpush2.bf16.msra.mxu0 0
      %1503 = vmatprep.subr.bf16.mxu0 0
      %1504 = vmatpush2.bf16.msra.mxu0 0
      %1505 = vmatprep.mubr.bf16.mxu0 0
      %1506 = vmatmul.mubr.bf16.gmra.mxu0 %v1405
      %v1507 = vpop.f32.mrf.mxu0
      %v1508 = vadd.f32 0.0, %v1507
      %v1509 = vpop.f32.mrf.mxu0
      %v1510 = vpop.f32.mrf.mxu0
      %v1511 = vadd.f32 0.0, %v1510
      %v1512 = vpop.f32.mrf.mxu0
      %1513 = vmatprep.mubr.bf16.mxu0 0
      %1514 = vmatmul.mubr.bf16.gmra.mxu0 %v1406
      %v1515 = vpop.f32.mrf.mxu0
      %v1516 = vadd.f32 0.0, %v1515
      %v1517 = vpop.f32.mrf.mxu0
      %v1518 = vpop.f32.mrf.mxu0
      %v1519 = vadd.f32 0.0, %v1518
      %v1520 = vpop.f32.mrf.mxu0
      %1521 = vmatprep.mubr.bf16.mxu0 0
      %1522 = vmatmul.mubr.bf16.gmra.mxu0 %v1407
      %v1523 = vpop.f32.mrf.mxu0
      %v1524 = vadd.f32 0.0, %v1523
      %v1525 = vpop.f32.mrf.mxu0
      %v1526 = vpop.f32.mrf.mxu0
      %v1527 = vadd.f32 0.0, %v1526
      %v1528 = vpop.f32.mrf.mxu0
      %1529 = vmatprep.mubr.bf16.mxu0 0
      %1530 = vmatmul.mubr.bf16.gmra.mxu0 %v1408
      %v1531 = vpop.f32.mrf.mxu0
      %v1532 = vadd.f32 0.0, %v1531
      %v1533 = vpop.f32.mrf.mxu0
      %v1534 = vpop.f32.mrf.mxu0
      %v1535 = vadd.f32 0.0, %v1534
      %v1536 = vpop.f32.mrf.mxu0
      %1537 = vmatprep.mubr.bf16.mxu0 0
      %1538 = vmatmul.mubr.bf16.gmra.mxu0 %v1409
      %v1539 = vpop.f32.mrf.mxu0
      %v1540 = vadd.f32 0.0, %v1539
      %v1541 = vpop.f32.mrf.mxu0
      %v1542 = vpop.f32.mrf.mxu0
      %v1543 = vadd.f32 0.0, %v1542
      %v1544 = vpop.f32.mrf.mxu0
      %1545 = vmatprep.mubr.bf16.mxu0 0
      %1546 = vmatmul.mubr.bf16.gmra.mxu0 %v1410
      %v1547 = vpop.f32.mrf.mxu0
      %v1548 = vadd.f32 0.0, %v1547
      %v1549 = vpop.f32.mrf.mxu0
      %v1550 = vpop.f32.mrf.mxu0
      %v1551 = vadd.f32 0.0, %v1550
      %v1552 = vpop.f32.mrf.mxu0
      %1553 = vmatprep.mubr.bf16.mxu0 0
      %1554 = vmatmul.mubr.bf16.gmra.mxu0 %v1411
      %v1555 = vpop.f32.mrf.mxu0
      %v1556 = vadd.f32 0.0, %v1555
      %v1557 = vpop.f32.mrf.mxu0
      %v1558 = vpop.f32.mrf.mxu0
      %v1559 = vadd.f32 0.0, %v1558
      %v1560 = vpop.f32.mrf.mxu0
      %1561 = vmatprep.mubr.bf16.mxu0 0
      %1562 = vmatmul.mubr.bf16.gmra.mxu0 %v1412
      %v1563 = vpop.f32.mrf.mxu0
      %v1564 = vadd.f32 0.0, %v1563
      %v1565 = vpop.f32.mrf.mxu0
      %v1566 = vpop.f32.mrf.mxu0
      %v1567 = vadd.f32 0.0, %v1566
      %v1568 = vpop.f32.mrf.mxu0
      %1569 = vmatprep.mubr.bf16.mxu0 0
      %1570 = vmatmul.mubr.bf16.gmra.mxu0 %v1413
      %v1571 = vpop.f32.mrf.mxu0
      %v1572 = vadd.f32 0.0, %v1571
      %v1573 = vpop.f32.mrf.mxu0
      %v1574 = vpop.f32.mrf.mxu0
      %v1575 = vadd.f32 0.0, %v1574
      %v1576 = vpop.f32.mrf.mxu0
      %1577 = vmatprep.mubr.bf16.mxu0 0
      %1578 = vmatmul.mubr.bf16.gmra.mxu0 %v1414
      %v1579 = vpop.f32.mrf.mxu0
      %v1580 = vadd.f32 0.0, %v1579
      %v1581 = vpop.f32.mrf.mxu0
      %v1582 = vpop.f32.mrf.mxu0
      %v1583 = vadd.f32 0.0, %v1582
      %v1584 = vpop.f32.mrf.mxu0
      %1585 = vdwg.mxu0
      %v1586 = vadd.f32 %v1304, %v1508
      %v1587 = vadd.f32 %v1305, %v1511
      %v1588 = vadd.f32 %v1306, %v1516
      %v1589 = vadd.f32 %v1307, %v1519
      %v1590 = vadd.f32 %v1308, %v1524
      %v1591 = vadd.f32 %v1309, %v1527
      %v1592 = vadd.f32 %v1310, %v1532
      %v1593 = vadd.f32 %v1311, %v1535
      %v1594 = vadd.f32 %v1312, %v1540
      %v1595 = vadd.f32 %v1313, %v1543
      %v1596 = vadd.f32 %v1314, %v1548
      %v1597 = vadd.f32 %v1315, %v1551
      %v1598 = vadd.f32 %v1316, %v1556
      %v1599 = vadd.f32 %v1317, %v1559
      %v1600 = vadd.f32 %v1318, %v1564
      %v1601 = vadd.f32 %v1319, %v1567
      %v1602 = vadd.f32 %v1320, %v1572
      %v1603 = vadd.f32 %v1321, %v1575
      %v1604 = vadd.f32 %v1322, %v1580
      %v1605 = vadd.f32 %v1323, %v1583
      %v1606 = vld [vmem:[%s1327] sm:$0xf]
      %v1607 = vld [vmem:[%s1327 + $0x4] sm:$0xf]
      %v1608 = vld [vmem:[%s1327 + $0x8] sm:$0x1]
      %v1609 = vld [vmem:[%s1327 + $0xc] sm:$0xf]
      %v1610 = vld [vmem:[%s1327 + $0x10] sm:$0xf]
      %v1611 = vld [vmem:[%s1327 + $0x14] sm:$0x1]
      %v1612 = vld [vmem:[%s1327 + $0x18] sm:$0xf]
      %v1613 = vld [vmem:[%s1327 + $0x1c] sm:$0xf]
      %v1614 = vld [vmem:[%s1327 + $0x20] sm:$0x1]
      %v1615 = vld [vmem:[%s1327 + $0x24] sm:$0xf]
      %v1616 = vld [vmem:[%s1327 + $0x28] sm:$0xf]
      %v1617 = vld [vmem:[%s1327 + $0x2c] sm:$0x1]
      %v1618 = vld [vmem:[%s1327 + $0x30] sm:$0xf]
      %v1619 = vld [vmem:[%s1327 + $0x34] sm:$0xf]
      %v1620 = vld [vmem:[%s1327 + $0x38] sm:$0x1]
      %v1621 = vld [vmem:[%s1327 + $0x3c] sm:$0xf]
      %v1622 = vld [vmem:[%s1327 + $0x40] sm:$0xf]
      %v1623 = vld [vmem:[%s1327 + $0x44] sm:$0x1]
      %v1624 = vld [vmem:[%s1327 + $0x48] sm:$0xf]
      %v1625 = vld [vmem:[%s1327 + $0x4c] sm:$0xf]
      %v1626 = vld [vmem:[%s1327 + $0x50] sm:$0x1]
      %v1627 = vld [vmem:[%s1327 + $0x54] sm:$0xf]
      %v1628 = vld [vmem:[%s1327 + $0x58] sm:$0xf]
      %v1629 = vld [vmem:[%s1327 + $0x5c] sm:$0x1]
      %v1630 = vld [vmem:[%s1327 + $0x60] sm:$0xf]
      %v1631 = vld [vmem:[%s1327 + $0x64] sm:$0xf]
      %v1632 = vld [vmem:[%s1327 + $0x68] sm:$0x1]
      %v1633 = vld [vmem:[%s1327 + $0x6c] sm:$0xf]
      %v1634 = vld [vmem:[%s1327 + $0x70] sm:$0xf]
      %v1635 = vld [vmem:[%s1327 + $0x74] sm:$0x1]
      %v1637 = vshrl.u32 %v1606, 16
      %v1639 = vrot.slane %v1637, 4
      %v1640 = vshll.u32 %v1606, 16
      %v1642 = vrot.slane %v1640, 5
      %v1643 = vor.u32 %v1639, %v1642
      %v1644 = vrot.slane %v1643, 4
      %v1646 = vshll.u32 %v1607, 16
      %v1648 = vrot.slane %v1646, 5
      %v1649 = vsel %vm303, %v1644, %v1648
      %v1650 = vshrl.u32 %v1607, 16
      %v1652 = vrot.slane %v1650, 4
      %v1653 = vor.u32 %v1652, %v1648
      %v1654 = vrot.slane %v1653, 4
      %v1656 = vshll.u32 %v1608, 16
      %v1658 = vrot.slane %v1656, 5
      %v1659 = vsel %vm303, %v1654, %v1658
      %v1661 = vshrl.u32 %v1609, 16
      %v1663 = vrot.slane %v1661, 4
      %v1664 = vshll.u32 %v1609, 16
      %v1666 = vrot.slane %v1664, 5
      %v1667 = vor.u32 %v1663, %v1666
      %v1668 = vrot.slane %v1667, 4
      %v1670 = vshll.u32 %v1610, 16
      %v1672 = vrot.slane %v1670, 5
      %v1673 = vsel %vm303, %v1668, %v1672
      %v1674 = vshrl.u32 %v1610, 16
      %v1676 = vrot.slane %v1674, 4
      %v1677 = vor.u32 %v1676, %v1672
      %v1678 = vrot.slane %v1677, 4
      %v1680 = vshll.u32 %v1611, 16
      %v1682 = vrot.slane %v1680, 5
      %v1683 = vsel %vm303, %v1678, %v1682
      %v1685 = vshrl.u32 %v1612, 16
      %v1687 = vrot.slane %v1685, 4
      %v1688 = vshll.u32 %v1612, 16
      %v1690 = vrot.slane %v1688, 5
      %v1691 = vor.u32 %v1687, %v1690
      %v1692 = vrot.slane %v1691, 4
      %v1694 = vshll.u32 %v1613, 16
      %v1696 = vrot.slane %v1694, 5
      %v1697 = vsel %vm303, %v1692, %v1696
      %v1698 = vshrl.u32 %v1613, 16
      %v1700 = vrot.slane %v1698, 4
      %v1701 = vor.u32 %v1700, %v1696
      %v1702 = vrot.slane %v1701, 4
      %v1704 = vshll.u32 %v1614, 16
      %v1706 = vrot.slane %v1704, 5
      %v1707 = vsel %vm303, %v1702, %v1706
      %v1709 = vshrl.u32 %v1615, 16
      %v1711 = vrot.slane %v1709, 4
      %v1712 = vshll.u32 %v1615, 16
      %v1714 = vrot.slane %v1712, 5
      %v1715 = vor.u32 %v1711, %v1714
      %v1716 = vrot.slane %v1715, 4
      %v1718 = vshll.u32 %v1616, 16
      %v1720 = vrot.slane %v1718, 5
      %v1721 = vsel %vm303, %v1716, %v1720
      %v1722 = vshrl.u32 %v1616, 16
      %v1724 = vrot.slane %v1722, 4
      %v1725 = vor.u32 %v1724, %v1720
      %v1726 = vrot.slane %v1725, 4
      %v1728 = vshll.u32 %v1617, 16
      %v1730 = vrot.slane %v1728, 5
      %v1731 = vsel %vm303, %v1726, %v1730
      %v1733 = vshrl.u32 %v1618, 16
      %v1735 = vrot.slane %v1733, 4
      %v1736 = vshll.u32 %v1618, 16
      %v1738 = vrot.slane %v1736, 5
      %v1739 = vor.u32 %v1735, %v1738
      %v1740 = vrot.slane %v1739, 4
      %v1742 = vshll.u32 %v1619, 16
      %v1744 = vrot.slane %v1742, 5
      %v1745 = vsel %vm303, %v1740, %v1744
      %v1746 = vshrl.u32 %v1619, 16
      %v1748 = vrot.slane %v1746, 4
      %v1749 = vor.u32 %v1748, %v1744
      %v1750 = vrot.slane %v1749, 4
      %v1752 = vshll.u32 %v1620, 16
      %v1754 = vrot.slane %v1752, 5
      %v1755 = vsel %vm303, %v1750, %v1754
      %v1757 = vshrl.u32 %v1621, 16
      %v1759 = vrot.slane %v1757, 4
      %v1760 = vshll.u32 %v1621, 16
      %v1762 = vrot.slane %v1760, 5
      %v1763 = vor.u32 %v1759, %v1762
      %v1764 = vrot.slane %v1763, 4
      %v1766 = vshll.u32 %v1622, 16
      %v1768 = vrot.slane %v1766, 5
      %v1769 = vsel %vm303, %v1764, %v1768
      %v1770 = vshrl.u32 %v1622, 16
      %v1772 = vrot.slane %v1770, 4
      %v1773 = vor.u32 %v1772, %v1768
      %v1774 = vrot.slane %v1773, 4
      %v1776 = vshll.u32 %v1623, 16
      %v1778 = vrot.slane %v1776, 5
      %v1779 = vsel %vm303, %v1774, %v1778
      %v1781 = vshrl.u32 %v1624, 16
      %v1783 = vrot.slane %v1781, 4
      %v1784 = vshll.u32 %v1624, 16
      %v1786 = vrot.slane %v1784, 5
      %v1787 = vor.u32 %v1783, %v1786
      %v1788 = vrot.slane %v1787, 4
      %v1790 = vshll.u32 %v1625, 16
      %v1792 = vrot.slane %v1790, 5
      %v1793 = vsel %vm303, %v1788, %v1792
      %v1794 = vshrl.u32 %v1625, 16
      %v1796 = vrot.slane %v1794, 4
      %v1797 = vor.u32 %v1796, %v1792
      %v1798 = vrot.slane %v1797, 4
      %v1800 = vshll.u32 %v1626, 16
      %v1802 = vrot.slane %v1800, 5
      %v1803 = vsel %vm303, %v1798, %v1802
      %v1805 = vshrl.u32 %v1627, 16
      %v1807 = vrot.slane %v1805, 4
      %v1808 = vshll.u32 %v1627, 16
      %v1810 = vrot.slane %v1808, 5
      %v1811 = vor.u32 %v1807, %v1810
      %v1812 = vrot.slane %v1811, 4
      %v1814 = vshll.u32 %v1628, 16
      %v1816 = vrot.slane %v1814, 5
      %v1817 = vsel %vm303, %v1812, %v1816
      %v1818 = vshrl.u32 %v1628, 16
      %v1820 = vrot.slane %v1818, 4
      %v1821 = vor.u32 %v1820, %v1816
      %v1822 = vrot.slane %v1821, 4
      %v1824 = vshll.u32 %v1629, 16
      %v1826 = vrot.slane %v1824, 5
      %v1827 = vsel %vm303, %v1822, %v1826
      %v1829 = vshrl.u32 %v1630, 16
      %v1831 = vrot.slane %v1829, 4
      %v1832 = vshll.u32 %v1630, 16
      %v1834 = vrot.slane %v1832, 5
      %v1835 = vor.u32 %v1831, %v1834
      %v1836 = vrot.slane %v1835, 4
      %v1838 = vshll.u32 %v1631, 16
      %v1840 = vrot.slane %v1838, 5
      %v1841 = vsel %vm303, %v1836, %v1840
      %v1842 = vshrl.u32 %v1631, 16
      %v1844 = vrot.slane %v1842, 4
      %v1845 = vor.u32 %v1844, %v1840
      %v1846 = vrot.slane %v1845, 4
      %v1848 = vshll.u32 %v1632, 16
      %v1850 = vrot.slane %v1848, 5
      %v1851 = vsel %vm303, %v1846, %v1850
      %v1853 = vshrl.u32 %v1633, 16
      %v1855 = vrot.slane %v1853, 4
      %v1856 = vshll.u32 %v1633, 16
      %v1858 = vrot.slane %v1856, 5
      %v1859 = vor.u32 %v1855, %v1858
      %v1860 = vrot.slane %v1859, 4
      %v1862 = vshll.u32 %v1634, 16
      %v1864 = vrot.slane %v1862, 5
      %v1865 = vsel %vm303, %v1860, %v1864
      %v1866 = vshrl.u32 %v1634, 16
      %v1868 = vrot.slane %v1866, 4
      %v1869 = vor.u32 %v1868, %v1864
      %v1870 = vrot.slane %v1869, 4
      %v1872 = vshll.u32 %v1635, 16
      %v1874 = vrot.slane %v1872, 5
      %v1875 = vsel %vm303, %v1870, %v1874
      %s1876 = scalar_lea.vmem %s1, 256
      %v1877 = vld [vmem:[%s1876] sm:$0xf]
      %v1878 = vld [vmem:[%s1876 + $0x4] sm:$0xf]
      %v1879 = vld [vmem:[%s1876 + $0x8] sm:$0xf]
      %v1880 = vld [vmem:[%s1876 + $0xc] sm:$0xf]
      %v1881 = vld [vmem:[%s1876 + $0x10] sm:$0xf]
      %v1882 = vld [vmem:[%s1876 + $0x14] sm:$0xf]
      %v1883 = vld [vmem:[%s1876 + $0x18] sm:$0xf]
      %v1884 = vld [vmem:[%s1876 + $0x1c] sm:$0xf]
      %v1885 = vld [vmem:[%s1876 + $0x20] sm:$0xf]
      %v1886 = vld [vmem:[%s1876 + $0x24] sm:$0xf]
      %v1887 = vld [vmem:[%s1876 + $0x28] sm:$0xf]
      %v1888 = vld [vmem:[%s1876 + $0x2c] sm:$0xf]
      %v1889 = vld [vmem:[%s1876 + $0x30] sm:$0xf]
      %v1890 = vld [vmem:[%s1876 + $0x34] sm:$0xf]
      %v1891 = vld [vmem:[%s1876 + $0x38] sm:$0xf]
      %v1892 = vld [vmem:[%s1876 + $0x3c] sm:$0xf]
      %v1893 = vunpack.c.l.b16 %v1649
      %v1894 = vunpack.c.l.b16 %v1659
      %v1895 = vunpack.c.l.b16 %v1673
      %v1896 = vunpack.c.l.b16 %v1683
      %v1897 = vunpack.c.l.b16 %v1697
      %v1898 = vunpack.c.l.b16 %v1707
      %v1899 = vunpack.c.l.b16 %v1721
      %v1900 = vunpack.c.l.b16 %v1731
      %v1901 = vunpack.c.l.b16 %v1745
      %v1902 = vunpack.c.l.b16 %v1755
      %v1903 = vunpack.c.l.b16 %v1769
      %v1904 = vunpack.c.l.b16 %v1779
      %v1905 = vunpack.c.l.b16 %v1793
      %v1906 = vunpack.c.l.b16 %v1803
      %v1907 = vunpack.c.l.b16 %v1817
      %v1908 = vunpack.c.l.b16 %v1827
      %v1909 = vunpack.c.l.b16 %v1841
      %v1910 = vunpack.c.l.b16 %v1851
      %v1911 = vunpack.c.l.b16 %v1865
      %v1912 = vunpack.c.l.b16 %v1875
      %v1913 = vpack.c.b16 %v1894, %v1893
      %v1914 = vpack.c.b16 %v1896, %v1895
      %v1915 = vpack.c.b16 %v1898, %v1897
      %v1916 = vpack.c.b16 %v1900, %v1899
      %v1917 = vpack.c.b16 %v1902, %v1901
      %v1918 = vpack.c.b16 %v1904, %v1903
      %v1919 = vpack.c.b16 %v1906, %v1905
      %v1920 = vpack.c.b16 %v1908, %v1907
      %v1921 = vpack.c.b16 %v1910, %v1909
      %v1922 = vpack.c.b16 %v1912, %v1911
      %v1949 = vunpack.c.l.b16 %v1877
      %v1950 = vunpack.c.l.b16 %v1878
      %v1951 = vunpack.c.l.b16 %v1879
      %v1952 = vunpack.c.l.b16 %v1880
      %v1953 = vunpack.c.l.b16 %v1881
      %v1954 = vunpack.c.l.b16 %v1882
      %v1955 = vunpack.c.l.b16 %v1883
      %v1956 = vunpack.c.l.b16 %v1884
      %v1957 = vunpack.c.l.b16 %v1885
      %v1958 = vunpack.c.l.b16 %v1886
      %v1959 = vunpack.c.l.b16 %v1887
      %v1960 = vunpack.c.l.b16 %v1888
      %v1961 = vunpack.c.l.b16 %v1889
      %v1962 = vunpack.c.l.b16 %v1890
      %v1963 = vunpack.c.l.b16 %v1891
      %v1964 = vunpack.c.l.b16 %v1892
      %v1965 = vpack.c.b16 %v1950, %v1949
      %v1966 = vpack.c.b16 %v1952, %v1951
      %v1967 = vpack.c.b16 %v1954, %v1953
      %v1968 = vpack.c.b16 %v1956, %v1955
      %v1969 = vpack.c.b16 %v1958, %v1957
      %v1970 = vpack.c.b16 %v1960, %v1959
      %v1971 = vpack.c.b16 %v1962, %v1961
      %v1972 = vpack.c.b16 %v1964, %v1963
      %1981 = vmatprep.subr.bf16.mxu0 0
      %1982 = vmatpush1.bf16.msra.mxu0 %v1972
      %1983 = vmatprep.subr.bf16.mxu0 0
      %1984 = vmatpush1.bf16.msra.mxu0 %v1971
      %1985 = vmatprep.subr.bf16.mxu0 0
      %1986 = vmatpush1.bf16.msra.mxu0 %v1970
      %1987 = vmatprep.subr.bf16.mxu0 0
      %1988 = vmatpush1.bf16.msra.mxu0 %v1969
      %1989 = vmatprep.subr.bf16.mxu0 0
      %1990 = vmatpush1.bf16.msra.mxu0 %v1968
      %1991 = vmatprep.subr.bf16.mxu0 0
      %1992 = vmatpush1.bf16.msra.mxu0 %v1967
      %1993 = vmatprep.subr.bf16.mxu0 0
      %1994 = vmatpush1.bf16.msra.mxu0 %v1966
      %1995 = vmatprep.subr.bf16.mxu0 0
      %1996 = vmatpush1.bf16.msra.mxu0 %v1965
      %1997 = vmatprep.subr.bf16.mxu0 0
      %1998 = vmatpush2.bf16.msra.mxu0 0
      %1999 = vmatprep.subr.bf16.mxu0 0
      %2000 = vmatpush2.bf16.msra.mxu0 0
      %2001 = vmatprep.subr.bf16.mxu0 0
      %2002 = vmatpush2.bf16.msra.mxu0 0
      %2003 = vmatprep.subr.bf16.mxu0 0
      %2004 = vmatpush2.bf16.msra.mxu0 0
      %2005 = vmatprep.subr.bf16.mxu0 0
      %2006 = vmatpush2.bf16.msra.mxu0 0
      %2007 = vmatprep.subr.bf16.mxu0 0
      %2008 = vmatpush2.bf16.msra.mxu0 0
      %2009 = vmatprep.subr.bf16.mxu0 0
      %2010 = vmatpush2.bf16.msra.mxu0 0
      %2011 = vmatprep.subr.bf16.mxu0 0
      %2012 = vmatpush2.bf16.msra.mxu0 0
      %2013 = vmatprep.mubr.bf16.mxu0 0
      %2014 = vmatmul.mubr.bf16.gmra.mxu0 %v1913
      %v2015 = vpop.f32.mrf.mxu0
      %v2016 = vadd.f32 0.0, %v2015
      %v2017 = vpop.f32.mrf.mxu0
      %v2018 = vpop.f32.mrf.mxu0
      %v2019 = vadd.f32 0.0, %v2018
      %v2020 = vpop.f32.mrf.mxu0
      %2021 = vmatprep.mubr.bf16.mxu0 0
      %2022 = vmatmul.mubr.bf16.gmra.mxu0 %v1914
      %v2023 = vpop.f32.mrf.mxu0
      %v2024 = vadd.f32 0.0, %v2023
      %v2025 = vpop.f32.mrf.mxu0
      %v2026 = vpop.f32.mrf.mxu0
      %v2027 = vadd.f32 0.0, %v2026
      %v2028 = vpop.f32.mrf.mxu0
      %2029 = vmatprep.mubr.bf16.mxu0 0
      %2030 = vmatmul.mubr.bf16.gmra.mxu0 %v1915
      %v2031 = vpop.f32.mrf.mxu0
      %v2032 = vadd.f32 0.0, %v2031
      %v2033 = vpop.f32.mrf.mxu0
      %v2034 = vpop.f32.mrf.mxu0
      %v2035 = vadd.f32 0.0, %v2034
      %v2036 = vpop.f32.mrf.mxu0
      %2037 = vmatprep.mubr.bf16.mxu0 0
      %2038 = vmatmul.mubr.bf16.gmra.mxu0 %v1916
      %v2039 = vpop.f32.mrf.mxu0
      %v2040 = vadd.f32 0.0, %v2039
      %v2041 = vpop.f32.mrf.mxu0
      %v2042 = vpop.f32.mrf.mxu0
      %v2043 = vadd.f32 0.0, %v2042
      %v2044 = vpop.f32.mrf.mxu0
      %2045 = vmatprep.mubr.bf16.mxu0 0
      %2046 = vmatmul.mubr.bf16.gmra.mxu0 %v1917
      %v2047 = vpop.f32.mrf.mxu0
      %v2048 = vadd.f32 0.0, %v2047
      %v2049 = vpop.f32.mrf.mxu0
      %v2050 = vpop.f32.mrf.mxu0
      %v2051 = vadd.f32 0.0, %v2050
      %v2052 = vpop.f32.mrf.mxu0
      %2053 = vmatprep.mubr.bf16.mxu0 0
      %2054 = vmatmul.mubr.bf16.gmra.mxu0 %v1918
      %v2055 = vpop.f32.mrf.mxu0
      %v2056 = vadd.f32 0.0, %v2055
      %v2057 = vpop.f32.mrf.mxu0
      %v2058 = vpop.f32.mrf.mxu0
      %v2059 = vadd.f32 0.0, %v2058
      %v2060 = vpop.f32.mrf.mxu0
      %2061 = vmatprep.mubr.bf16.mxu0 0
      %2062 = vmatmul.mubr.bf16.gmra.mxu0 %v1919
      %v2063 = vpop.f32.mrf.mxu0
      %v2064 = vadd.f32 0.0, %v2063
      %v2065 = vpop.f32.mrf.mxu0
      %v2066 = vpop.f32.mrf.mxu0
      %v2067 = vadd.f32 0.0, %v2066
      %v2068 = vpop.f32.mrf.mxu0
      %2069 = vmatprep.mubr.bf16.mxu0 0
      %2070 = vmatmul.mubr.bf16.gmra.mxu0 %v1920
      %v2071 = vpop.f32.mrf.mxu0
      %v2072 = vadd.f32 0.0, %v2071
      %v2073 = vpop.f32.mrf.mxu0
      %v2074 = vpop.f32.mrf.mxu0
      %v2075 = vadd.f32 0.0, %v2074
      %v2076 = vpop.f32.mrf.mxu0
      %2077 = vmatprep.mubr.bf16.mxu0 0
      %2078 = vmatmul.mubr.bf16.gmra.mxu0 %v1921
      %v2079 = vpop.f32.mrf.mxu0
      %v2080 = vadd.f32 0.0, %v2079
      %v2081 = vpop.f32.mrf.mxu0
      %v2082 = vpop.f32.mrf.mxu0
      %v2083 = vadd.f32 0.0, %v2082
      %v2084 = vpop.f32.mrf.mxu0
      %2085 = vmatprep.mubr.bf16.mxu0 0
      %2086 = vmatmul.mubr.bf16.gmra.mxu0 %v1922
      %v2087 = vpop.f32.mrf.mxu0
      %v2088 = vadd.f32 0.0, %v2087
      %v2089 = vpop.f32.mrf.mxu0
      %v2090 = vpop.f32.mrf.mxu0
      %v2091 = vadd.f32 0.0, %v2090
      %v2092 = vpop.f32.mrf.mxu0
      %2093 = vdwg.mxu0
      %v2094 = vadd.f32 %v1586, %v2016
      %v2095 = vadd.f32 %v1587, %v2019
      %v2096 = vadd.f32 %v1588, %v2024
      %v2097 = vadd.f32 %v1589, %v2027
      %v2098 = vadd.f32 %v1590, %v2032
      %v2099 = vadd.f32 %v1591, %v2035
      %v2100 = vadd.f32 %v1592, %v2040
      %v2101 = vadd.f32 %v1593, %v2043
      %v2102 = vadd.f32 %v1594, %v2048
      %v2103 = vadd.f32 %v1595, %v2051
      %v2104 = vadd.f32 %v1596, %v2056
      %v2105 = vadd.f32 %v1597, %v2059
      %v2106 = vadd.f32 %v1598, %v2064
      %v2107 = vadd.f32 %v1599, %v2067
      %v2108 = vadd.f32 %v1600, %v2072
      %v2109 = vadd.f32 %v1601, %v2075
      %v2110 = vadd.f32 %v1602, %v2080
      %v2111 = vadd.f32 %v1603, %v2083
      %v2112 = vadd.f32 %v1604, %v2088
      %v2113 = vadd.f32 %v1605, %v2091
      %v2114 = vld [vmem:[%s1327] sm:$0xe]
      %v2115 = vld [vmem:[%s1327 + $0xc] sm:$0xe]
      %v2116 = vld [vmem:[%s1327 + $0x18] sm:$0xe]
      %v2117 = vld [vmem:[%s1327 + $0x24] sm:$0xe]
      %v2118 = vld [vmem:[%s1327 + $0x30] sm:$0xe]
      %v2119 = vld [vmem:[%s1327 + $0x3c] sm:$0xe]
      %v2120 = vld [vmem:[%s1327 + $0x48] sm:$0xe]
      %v2121 = vld [vmem:[%s1327 + $0x54] sm:$0xe]
      %v2122 = vld [vmem:[%s1327 + $0x60] sm:$0xe]
      %v2123 = vld [vmem:[%s1327 + $0x6c] sm:$0xe]
      %v2154 = vrot.slane %v2114, 5
      %v2155 = vrot.slane %v2154, 4
      %v2156 = vrot.slane %v1607, 5
      %v2157 = vsel %vm1015, %v2155, %v2156
      %v2158 = vrot.slane %v2156, 4
      %v2159 = vrot.slane %v1608, 5
      %v2160 = vsel %vm1015, %v2158, %v2159
      %v2161 = vrot.slane %v2115, 5
      %v2162 = vrot.slane %v2161, 4
      %v2163 = vrot.slane %v1610, 5
      %v2164 = vsel %vm1015, %v2162, %v2163
      %v2165 = vrot.slane %v2163, 4
      %v2166 = vrot.slane %v1611, 5
      %v2167 = vsel %vm1015, %v2165, %v2166
      %v2168 = vrot.slane %v2116, 5
      %v2169 = vrot.slane %v2168, 4
      %v2170 = vrot.slane %v1613, 5
      %v2171 = vsel %vm1015, %v2169, %v2170
      %v2172 = vrot.slane %v2170, 4
      %v2173 = vrot.slane %v1614, 5
      %v2174 = vsel %vm1015, %v2172, %v2173
      %v2175 = vrot.slane %v2117, 5
      %v2176 = vrot.slane %v2175, 4
      %v2177 = vrot.slane %v1616, 5
      %v2178 = vsel %vm1015, %v2176, %v2177
      %v2179 = vrot.slane %v2177, 4
      %v2180 = vrot.slane %v1617, 5
      %v2181 = vsel %vm1015, %v2179, %v2180
      %v2182 = vrot.slane %v2118, 5
      %v2183 = vrot.slane %v2182, 4
      %v2184 = vrot.slane %v1619, 5
      %v2185 = vsel %vm1015, %v2183, %v2184
      %v2186 = vrot.slane %v2184, 4
      %v2187 = vrot.slane %v1620, 5
      %v2188 = vsel %vm1015, %v2186, %v2187
      %v2189 = vrot.slane %v2119, 5
      %v2190 = vrot.slane %v2189, 4
      %v2191 = vrot.slane %v1622, 5
      %v2192 = vsel %vm1015, %v2190, %v2191
      %v2193 = vrot.slane %v2191, 4
      %v2194 = vrot.slane %v1623, 5
      %v2195 = vsel %vm1015, %v2193, %v2194
      %v2196 = vrot.slane %v2120, 5
      %v2197 = vrot.slane %v2196, 4
      %v2198 = vrot.slane %v1625, 5
      %v2199 = vsel %vm1015, %v2197, %v2198
      %v2200 = vrot.slane %v2198, 4
      %v2201 = vrot.slane %v1626, 5
      %v2202 = vsel %vm1015, %v2200, %v2201
      %v2203 = vrot.slane %v2121, 5
      %v2204 = vrot.slane %v2203, 4
      %v2205 = vrot.slane %v1628, 5
      %v2206 = vsel %vm1015, %v2204, %v2205
      %v2207 = vrot.slane %v2205, 4
      %v2208 = vrot.slane %v1629, 5
      %v2209 = vsel %vm1015, %v2207, %v2208
      %v2210 = vrot.slane %v2122, 5
      %v2211 = vrot.slane %v2210, 4
      %v2212 = vrot.slane %v1631, 5
      %v2213 = vsel %vm1015, %v2211, %v2212
      %v2214 = vrot.slane %v2212, 4
      %v2215 = vrot.slane %v1632, 5
      %v2216 = vsel %vm1015, %v2214, %v2215
      %v2217 = vrot.slane %v2123, 5
      %v2218 = vrot.slane %v2217, 4
      %v2219 = vrot.slane %v1634, 5
      %v2220 = vsel %vm1015, %v2218, %v2219
      %v2221 = vrot.slane %v2219, 4
      %v2222 = vrot.slane %v1635, 5
      %v2223 = vsel %vm1015, %v2221, %v2222
      %s2224 = scalar_lea.vmem %s1, 320
      %v2225 = vld [vmem:[%s2224] sm:$0xf]
      %v2226 = vld [vmem:[%s2224 + $0x4] sm:$0xf]
      %v2227 = vld [vmem:[%s2224 + $0x8] sm:$0xf]
      %v2228 = vld [vmem:[%s2224 + $0xc] sm:$0xf]
      %v2229 = vld [vmem:[%s2224 + $0x10] sm:$0xf]
      %v2230 = vld [vmem:[%s2224 + $0x14] sm:$0xf]
      %v2231 = vld [vmem:[%s2224 + $0x18] sm:$0xf]
      %v2232 = vld [vmem:[%s2224 + $0x1c] sm:$0xf]
      %v2233 = vld [vmem:[%s2224 + $0x20] sm:$0xf]
      %v2234 = vld [vmem:[%s2224 + $0x24] sm:$0xf]
      %v2235 = vld [vmem:[%s2224 + $0x28] sm:$0xf]
      %v2236 = vld [vmem:[%s2224 + $0x2c] sm:$0xf]
      %v2237 = vld [vmem:[%s2224 + $0x30] sm:$0xf]
      %v2238 = vld [vmem:[%s2224 + $0x34] sm:$0xf]
      %v2239 = vld [vmem:[%s2224 + $0x38] sm:$0xf]
      %v2240 = vld [vmem:[%s2224 + $0x3c] sm:$0xf]
      %v2241 = vunpack.c.l.b16 %v2157
      %v2242 = vunpack.c.l.b16 %v2160
      %v2243 = vunpack.c.l.b16 %v2164
      %v2244 = vunpack.c.l.b16 %v2167
      %v2245 = vunpack.c.l.b16 %v2171
      %v2246 = vunpack.c.l.b16 %v2174
      %v2247 = vunpack.c.l.b16 %v2178
      %v2248 = vunpack.c.l.b16 %v2181
      %v2249 = vunpack.c.l.b16 %v2185
      %v2250 = vunpack.c.l.b16 %v2188
      %v2251 = vunpack.c.l.b16 %v2192
      %v2252 = vunpack.c.l.b16 %v2195
      %v2253 = vunpack.c.l.b16 %v2199
      %v2254 = vunpack.c.l.b16 %v2202
      %v2255 = vunpack.c.l.b16 %v2206
      %v2256 = vunpack.c.l.b16 %v2209
      %v2257 = vunpack.c.l.b16 %v2213
      %v2258 = vunpack.c.l.b16 %v2216
      %v2259 = vunpack.c.l.b16 %v2220
      %v2260 = vunpack.c.l.b16 %v2223
      %v2261 = vpack.c.b16 %v2242, %v2241
      %v2262 = vpack.c.b16 %v2244, %v2243
      %v2263 = vpack.c.b16 %v2246, %v2245
      %v2264 = vpack.c.b16 %v2248, %v2247
      %v2265 = vpack.c.b16 %v2250, %v2249
      %v2266 = vpack.c.b16 %v2252, %v2251
      %v2267 = vpack.c.b16 %v2254, %v2253
      %v2268 = vpack.c.b16 %v2256, %v2255
      %v2269 = vpack.c.b16 %v2258, %v2257
      %v2270 = vpack.c.b16 %v2260, %v2259
      %v2297 = vunpack.c.l.b16 %v2225
      %v2298 = vunpack.c.l.b16 %v2226
      %v2299 = vunpack.c.l.b16 %v2227
      %v2300 = vunpack.c.l.b16 %v2228
      %v2301 = vunpack.c.l.b16 %v2229
      %v2302 = vunpack.c.l.b16 %v2230
      %v2303 = vunpack.c.l.b16 %v2231
      %v2304 = vunpack.c.l.b16 %v2232
      %v2305 = vunpack.c.l.b16 %v2233
      %v2306 = vunpack.c.l.b16 %v2234
      %v2307 = vunpack.c.l.b16 %v2235
      %v2308 = vunpack.c.l.b16 %v2236
      %v2309 = vunpack.c.l.b16 %v2237
      %v2310 = vunpack.c.l.b16 %v2238
      %v2311 = vunpack.c.l.b16 %v2239
      %v2312 = vunpack.c.l.b16 %v2240
      %v2313 = vpack.c.b16 %v2298, %v2297
      %v2314 = vpack.c.b16 %v2300, %v2299
      %v2315 = vpack.c.b16 %v2302, %v2301
      %v2316 = vpack.c.b16 %v2304, %v2303
      %v2317 = vpack.c.b16 %v2306, %v2305
      %v2318 = vpack.c.b16 %v2308, %v2307
      %v2319 = vpack.c.b16 %v2310, %v2309
      %v2320 = vpack.c.b16 %v2312, %v2311
      %2329 = vmatprep.subr.bf16.mxu0 0
      %2330 = vmatpush1.bf16.msra.mxu0 %v2320
      %2331 = vmatprep.subr.bf16.mxu0 0
      %2332 = vmatpush1.bf16.msra.mxu0 %v2319
      %2333 = vmatprep.subr.bf16.mxu0 0
      %2334 = vmatpush1.bf16.msra.mxu0 %v2318
      %2335 = vmatprep.subr.bf16.mxu0 0
      %2336 = vmatpush1.bf16.msra.mxu0 %v2317
      %2337 = vmatprep.subr.bf16.mxu0 0
      %2338 = vmatpush1.bf16.msra.mxu0 %v2316
      %2339 = vmatprep.subr.bf16.mxu0 0
      %2340 = vmatpush1.bf16.msra.mxu0 %v2315
      %2341 = vmatprep.subr.bf16.mxu0 0
      %2342 = vmatpush1.bf16.msra.mxu0 %v2314
      %2343 = vmatprep.subr.bf16.mxu0 0
      %2344 = vmatpush1.bf16.msra.mxu0 %v2313
      %2345 = vmatprep.subr.bf16.mxu0 0
      %2346 = vmatpush2.bf16.msra.mxu0 0
      %2347 = vmatprep.subr.bf16.mxu0 0
      %2348 = vmatpush2.bf16.msra.mxu0 0
      %2349 = vmatprep.subr.bf16.mxu0 0
      %2350 = vmatpush2.bf16.msra.mxu0 0
      %2351 = vmatprep.subr.bf16.mxu0 0
      %2352 = vmatpush2.bf16.msra.mxu0 0
      %2353 = vmatprep.subr.bf16.mxu0 0
      %2354 = vmatpush2.bf16.msra.mxu0 0
      %2355 = vmatprep.subr.bf16.mxu0 0
      %2356 = vmatpush2.bf16.msra.mxu0 0
      %2357 = vmatprep.subr.bf16.mxu0 0
      %2358 = vmatpush2.bf16.msra.mxu0 0
      %2359 = vmatprep.subr.bf16.mxu0 0
      %2360 = vmatpush2.bf16.msra.mxu0 0
      %2361 = vmatprep.mubr.bf16.mxu0 0
      %2362 = vmatmul.mubr.bf16.gmra.mxu0 %v2261
      %v2363 = vpop.f32.mrf.mxu0
      %v2364 = vadd.f32 0.0, %v2363
      %v2365 = vpop.f32.mrf.mxu0
      %v2366 = vpop.f32.mrf.mxu0
      %v2367 = vadd.f32 0.0, %v2366
      %v2368 = vpop.f32.mrf.mxu0
      %2369 = vmatprep.mubr.bf16.mxu0 0
      %2370 = vmatmul.mubr.bf16.gmra.mxu0 %v2262
      %v2371 = vpop.f32.mrf.mxu0
      %v2372 = vadd.f32 0.0, %v2371
      %v2373 = vpop.f32.mrf.mxu0
      %v2374 = vpop.f32.mrf.mxu0
      %v2375 = vadd.f32 0.0, %v2374
      %v2376 = vpop.f32.mrf.mxu0
      %2377 = vmatprep.mubr.bf16.mxu0 0
      %2378 = vmatmul.mubr.bf16.gmra.mxu0 %v2263
      %v2379 = vpop.f32.mrf.mxu0
      %v2380 = vadd.f32 0.0, %v2379
      %v2381 = vpop.f32.mrf.mxu0
      %v2382 = vpop.f32.mrf.mxu0
      %v2383 = vadd.f32 0.0, %v2382
      %v2384 = vpop.f32.mrf.mxu0
      %2385 = vmatprep.mubr.bf16.mxu0 0
      %2386 = vmatmul.mubr.bf16.gmra.mxu0 %v2264
      %v2387 = vpop.f32.mrf.mxu0
      %v2388 = vadd.f32 0.0, %v2387
      %v2389 = vpop.f32.mrf.mxu0
      %v2390 = vpop.f32.mrf.mxu0
      %v2391 = vadd.f32 0.0, %v2390
      %v2392 = vpop.f32.mrf.mxu0
      %2393 = vmatprep.mubr.bf16.mxu0 0
      %2394 = vmatmul.mubr.bf16.gmra.mxu0 %v2265
      %v2395 = vpop.f32.mrf.mxu0
      %v2396 = vadd.f32 0.0, %v2395
      %v2397 = vpop.f32.mrf.mxu0
      %v2398 = vpop.f32.mrf.mxu0
      %v2399 = vadd.f32 0.0, %v2398
      %v2400 = vpop.f32.mrf.mxu0
      %2401 = vmatprep.mubr.bf16.mxu0 0
      %2402 = vmatmul.mubr.bf16.gmra.mxu0 %v2266
      %v2403 = vpop.f32.mrf.mxu0
      %v2404 = vadd.f32 0.0, %v2403
      %v2405 = vpop.f32.mrf.mxu0
      %v2406 = vpop.f32.mrf.mxu0
      %v2407 = vadd.f32 0.0, %v2406
      %v2408 = vpop.f32.mrf.mxu0
      %2409 = vmatprep.mubr.bf16.mxu0 0
      %2410 = vmatmul.mubr.bf16.gmra.mxu0 %v2267
      %v2411 = vpop.f32.mrf.mxu0
      %v2412 = vadd.f32 0.0, %v2411
      %v2413 = vpop.f32.mrf.mxu0
      %v2414 = vpop.f32.mrf.mxu0
      %v2415 = vadd.f32 0.0, %v2414
      %v2416 = vpop.f32.mrf.mxu0
      %2417 = vmatprep.mubr.bf16.mxu0 0
      %2418 = vmatmul.mubr.bf16.gmra.mxu0 %v2268
      %v2419 = vpop.f32.mrf.mxu0
      %v2420 = vadd.f32 0.0, %v2419
      %v2421 = vpop.f32.mrf.mxu0
      %v2422 = vpop.f32.mrf.mxu0
      %v2423 = vadd.f32 0.0, %v2422
      %v2424 = vpop.f32.mrf.mxu0
      %2425 = vmatprep.mubr.bf16.mxu0 0
      %2426 = vmatmul.mubr.bf16.gmra.mxu0 %v2269
      %v2427 = vpop.f32.mrf.mxu0
      %v2428 = vadd.f32 0.0, %v2427
      %v2429 = vpop.f32.mrf.mxu0
      %v2430 = vpop.f32.mrf.mxu0
      %v2431 = vadd.f32 0.0, %v2430
      %v2432 = vpop.f32.mrf.mxu0
      %2433 = vmatprep.mubr.bf16.mxu0 0
      %2434 = vmatmul.mubr.bf16.gmra.mxu0 %v2270
      %v2435 = vpop.f32.mrf.mxu0
      %v2436 = vadd.f32 0.0, %v2435
      %v2437 = vpop.f32.mrf.mxu0
      %v2438 = vpop.f32.mrf.mxu0
      %v2439 = vadd.f32 0.0, %v2438
      %v2440 = vpop.f32.mrf.mxu0
      %2441 = vdwg.mxu0
      %v2442 = vadd.f32 %v2094, %v2364
      %v2443 = vadd.f32 %v2095, %v2367
      %v2444 = vadd.f32 %v2096, %v2372
      %v2445 = vadd.f32 %v2097, %v2375
      %v2446 = vadd.f32 %v2098, %v2380
      %v2447 = vadd.f32 %v2099, %v2383
      %v2448 = vadd.f32 %v2100, %v2388
      %v2449 = vadd.f32 %v2101, %v2391
      %v2450 = vadd.f32 %v2102, %v2396
      %v2451 = vadd.f32 %v2103, %v2399
      %v2452 = vadd.f32 %v2104, %v2404
      %v2453 = vadd.f32 %v2105, %v2407
      %v2454 = vadd.f32 %v2106, %v2412
      %v2455 = vadd.f32 %v2107, %v2415
      %v2456 = vadd.f32 %v2108, %v2420
      %v2457 = vadd.f32 %v2109, %v2423
      %v2458 = vadd.f32 %v2110, %v2428
      %v2459 = vadd.f32 %v2111, %v2431
      %v2460 = vadd.f32 %v2112, %v2436
      %v2461 = vadd.f32 %v2113, %v2439
      %s2462 = sadd.s32 %s251, 2
      %s2463 = smul.u32 %s2462, 3
      %s2464 = smul.addr %s2463, 4
      %s2465 = scalar_lea.vmem %s238, %s2464
      %v2466 = vld [vmem:[%s2465] sm:$0xf]
      %v2467 = vld [vmem:[%s2465 + $0x4] sm:$0xf]
      %v2468 = vld [vmem:[%s2465 + $0xc] sm:$0xf]
      %v2469 = vld [vmem:[%s2465 + $0x10] sm:$0xf]
      %v2470 = vld [vmem:[%s2465 + $0x18] sm:$0xf]
      %v2471 = vld [vmem:[%s2465 + $0x1c] sm:$0xf]
      %v2472 = vld [vmem:[%s2465 + $0x24] sm:$0xf]
      %v2473 = vld [vmem:[%s2465 + $0x28] sm:$0xf]
      %v2474 = vld [vmem:[%s2465 + $0x30] sm:$0xf]
      %v2475 = vld [vmem:[%s2465 + $0x34] sm:$0xf]
      %v2476 = vld [vmem:[%s2465 + $0x3c] sm:$0xf]
      %v2477 = vld [vmem:[%s2465 + $0x40] sm:$0xf]
      %v2478 = vld [vmem:[%s2465 + $0x48] sm:$0xf]
      %v2479 = vld [vmem:[%s2465 + $0x4c] sm:$0xf]
      %v2480 = vld [vmem:[%s2465 + $0x54] sm:$0xf]
      %v2481 = vld [vmem:[%s2465 + $0x58] sm:$0xf]
      %v2482 = vld [vmem:[%s2465 + $0x60] sm:$0xf]
      %v2483 = vld [vmem:[%s2465 + $0x64] sm:$0xf]
      %v2484 = vld [vmem:[%s2465 + $0x6c] sm:$0xf]
      %v2485 = vld [vmem:[%s2465 + $0x70] sm:$0xf]
      %s2486 = scalar_lea.vmem %s1, 384
      %v2487 = vld [vmem:[%s2486] sm:$0xf]
      %v2488 = vld [vmem:[%s2486 + $0x4] sm:$0xf]
      %v2489 = vld [vmem:[%s2486 + $0x8] sm:$0xf]
      %v2490 = vld [vmem:[%s2486 + $0xc] sm:$0xf]
      %v2491 = vld [vmem:[%s2486 + $0x10] sm:$0xf]
      %v2492 = vld [vmem:[%s2486 + $0x14] sm:$0xf]
      %v2493 = vld [vmem:[%s2486 + $0x18] sm:$0xf]
      %v2494 = vld [vmem:[%s2486 + $0x1c] sm:$0xf]
      %v2495 = vld [vmem:[%s2486 + $0x20] sm:$0xf]
      %v2496 = vld [vmem:[%s2486 + $0x24] sm:$0xf]
      %v2497 = vld [vmem:[%s2486 + $0x28] sm:$0xf]
      %v2498 = vld [vmem:[%s2486 + $0x2c] sm:$0xf]
      %v2499 = vld [vmem:[%s2486 + $0x30] sm:$0xf]
      %v2500 = vld [vmem:[%s2486 + $0x34] sm:$0xf]
      %v2501 = vld [vmem:[%s2486 + $0x38] sm:$0xf]
      %v2502 = vld [vmem:[%s2486 + $0x3c] sm:$0xf]
      %v2523 = vunpack.c.l.b16 %v2466
      %v2524 = vunpack.c.l.b16 %v2467
      %v2525 = vunpack.c.l.b16 %v2468
      %v2526 = vunpack.c.l.b16 %v2469
      %v2527 = vunpack.c.l.b16 %v2470
      %v2528 = vunpack.c.l.b16 %v2471
      %v2529 = vunpack.c.l.b16 %v2472
      %v2530 = vunpack.c.l.b16 %v2473
      %v2531 = vunpack.c.l.b16 %v2474
      %v2532 = vunpack.c.l.b16 %v2475
      %v2533 = vunpack.c.l.b16 %v2476
      %v2534 = vunpack.c.l.b16 %v2477
      %v2535 = vunpack.c.l.b16 %v2478
      %v2536 = vunpack.c.l.b16 %v2479
      %v2537 = vunpack.c.l.b16 %v2480
      %v2538 = vunpack.c.l.b16 %v2481
      %v2539 = vunpack.c.l.b16 %v2482
      %v2540 = vunpack.c.l.b16 %v2483
      %v2541 = vunpack.c.l.b16 %v2484
      %v2542 = vunpack.c.l.b16 %v2485
      %v2543 = vpack.c.b16 %v2524, %v2523
      %v2544 = vpack.c.b16 %v2526, %v2525
      %v2545 = vpack.c.b16 %v2528, %v2527
      %v2546 = vpack.c.b16 %v2530, %v2529
      %v2547 = vpack.c.b16 %v2532, %v2531
      %v2548 = vpack.c.b16 %v2534, %v2533
      %v2549 = vpack.c.b16 %v2536, %v2535
      %v2550 = vpack.c.b16 %v2538, %v2537
      %v2551 = vpack.c.b16 %v2540, %v2539
      %v2552 = vpack.c.b16 %v2542, %v2541
      %v2579 = vunpack.c.l.b16 %v2487
      %v2580 = vunpack.c.l.b16 %v2488
      %v2581 = vunpack.c.l.b16 %v2489
      %v2582 = vunpack.c.l.b16 %v2490
      %v2583 = vunpack.c.l.b16 %v2491
      %v2584 = vunpack.c.l.b16 %v2492
      %v2585 = vunpack.c.l.b16 %v2493
      %v2586 = vunpack.c.l.b16 %v2494
      %v2587 = vunpack.c.l.b16 %v2495
      %v2588 = vunpack.c.l.b16 %v2496
      %v2589 = vunpack.c.l.b16 %v2497
      %v2590 = vunpack.c.l.b16 %v2498
      %v2591 = vunpack.c.l.b16 %v2499
      %v2592 = vunpack.c.l.b16 %v2500
      %v2593 = vunpack.c.l.b16 %v2501
      %v2594 = vunpack.c.l.b16 %v2502
      %v2595 = vpack.c.b16 %v2580, %v2579
      %v2596 = vpack.c.b16 %v2582, %v2581
      %v2597 = vpack.c.b16 %v2584, %v2583
      %v2598 = vpack.c.b16 %v2586, %v2585
      %v2599 = vpack.c.b16 %v2588, %v2587
      %v2600 = vpack.c.b16 %v2590, %v2589
      %v2601 = vpack.c.b16 %v2592, %v2591
      %v2602 = vpack.c.b16 %v2594, %v2593
      %2611 = vmatprep.subr.bf16.mxu0 0
      %2612 = vmatpush1.bf16.msra.mxu0 %v2602
      %2613 = vmatprep.subr.bf16.mxu0 0
      %2614 = vmatpush1.bf16.msra.mxu0 %v2601
      %2615 = vmatprep.subr.bf16.mxu0 0
      %2616 = vmatpush1.bf16.msra.mxu0 %v2600
      %2617 = vmatprep.subr.bf16.mxu0 0
      %2618 = vmatpush1.bf16.msra.mxu0 %v2599
      %2619 = vmatprep.subr.bf16.mxu0 0
      %2620 = vmatpush1.bf16.msra.mxu0 %v2598
      %2621 = vmatprep.subr.bf16.mxu0 0
      %2622 = vmatpush1.bf16.msra.mxu0 %v2597
      %2623 = vmatprep.subr.bf16.mxu0 0
      %2624 = vmatpush1.bf16.msra.mxu0 %v2596
      %2625 = vmatprep.subr.bf16.mxu0 0
      %2626 = vmatpush1.bf16.msra.mxu0 %v2595
      %2627 = vmatprep.subr.bf16.mxu0 0
      %2628 = vmatpush2.bf16.msra.mxu0 0
      %2629 = vmatprep.subr.bf16.mxu0 0
      %2630 = vmatpush2.bf16.msra.mxu0 0
      %2631 = vmatprep.subr.bf16.mxu0 0
      %2632 = vmatpush2.bf16.msra.mxu0 0
      %2633 = vmatprep.subr.bf16.mxu0 0
      %2634 = vmatpush2.bf16.msra.mxu0 0
      %2635 = vmatprep.subr.bf16.mxu0 0
      %2636 = vmatpush2.bf16.msra.mxu0 0
      %2637 = vmatprep.subr.bf16.mxu0 0
      %2638 = vmatpush2.bf16.msra.mxu0 0
      %2639 = vmatprep.subr.bf16.mxu0 0
      %2640 = vmatpush2.bf16.msra.mxu0 0
      %2641 = vmatprep.subr.bf16.mxu0 0
      %2642 = vmatpush2.bf16.msra.mxu0 0
      %2643 = vmatprep.mubr.bf16.mxu0 0
      %2644 = vmatmul.mubr.bf16.gmra.mxu0 %v2543
      %v2645 = vpop.f32.mrf.mxu0
      %v2646 = vadd.f32 0.0, %v2645
      %v2647 = vpop.f32.mrf.mxu0
      %v2648 = vpop.f32.mrf.mxu0
      %v2649 = vadd.f32 0.0, %v2648
      %v2650 = vpop.f32.mrf.mxu0
      %2651 = vmatprep.mubr.bf16.mxu0 0
      %2652 = vmatmul.mubr.bf16.gmra.mxu0 %v2544
      %v2653 = vpop.f32.mrf.mxu0
      %v2654 = vadd.f32 0.0, %v2653
      %v2655 = vpop.f32.mrf.mxu0
      %v2656 = vpop.f32.mrf.mxu0
      %v2657 = vadd.f32 0.0, %v2656
      %v2658 = vpop.f32.mrf.mxu0
      %2659 = vmatprep.mubr.bf16.mxu0 0
      %2660 = vmatmul.mubr.bf16.gmra.mxu0 %v2545
      %v2661 = vpop.f32.mrf.mxu0
      %v2662 = vadd.f32 0.0, %v2661
      %v2663 = vpop.f32.mrf.mxu0
      %v2664 = vpop.f32.mrf.mxu0
      %v2665 = vadd.f32 0.0, %v2664
      %v2666 = vpop.f32.mrf.mxu0
      %2667 = vmatprep.mubr.bf16.mxu0 0
      %2668 = vmatmul.mubr.bf16.gmra.mxu0 %v2546
      %v2669 = vpop.f32.mrf.mxu0
      %v2670 = vadd.f32 0.0, %v2669
      %v2671 = vpop.f32.mrf.mxu0
      %v2672 = vpop.f32.mrf.mxu0
      %v2673 = vadd.f32 0.0, %v2672
      %v2674 = vpop.f32.mrf.mxu0
      %2675 = vmatprep.mubr.bf16.mxu0 0
      %2676 = vmatmul.mubr.bf16.gmra.mxu0 %v2547
      %v2677 = vpop.f32.mrf.mxu0
      %v2678 = vadd.f32 0.0, %v2677
      %v2679 = vpop.f32.mrf.mxu0
      %v2680 = vpop.f32.mrf.mxu0
      %v2681 = vadd.f32 0.0, %v2680
      %v2682 = vpop.f32.mrf.mxu0
      %2683 = vmatprep.mubr.bf16.mxu0 0
      %2684 = vmatmul.mubr.bf16.gmra.mxu0 %v2548
      %v2685 = vpop.f32.mrf.mxu0
      %v2686 = vadd.f32 0.0, %v2685
      %v2687 = vpop.f32.mrf.mxu0
      %v2688 = vpop.f32.mrf.mxu0
      %v2689 = vadd.f32 0.0, %v2688
      %v2690 = vpop.f32.mrf.mxu0
      %2691 = vmatprep.mubr.bf16.mxu0 0
      %2692 = vmatmul.mubr.bf16.gmra.mxu0 %v2549
      %v2693 = vpop.f32.mrf.mxu0
      %v2694 = vadd.f32 0.0, %v2693
      %v2695 = vpop.f32.mrf.mxu0
      %v2696 = vpop.f32.mrf.mxu0
      %v2697 = vadd.f32 0.0, %v2696
      %v2698 = vpop.f32.mrf.mxu0
      %2699 = vmatprep.mubr.bf16.mxu0 0
      %2700 = vmatmul.mubr.bf16.gmra.mxu0 %v2550
      %v2701 = vpop.f32.mrf.mxu0
      %v2702 = vadd.f32 0.0, %v2701
      %v2703 = vpop.f32.mrf.mxu0
      %v2704 = vpop.f32.mrf.mxu0
      %v2705 = vadd.f32 0.0, %v2704
      %v2706 = vpop.f32.mrf.mxu0
      %2707 = vmatprep.mubr.bf16.mxu0 0
      %2708 = vmatmul.mubr.bf16.gmra.mxu0 %v2551
      %v2709 = vpop.f32.mrf.mxu0
      %v2710 = vadd.f32 0.0, %v2709
      %v2711 = vpop.f32.mrf.mxu0
      %v2712 = vpop.f32.mrf.mxu0
      %v2713 = vadd.f32 0.0, %v2712
      %v2714 = vpop.f32.mrf.mxu0
      %2715 = vmatprep.mubr.bf16.mxu0 0
      %2716 = vmatmul.mubr.bf16.gmra.mxu0 %v2552
      %v2717 = vpop.f32.mrf.mxu0
      %v2718 = vadd.f32 0.0, %v2717
      %v2719 = vpop.f32.mrf.mxu0
      %v2720 = vpop.f32.mrf.mxu0
      %v2721 = vadd.f32 0.0, %v2720
      %v2722 = vpop.f32.mrf.mxu0
      %2723 = vdwg.mxu0
      %v2724 = vadd.f32 %v2442, %v2646
      %v2725 = vadd.f32 %v2443, %v2649
      %v2726 = vadd.f32 %v2444, %v2654
      %v2727 = vadd.f32 %v2445, %v2657
      %v2728 = vadd.f32 %v2446, %v2662
      %v2729 = vadd.f32 %v2447, %v2665
      %v2730 = vadd.f32 %v2448, %v2670
      %v2731 = vadd.f32 %v2449, %v2673
      %v2732 = vadd.f32 %v2450, %v2678
      %v2733 = vadd.f32 %v2451, %v2681
      %v2734 = vadd.f32 %v2452, %v2686
      %v2735 = vadd.f32 %v2453, %v2689
      %v2736 = vadd.f32 %v2454, %v2694
      %v2737 = vadd.f32 %v2455, %v2697
      %v2738 = vadd.f32 %v2456, %v2702
      %v2739 = vadd.f32 %v2457, %v2705
      %v2740 = vadd.f32 %v2458, %v2710
      %v2741 = vadd.f32 %v2459, %v2713
      %v2742 = vadd.f32 %v2460, %v2718
      %v2743 = vadd.f32 %v2461, %v2721
      %v2744 = vld [vmem:[%s2465] sm:$0xf]
      %v2745 = vld [vmem:[%s2465 + $0x4] sm:$0xf]
      %v2746 = vld [vmem:[%s2465 + $0x8] sm:$0x1]
      %v2747 = vld [vmem:[%s2465 + $0xc] sm:$0xf]
      %v2748 = vld [vmem:[%s2465 + $0x10] sm:$0xf]
      %v2749 = vld [vmem:[%s2465 + $0x14] sm:$0x1]
      %v2750 = vld [vmem:[%s2465 + $0x18] sm:$0xf]
      %v2751 = vld [vmem:[%s2465 + $0x1c] sm:$0xf]
      %v2752 = vld [vmem:[%s2465 + $0x20] sm:$0x1]
      %v2753 = vld [vmem:[%s2465 + $0x24] sm:$0xf]
      %v2754 = vld [vmem:[%s2465 + $0x28] sm:$0xf]
      %v2755 = vld [vmem:[%s2465 + $0x2c] sm:$0x1]
      %v2756 = vld [vmem:[%s2465 + $0x30] sm:$0xf]
      %v2757 = vld [vmem:[%s2465 + $0x34] sm:$0xf]
      %v2758 = vld [vmem:[%s2465 + $0x38] sm:$0x1]
      %v2759 = vld [vmem:[%s2465 + $0x3c] sm:$0xf]
      %v2760 = vld [vmem:[%s2465 + $0x40] sm:$0xf]
      %v2761 = vld [vmem:[%s2465 + $0x44] sm:$0x1]
      %v2762 = vld [vmem:[%s2465 + $0x48] sm:$0xf]
      %v2763 = vld [vmem:[%s2465 + $0x4c] sm:$0xf]
      %v2764 = vld [vmem:[%s2465 + $0x50] sm:$0x1]
      %v2765 = vld [vmem:[%s2465 + $0x54] sm:$0xf]
      %v2766 = vld [vmem:[%s2465 + $0x58] sm:$0xf]
      %v2767 = vld [vmem:[%s2465 + $0x5c] sm:$0x1]
      %v2768 = vld [vmem:[%s2465 + $0x60] sm:$0xf]
      %v2769 = vld [vmem:[%s2465 + $0x64] sm:$0xf]
      %v2770 = vld [vmem:[%s2465 + $0x68] sm:$0x1]
      %v2771 = vld [vmem:[%s2465 + $0x6c] sm:$0xf]
      %v2772 = vld [vmem:[%s2465 + $0x70] sm:$0xf]
      %v2773 = vld [vmem:[%s2465 + $0x74] sm:$0x1]
      %v2775 = vshrl.u32 %v2744, 16
      %v2777 = vrot.slane %v2775, 4
      %v2778 = vshll.u32 %v2744, 16
      %v2780 = vrot.slane %v2778, 5
      %v2781 = vor.u32 %v2777, %v2780
      %v2782 = vrot.slane %v2781, 4
      %v2784 = vshll.u32 %v2745, 16
      %v2786 = vrot.slane %v2784, 5
      %v2787 = vsel %vm303, %v2782, %v2786
      %v2788 = vshrl.u32 %v2745, 16
      %v2790 = vrot.slane %v2788, 4
      %v2791 = vor.u32 %v2790, %v2786
      %v2792 = vrot.slane %v2791, 4
      %v2794 = vshll.u32 %v2746, 16
      %v2796 = vrot.slane %v2794, 5
      %v2797 = vsel %vm303, %v2792, %v2796
      %v2799 = vshrl.u32 %v2747, 16
      %v2801 = vrot.slane %v2799, 4
      %v2802 = vshll.u32 %v2747, 16
      %v2804 = vrot.slane %v2802, 5
      %v2805 = vor.u32 %v2801, %v2804
      %v2806 = vrot.slane %v2805, 4
      %v2808 = vshll.u32 %v2748, 16
      %v2810 = vrot.slane %v2808, 5
      %v2811 = vsel %vm303, %v2806, %v2810
      %v2812 = vshrl.u32 %v2748, 16
      %v2814 = vrot.slane %v2812, 4
      %v2815 = vor.u32 %v2814, %v2810
      %v2816 = vrot.slane %v2815, 4
      %v2818 = vshll.u32 %v2749, 16
      %v2820 = vrot.slane %v2818, 5
      %v2821 = vsel %vm303, %v2816, %v2820
      %v2823 = vshrl.u32 %v2750, 16
      %v2825 = vrot.slane %v2823, 4
      %v2826 = vshll.u32 %v2750, 16
      %v2828 = vrot.slane %v2826, 5
      %v2829 = vor.u32 %v2825, %v2828
      %v2830 = vrot.slane %v2829, 4
      %v2832 = vshll.u32 %v2751, 16
      %v2834 = vrot.slane %v2832, 5
      %v2835 = vsel %vm303, %v2830, %v2834
      %v2836 = vshrl.u32 %v2751, 16
      %v2838 = vrot.slane %v2836, 4
      %v2839 = vor.u32 %v2838, %v2834
      %v2840 = vrot.slane %v2839, 4
      %v2842 = vshll.u32 %v2752, 16
      %v2844 = vrot.slane %v2842, 5
      %v2845 = vsel %vm303, %v2840, %v2844
      %v2847 = vshrl.u32 %v2753, 16
      %v2849 = vrot.slane %v2847, 4
      %v2850 = vshll.u32 %v2753, 16
      %v2852 = vrot.slane %v2850, 5
      %v2853 = vor.u32 %v2849, %v2852
      %v2854 = vrot.slane %v2853, 4
      %v2856 = vshll.u32 %v2754, 16
      %v2858 = vrot.slane %v2856, 5
      %v2859 = vsel %vm303, %v2854, %v2858
      %v2860 = vshrl.u32 %v2754, 16
      %v2862 = vrot.slane %v2860, 4
      %v2863 = vor.u32 %v2862, %v2858
      %v2864 = vrot.slane %v2863, 4
      %v2866 = vshll.u32 %v2755, 16
      %v2868 = vrot.slane %v2866, 5
      %v2869 = vsel %vm303, %v2864, %v2868
      %v2871 = vshrl.u32 %v2756, 16
      %v2873 = vrot.slane %v2871, 4
      %v2874 = vshll.u32 %v2756, 16
      %v2876 = vrot.slane %v2874, 5
      %v2877 = vor.u32 %v2873, %v2876
      %v2878 = vrot.slane %v2877, 4
      %v2880 = vshll.u32 %v2757, 16
      %v2882 = vrot.slane %v2880, 5
      %v2883 = vsel %vm303, %v2878, %v2882
      %v2884 = vshrl.u32 %v2757, 16
      %v2886 = vrot.slane %v2884, 4
      %v2887 = vor.u32 %v2886, %v2882
      %v2888 = vrot.slane %v2887, 4
      %v2890 = vshll.u32 %v2758, 16
      %v2892 = vrot.slane %v2890, 5
      %v2893 = vsel %vm303, %v2888, %v2892
      %v2895 = vshrl.u32 %v2759, 16
      %v2897 = vrot.slane %v2895, 4
      %v2898 = vshll.u32 %v2759, 16
      %v2900 = vrot.slane %v2898, 5
      %v2901 = vor.u32 %v2897, %v2900
      %v2902 = vrot.slane %v2901, 4
      %v2904 = vshll.u32 %v2760, 16
      %v2906 = vrot.slane %v2904, 5
      %v2907 = vsel %vm303, %v2902, %v2906
      %v2908 = vshrl.u32 %v2760, 16
      %v2910 = vrot.slane %v2908, 4
      %v2911 = vor.u32 %v2910, %v2906
      %v2912 = vrot.slane %v2911, 4
      %v2914 = vshll.u32 %v2761, 16
      %v2916 = vrot.slane %v2914, 5
      %v2917 = vsel %vm303, %v2912, %v2916
      %v2919 = vshrl.u32 %v2762, 16
      %v2921 = vrot.slane %v2919, 4
      %v2922 = vshll.u32 %v2762, 16
      %v2924 = vrot.slane %v2922, 5
      %v2925 = vor.u32 %v2921, %v2924
      %v2926 = vrot.slane %v2925, 4
      %v2928 = vshll.u32 %v2763, 16
      %v2930 = vrot.slane %v2928, 5
      %v2931 = vsel %vm303, %v2926, %v2930
      %v2932 = vshrl.u32 %v2763, 16
      %v2934 = vrot.slane %v2932, 4
      %v2935 = vor.u32 %v2934, %v2930
      %v2936 = vrot.slane %v2935, 4
      %v2938 = vshll.u32 %v2764, 16
      %v2940 = vrot.slane %v2938, 5
      %v2941 = vsel %vm303, %v2936, %v2940
      %v2943 = vshrl.u32 %v2765, 16
      %v2945 = vrot.slane %v2943, 4
      %v2946 = vshll.u32 %v2765, 16
      %v2948 = vrot.slane %v2946, 5
      %v2949 = vor.u32 %v2945, %v2948
      %v2950 = vrot.slane %v2949, 4
      %v2952 = vshll.u32 %v2766, 16
      %v2954 = vrot.slane %v2952, 5
      %v2955 = vsel %vm303, %v2950, %v2954
      %v2956 = vshrl.u32 %v2766, 16
      %v2958 = vrot.slane %v2956, 4
      %v2959 = vor.u32 %v2958, %v2954
      %v2960 = vrot.slane %v2959, 4
      %v2962 = vshll.u32 %v2767, 16
      %v2964 = vrot.slane %v2962, 5
      %v2965 = vsel %vm303, %v2960, %v2964
      %v2967 = vshrl.u32 %v2768, 16
      %v2969 = vrot.slane %v2967, 4
      %v2970 = vshll.u32 %v2768, 16
      %v2972 = vrot.slane %v2970, 5
      %v2973 = vor.u32 %v2969, %v2972
      %v2974 = vrot.slane %v2973, 4
      %v2976 = vshll.u32 %v2769, 16
      %v2978 = vrot.slane %v2976, 5
      %v2979 = vsel %vm303, %v2974, %v2978
      %v2980 = vshrl.u32 %v2769, 16
      %v2982 = vrot.slane %v2980, 4
      %v2983 = vor.u32 %v2982, %v2978
      %v2984 = vrot.slane %v2983, 4
      %v2986 = vshll.u32 %v2770, 16
      %v2988 = vrot.slane %v2986, 5
      %v2989 = vsel %vm303, %v2984, %v2988
      %v2991 = vshrl.u32 %v2771, 16
      %v2993 = vrot.slane %v2991, 4
      %v2994 = vshll.u32 %v2771, 16
      %v2996 = vrot.slane %v2994, 5
      %v2997 = vor.u32 %v2993, %v2996
      %v2998 = vrot.slane %v2997, 4
      %v3000 = vshll.u32 %v2772, 16
      %v3002 = vrot.slane %v3000, 5
      %v3003 = vsel %vm303, %v2998, %v3002
      %v3004 = vshrl.u32 %v2772, 16
      %v3006 = vrot.slane %v3004, 4
      %v3007 = vor.u32 %v3006, %v3002
      %v3008 = vrot.slane %v3007, 4
      %v3010 = vshll.u32 %v2773, 16
      %v3012 = vrot.slane %v3010, 5
      %v3013 = vsel %vm303, %v3008, %v3012
      %s3014 = scalar_lea.vmem %s1, 448
      %v3015 = vld [vmem:[%s3014] sm:$0xf]
      %v3016 = vld [vmem:[%s3014 + $0x4] sm:$0xf]
      %v3017 = vld [vmem:[%s3014 + $0x8] sm:$0xf]
      %v3018 = vld [vmem:[%s3014 + $0xc] sm:$0xf]
      %v3019 = vld [vmem:[%s3014 + $0x10] sm:$0xf]
      %v3020 = vld [vmem:[%s3014 + $0x14] sm:$0xf]
      %v3021 = vld [vmem:[%s3014 + $0x18] sm:$0xf]
      %v3022 = vld [vmem:[%s3014 + $0x1c] sm:$0xf]
      %v3023 = vld [vmem:[%s3014 + $0x20] sm:$0xf]
      %v3024 = vld [vmem:[%s3014 + $0x24] sm:$0xf]
      %v3025 = vld [vmem:[%s3014 + $0x28] sm:$0xf]
      %v3026 = vld [vmem:[%s3014 + $0x2c] sm:$0xf]
      %v3027 = vld [vmem:[%s3014 + $0x30] sm:$0xf]
      %v3028 = vld [vmem:[%s3014 + $0x34] sm:$0xf]
      %v3029 = vld [vmem:[%s3014 + $0x38] sm:$0xf]
      %v3030 = vld [vmem:[%s3014 + $0x3c] sm:$0xf]
      %v3031 = vunpack.c.l.b16 %v2787
      %v3032 = vunpack.c.l.b16 %v2797
      %v3033 = vunpack.c.l.b16 %v2811
      %v3034 = vunpack.c.l.b16 %v2821
      %v3035 = vunpack.c.l.b16 %v2835
      %v3036 = vunpack.c.l.b16 %v2845
      %v3037 = vunpack.c.l.b16 %v2859
      %v3038 = vunpack.c.l.b16 %v2869
      %v3039 = vunpack.c.l.b16 %v2883
      %v3040 = vunpack.c.l.b16 %v2893
      %v3041 = vunpack.c.l.b16 %v2907
      %v3042 = vunpack.c.l.b16 %v2917
      %v3043 = vunpack.c.l.b16 %v2931
      %v3044 = vunpack.c.l.b16 %v2941
      %v3045 = vunpack.c.l.b16 %v2955
      %v3046 = vunpack.c.l.b16 %v2965
      %v3047 = vunpack.c.l.b16 %v2979
      %v3048 = vunpack.c.l.b16 %v2989
      %v3049 = vunpack.c.l.b16 %v3003
      %v3050 = vunpack.c.l.b16 %v3013
      %v3051 = vpack.c.b16 %v3032, %v3031
      %v3052 = vpack.c.b16 %v3034, %v3033
      %v3053 = vpack.c.b16 %v3036, %v3035
      %v3054 = vpack.c.b16 %v3038, %v3037
      %v3055 = vpack.c.b16 %v3040, %v3039
      %v3056 = vpack.c.b16 %v3042, %v3041
      %v3057 = vpack.c.b16 %v3044, %v3043
      %v3058 = vpack.c.b16 %v3046, %v3045
      %v3059 = vpack.c.b16 %v3048, %v3047
      %v3060 = vpack.c.b16 %v3050, %v3049
      %v3087 = vunpack.c.l.b16 %v3015
      %v3088 = vunpack.c.l.b16 %v3016
      %v3089 = vunpack.c.l.b16 %v3017
      %v3090 = vunpack.c.l.b16 %v3018
      %v3091 = vunpack.c.l.b16 %v3019
      %v3092 = vunpack.c.l.b16 %v3020
      %v3093 = vunpack.c.l.b16 %v3021
      %v3094 = vunpack.c.l.b16 %v3022
      %v3095 = vunpack.c.l.b16 %v3023
      %v3096 = vunpack.c.l.b16 %v3024
      %v3097 = vunpack.c.l.b16 %v3025
      %v3098 = vunpack.c.l.b16 %v3026
      %v3099 = vunpack.c.l.b16 %v3027
      %v3100 = vunpack.c.l.b16 %v3028
      %v3101 = vunpack.c.l.b16 %v3029
      %v3102 = vunpack.c.l.b16 %v3030
      %v3103 = vpack.c.b16 %v3088, %v3087
      %v3104 = vpack.c.b16 %v3090, %v3089
      %v3105 = vpack.c.b16 %v3092, %v3091
      %v3106 = vpack.c.b16 %v3094, %v3093
      %v3107 = vpack.c.b16 %v3096, %v3095
      %v3108 = vpack.c.b16 %v3098, %v3097
      %v3109 = vpack.c.b16 %v3100, %v3099
      %v3110 = vpack.c.b16 %v3102, %v3101
      %3119 = vmatprep.subr.bf16.mxu0 0
      %3120 = vmatpush1.bf16.msra.mxu0 %v3110
      %3121 = vmatprep.subr.bf16.mxu0 0
      %3122 = vmatpush1.bf16.msra.mxu0 %v3109
      %3123 = vmatprep.subr.bf16.mxu0 0
      %3124 = vmatpush1.bf16.msra.mxu0 %v3108
      %3125 = vmatprep.subr.bf16.mxu0 0
      %3126 = vmatpush1.bf16.msra.mxu0 %v3107
      %3127 = vmatprep.subr.bf16.mxu0 0
      %3128 = vmatpush1.bf16.msra.mxu0 %v3106
      %3129 = vmatprep.subr.bf16.mxu0 0
      %3130 = vmatpush1.bf16.msra.mxu0 %v3105
      %3131 = vmatprep.subr.bf16.mxu0 0
      %3132 = vmatpush1.bf16.msra.mxu0 %v3104
      %3133 = vmatprep.subr.bf16.mxu0 0
      %3134 = vmatpush1.bf16.msra.mxu0 %v3103
      %3135 = vmatprep.subr.bf16.mxu0 0
      %3136 = vmatpush2.bf16.msra.mxu0 0
      %3137 = vmatprep.subr.bf16.mxu0 0
      %3138 = vmatpush2.bf16.msra.mxu0 0
      %3139 = vmatprep.subr.bf16.mxu0 0
      %3140 = vmatpush2.bf16.msra.mxu0 0
      %3141 = vmatprep.subr.bf16.mxu0 0
      %3142 = vmatpush2.bf16.msra.mxu0 0
      %3143 = vmatprep.subr.bf16.mxu0 0
      %3144 = vmatpush2.bf16.msra.mxu0 0
      %3145 = vmatprep.subr.bf16.mxu0 0
      %3146 = vmatpush2.bf16.msra.mxu0 0
      %3147 = vmatprep.subr.bf16.mxu0 0
      %3148 = vmatpush2.bf16.msra.mxu0 0
      %3149 = vmatprep.subr.bf16.mxu0 0
      %3150 = vmatpush2.bf16.msra.mxu0 0
      %3151 = vmatprep.mubr.bf16.mxu0 0
      %3152 = vmatmul.mubr.bf16.gmra.mxu0 %v3051
      %v3153 = vpop.f32.mrf.mxu0
      %v3154 = vadd.f32 0.0, %v3153
      %v3155 = vpop.f32.mrf.mxu0
      %v3156 = vpop.f32.mrf.mxu0
      %v3157 = vadd.f32 0.0, %v3156
      %v3158 = vpop.f32.mrf.mxu0
      %3159 = vmatprep.mubr.bf16.mxu0 0
      %3160 = vmatmul.mubr.bf16.gmra.mxu0 %v3052
      %v3161 = vpop.f32.mrf.mxu0
      %v3162 = vadd.f32 0.0, %v3161
      %v3163 = vpop.f32.mrf.mxu0
      %v3164 = vpop.f32.mrf.mxu0
      %v3165 = vadd.f32 0.0, %v3164
      %v3166 = vpop.f32.mrf.mxu0
      %3167 = vmatprep.mubr.bf16.mxu0 0
      %3168 = vmatmul.mubr.bf16.gmra.mxu0 %v3053
      %v3169 = vpop.f32.mrf.mxu0
      %v3170 = vadd.f32 0.0, %v3169
      %v3171 = vpop.f32.mrf.mxu0
      %v3172 = vpop.f32.mrf.mxu0
      %v3173 = vadd.f32 0.0, %v3172
      %v3174 = vpop.f32.mrf.mxu0
      %3175 = vmatprep.mubr.bf16.mxu0 0
      %3176 = vmatmul.mubr.bf16.gmra.mxu0 %v3054
      %v3177 = vpop.f32.mrf.mxu0
      %v3178 = vadd.f32 0.0, %v3177
      %v3179 = vpop.f32.mrf.mxu0
      %v3180 = vpop.f32.mrf.mxu0
      %v3181 = vadd.f32 0.0, %v3180
      %v3182 = vpop.f32.mrf.mxu0
      %3183 = vmatprep.mubr.bf16.mxu0 0
      %3184 = vmatmul.mubr.bf16.gmra.mxu0 %v3055
      %v3185 = vpop.f32.mrf.mxu0
      %v3186 = vadd.f32 0.0, %v3185
      %v3187 = vpop.f32.mrf.mxu0
      %v3188 = vpop.f32.mrf.mxu0
      %v3189 = vadd.f32 0.0, %v3188
      %v3190 = vpop.f32.mrf.mxu0
      %3191 = vmatprep.mubr.bf16.mxu0 0
      %3192 = vmatmul.mubr.bf16.gmra.mxu0 %v3056
      %v3193 = vpop.f32.mrf.mxu0
      %v3194 = vadd.f32 0.0, %v3193
      %v3195 = vpop.f32.mrf.mxu0
      %v3196 = vpop.f32.mrf.mxu0
      %v3197 = vadd.f32 0.0, %v3196
      %v3198 = vpop.f32.mrf.mxu0
      %3199 = vmatprep.mubr.bf16.mxu0 0
      %3200 = vmatmul.mubr.bf16.gmra.mxu0 %v3057
      %v3201 = vpop.f32.mrf.mxu0
      %v3202 = vadd.f32 0.0, %v3201
      %v3203 = vpop.f32.mrf.mxu0
      %v3204 = vpop.f32.mrf.mxu0
      %v3205 = vadd.f32 0.0, %v3204
      %v3206 = vpop.f32.mrf.mxu0
      %3207 = vmatprep.mubr.bf16.mxu0 0
      %3208 = vmatmul.mubr.bf16.gmra.mxu0 %v3058
      %v3209 = vpop.f32.mrf.mxu0
      %v3210 = vadd.f32 0.0, %v3209
      %v3211 = vpop.f32.mrf.mxu0
      %v3212 = vpop.f32.mrf.mxu0
      %v3213 = vadd.f32 0.0, %v3212
      %v3214 = vpop.f32.mrf.mxu0
      %3215 = vmatprep.mubr.bf16.mxu0 0
      %3216 = vmatmul.mubr.bf16.gmra.mxu0 %v3059
      %v3217 = vpop.f32.mrf.mxu0
      %v3218 = vadd.f32 0.0, %v3217
      %v3219 = vpop.f32.mrf.mxu0
      %v3220 = vpop.f32.mrf.mxu0
      %v3221 = vadd.f32 0.0, %v3220
      %v3222 = vpop.f32.mrf.mxu0
      %3223 = vmatprep.mubr.bf16.mxu0 0
      %3224 = vmatmul.mubr.bf16.gmra.mxu0 %v3060
      %v3225 = vpop.f32.mrf.mxu0
      %v3226 = vadd.f32 0.0, %v3225
      %v3227 = vpop.f32.mrf.mxu0
      %v3228 = vpop.f32.mrf.mxu0
      %v3229 = vadd.f32 0.0, %v3228
      %v3230 = vpop.f32.mrf.mxu0
      %3231 = vdwg.mxu0
      %v3232 = vadd.f32 %v2724, %v3154
      %v3233 = vadd.f32 %v2725, %v3157
      %v3234 = vadd.f32 %v2726, %v3162
      %v3235 = vadd.f32 %v2727, %v3165
      %v3236 = vadd.f32 %v2728, %v3170
      %v3237 = vadd.f32 %v2729, %v3173
      %v3238 = vadd.f32 %v2730, %v3178
      %v3239 = vadd.f32 %v2731, %v3181
      %v3240 = vadd.f32 %v2732, %v3186
      %v3241 = vadd.f32 %v2733, %v3189
      %v3242 = vadd.f32 %v2734, %v3194
      %v3243 = vadd.f32 %v2735, %v3197
      %v3244 = vadd.f32 %v2736, %v3202
      %v3245 = vadd.f32 %v2737, %v3205
      %v3246 = vadd.f32 %v2738, %v3210
      %v3247 = vadd.f32 %v2739, %v3213
      %v3248 = vadd.f32 %v2740, %v3218
      %v3249 = vadd.f32 %v2741, %v3221
      %v3250 = vadd.f32 %v2742, %v3226
      %v3251 = vadd.f32 %v2743, %v3229
      %v3252 = vld [vmem:[%s2465] sm:$0xe]
      %v3253 = vld [vmem:[%s2465 + $0xc] sm:$0xe]
      %v3254 = vld [vmem:[%s2465 + $0x18] sm:$0xe]
      %v3255 = vld [vmem:[%s2465 + $0x24] sm:$0xe]
      %v3256 = vld [vmem:[%s2465 + $0x30] sm:$0xe]
      %v3257 = vld [vmem:[%s2465 + $0x3c] sm:$0xe]
      %v3258 = vld [vmem:[%s2465 + $0x48] sm:$0xe]
      %v3259 = vld [vmem:[%s2465 + $0x54] sm:$0xe]
      %v3260 = vld [vmem:[%s2465 + $0x60] sm:$0xe]
      %v3261 = vld [vmem:[%s2465 + $0x6c] sm:$0xe]
      %v3292 = vrot.slane %v3252, 5
      %v3293 = vrot.slane %v3292, 4
      %v3294 = vrot.slane %v2745, 5
      %v3295 = vsel %vm1015, %v3293, %v3294
      %v3296 = vrot.slane %v3294, 4
      %v3297 = vrot.slane %v2746, 5
      %v3298 = vsel %vm1015, %v3296, %v3297
      %v3299 = vrot.slane %v3253, 5
      %v3300 = vrot.slane %v3299, 4
      %v3301 = vrot.slane %v2748, 5
      %v3302 = vsel %vm1015, %v3300, %v3301
      %v3303 = vrot.slane %v3301, 4
      %v3304 = vrot.slane %v2749, 5
      %v3305 = vsel %vm1015, %v3303, %v3304
      %v3306 = vrot.slane %v3254, 5
      %v3307 = vrot.slane %v3306, 4
      %v3308 = vrot.slane %v2751, 5
      %v3309 = vsel %vm1015, %v3307, %v3308
      %v3310 = vrot.slane %v3308, 4
      %v3311 = vrot.slane %v2752, 5
      %v3312 = vsel %vm1015, %v3310, %v3311
      %v3313 = vrot.slane %v3255, 5
      %v3314 = vrot.slane %v3313, 4
      %v3315 = vrot.slane %v2754, 5
      %v3316 = vsel %vm1015, %v3314, %v3315
      %v3317 = vrot.slane %v3315, 4
      %v3318 = vrot.slane %v2755, 5
      %v3319 = vsel %vm1015, %v3317, %v3318
      %v3320 = vrot.slane %v3256, 5
      %v3321 = vrot.slane %v3320, 4
      %v3322 = vrot.slane %v2757, 5
      %v3323 = vsel %vm1015, %v3321, %v3322
      %v3324 = vrot.slane %v3322, 4
      %v3325 = vrot.slane %v2758, 5
      %v3326 = vsel %vm1015, %v3324, %v3325
      %v3327 = vrot.slane %v3257, 5
      %v3328 = vrot.slane %v3327, 4
      %v3329 = vrot.slane %v2760, 5
      %v3330 = vsel %vm1015, %v3328, %v3329
      %v3331 = vrot.slane %v3329, 4
      %v3332 = vrot.slane %v2761, 5
      %v3333 = vsel %vm1015, %v3331, %v3332
      %v3334 = vrot.slane %v3258, 5
      %v3335 = vrot.slane %v3334, 4
      %v3336 = vrot.slane %v2763, 5
      %v3337 = vsel %vm1015, %v3335, %v3336
      %v3338 = vrot.slane %v3336, 4
      %v3339 = vrot.slane %v2764, 5
      %v3340 = vsel %vm1015, %v3338, %v3339
      %v3341 = vrot.slane %v3259, 5
      %v3342 = vrot.slane %v3341, 4
      %v3343 = vrot.slane %v2766, 5
      %v3344 = vsel %vm1015, %v3342, %v3343
      %v3345 = vrot.slane %v3343, 4
      %v3346 = vrot.slane %v2767, 5
      %v3347 = vsel %vm1015, %v3345, %v3346
      %v3348 = vrot.slane %v3260, 5
      %v3349 = vrot.slane %v3348, 4
      %v3350 = vrot.slane %v2769, 5
      %v3351 = vsel %vm1015, %v3349, %v3350
      %v3352 = vrot.slane %v3350, 4
      %v3353 = vrot.slane %v2770, 5
      %v3354 = vsel %vm1015, %v3352, %v3353
      %v3355 = vrot.slane %v3261, 5
      %v3356 = vrot.slane %v3355, 4
      %v3357 = vrot.slane %v2772, 5
      %v3358 = vsel %vm1015, %v3356, %v3357
      %v3359 = vrot.slane %v3357, 4
      %v3360 = vrot.slane %v2773, 5
      %v3361 = vsel %vm1015, %v3359, %v3360
      %s3362 = scalar_lea.vmem %s1, 512
      %v3363 = vld [vmem:[%s3362] sm:$0xf]
      %v3364 = vld [vmem:[%s3362 + $0x4] sm:$0xf]
      %v3365 = vld [vmem:[%s3362 + $0x8] sm:$0xf]
      %v3366 = vld [vmem:[%s3362 + $0xc] sm:$0xf]
      %v3367 = vld [vmem:[%s3362 + $0x10] sm:$0xf]
      %v3368 = vld [vmem:[%s3362 + $0x14] sm:$0xf]
      %v3369 = vld [vmem:[%s3362 + $0x18] sm:$0xf]
      %v3370 = vld [vmem:[%s3362 + $0x1c] sm:$0xf]
      %v3371 = vld [vmem:[%s3362 + $0x20] sm:$0xf]
      %v3372 = vld [vmem:[%s3362 + $0x24] sm:$0xf]
      %v3373 = vld [vmem:[%s3362 + $0x28] sm:$0xf]
      %v3374 = vld [vmem:[%s3362 + $0x2c] sm:$0xf]
      %v3375 = vld [vmem:[%s3362 + $0x30] sm:$0xf]
      %v3376 = vld [vmem:[%s3362 + $0x34] sm:$0xf]
      %v3377 = vld [vmem:[%s3362 + $0x38] sm:$0xf]
      %v3378 = vld [vmem:[%s3362 + $0x3c] sm:$0xf]
      %v3379 = vunpack.c.l.b16 %v3295
      %v3380 = vunpack.c.l.b16 %v3298
      %v3381 = vunpack.c.l.b16 %v3302
      %v3382 = vunpack.c.l.b16 %v3305
      %v3383 = vunpack.c.l.b16 %v3309
      %v3384 = vunpack.c.l.b16 %v3312
      %v3385 = vunpack.c.l.b16 %v3316
      %v3386 = vunpack.c.l.b16 %v3319
      %v3387 = vunpack.c.l.b16 %v3323
      %v3388 = vunpack.c.l.b16 %v3326
      %v3389 = vunpack.c.l.b16 %v3330
      %v3390 = vunpack.c.l.b16 %v3333
      %v3391 = vunpack.c.l.b16 %v3337
      %v3392 = vunpack.c.l.b16 %v3340
      %v3393 = vunpack.c.l.b16 %v3344
      %v3394 = vunpack.c.l.b16 %v3347
      %v3395 = vunpack.c.l.b16 %v3351
      %v3396 = vunpack.c.l.b16 %v3354
      %v3397 = vunpack.c.l.b16 %v3358
      %v3398 = vunpack.c.l.b16 %v3361
      %v3399 = vpack.c.b16 %v3380, %v3379
      %v3400 = vpack.c.b16 %v3382, %v3381
      %v3401 = vpack.c.b16 %v3384, %v3383
      %v3402 = vpack.c.b16 %v3386, %v3385
      %v3403 = vpack.c.b16 %v3388, %v3387
      %v3404 = vpack.c.b16 %v3390, %v3389
      %v3405 = vpack.c.b16 %v3392, %v3391
      %v3406 = vpack.c.b16 %v3394, %v3393
      %v3407 = vpack.c.b16 %v3396, %v3395
      %v3408 = vpack.c.b16 %v3398, %v3397
      %v3435 = vunpack.c.l.b16 %v3363
      %v3436 = vunpack.c.l.b16 %v3364
      %v3437 = vunpack.c.l.b16 %v3365
      %v3438 = vunpack.c.l.b16 %v3366
      %v3439 = vunpack.c.l.b16 %v3367
      %v3440 = vunpack.c.l.b16 %v3368
      %v3441 = vunpack.c.l.b16 %v3369
      %v3442 = vunpack.c.l.b16 %v3370
      %v3443 = vunpack.c.l.b16 %v3371
      %v3444 = vunpack.c.l.b16 %v3372
      %v3445 = vunpack.c.l.b16 %v3373
      %v3446 = vunpack.c.l.b16 %v3374
      %v3447 = vunpack.c.l.b16 %v3375
      %v3448 = vunpack.c.l.b16 %v3376
      %v3449 = vunpack.c.l.b16 %v3377
      %v3450 = vunpack.c.l.b16 %v3378
      %v3451 = vpack.c.b16 %v3436, %v3435
      %v3452 = vpack.c.b16 %v3438, %v3437
      %v3453 = vpack.c.b16 %v3440, %v3439
      %v3454 = vpack.c.b16 %v3442, %v3441
      %v3455 = vpack.c.b16 %v3444, %v3443
      %v3456 = vpack.c.b16 %v3446, %v3445
      %v3457 = vpack.c.b16 %v3448, %v3447
      %v3458 = vpack.c.b16 %v3450, %v3449
      %3467 = vmatprep.subr.bf16.mxu0 0
      %3468 = vmatpush1.bf16.msra.mxu0 %v3458
      %3469 = vmatprep.subr.bf16.mxu0 0
      %3470 = vmatpush1.bf16.msra.mxu0 %v3457
      %3471 = vmatprep.subr.bf16.mxu0 0
      %3472 = vmatpush1.bf16.msra.mxu0 %v3456
      %3473 = vmatprep.subr.bf16.mxu0 0
      %3474 = vmatpush1.bf16.msra.mxu0 %v3455
      %3475 = vmatprep.subr.bf16.mxu0 0
      %3476 = vmatpush1.bf16.msra.mxu0 %v3454
      %3477 = vmatprep.subr.bf16.mxu0 0
      %3478 = vmatpush1.bf16.msra.mxu0 %v3453
      %3479 = vmatprep.subr.bf16.mxu0 0
      %3480 = vmatpush1.bf16.msra.mxu0 %v3452
      %3481 = vmatprep.subr.bf16.mxu0 0
      %3482 = vmatpush1.bf16.msra.mxu0 %v3451
      %3483 = vmatprep.subr.bf16.mxu0 0
      %3484 = vmatpush2.bf16.msra.mxu0 0
      %3485 = vmatprep.subr.bf16.mxu0 0
      %3486 = vmatpush2.bf16.msra.mxu0 0
      %3487 = vmatprep.subr.bf16.mxu0 0
      %3488 = vmatpush2.bf16.msra.mxu0 0
      %3489 = vmatprep.subr.bf16.mxu0 0
      %3490 = vmatpush2.bf16.msra.mxu0 0
      %3491 = vmatprep.subr.bf16.mxu0 0
      %3492 = vmatpush2.bf16.msra.mxu0 0
      %3493 = vmatprep.subr.bf16.mxu0 0
      %3494 = vmatpush2.bf16.msra.mxu0 0
      %3495 = vmatprep.subr.bf16.mxu0 0
      %3496 = vmatpush2.bf16.msra.mxu0 0
      %3497 = vmatprep.subr.bf16.mxu0 0
      %3498 = vmatpush2.bf16.msra.mxu0 0
      %3499 = vmatprep.mubr.bf16.mxu0 0
      %3500 = vmatmul.mubr.bf16.gmra.mxu0 %v3399
      %v3501 = vpop.f32.mrf.mxu0
      %v3502 = vadd.f32 0.0, %v3501
      %v3503 = vpop.f32.mrf.mxu0
      %v3504 = vpop.f32.mrf.mxu0
      %v3505 = vadd.f32 0.0, %v3504
      %v3506 = vpop.f32.mrf.mxu0
      %3507 = vmatprep.mubr.bf16.mxu0 0
      %3508 = vmatmul.mubr.bf16.gmra.mxu0 %v3400
      %v3509 = vpop.f32.mrf.mxu0
      %v3510 = vadd.f32 0.0, %v3509
      %v3511 = vpop.f32.mrf.mxu0
      %v3512 = vpop.f32.mrf.mxu0
      %v3513 = vadd.f32 0.0, %v3512
      %v3514 = vpop.f32.mrf.mxu0
      %3515 = vmatprep.mubr.bf16.mxu0 0
      %3516 = vmatmul.mubr.bf16.gmra.mxu0 %v3401
      %v3517 = vpop.f32.mrf.mxu0
      %v3518 = vadd.f32 0.0, %v3517
      %v3519 = vpop.f32.mrf.mxu0
      %v3520 = vpop.f32.mrf.mxu0
      %v3521 = vadd.f32 0.0, %v3520
      %v3522 = vpop.f32.mrf.mxu0
      %3523 = vmatprep.mubr.bf16.mxu0 0
      %3524 = vmatmul.mubr.bf16.gmra.mxu0 %v3402
      %v3525 = vpop.f32.mrf.mxu0
      %v3526 = vadd.f32 0.0, %v3525
      %v3527 = vpop.f32.mrf.mxu0
      %v3528 = vpop.f32.mrf.mxu0
      %v3529 = vadd.f32 0.0, %v3528
      %v3530 = vpop.f32.mrf.mxu0
      %3531 = vmatprep.mubr.bf16.mxu0 0
      %3532 = vmatmul.mubr.bf16.gmra.mxu0 %v3403
      %v3533 = vpop.f32.mrf.mxu0
      %v3534 = vadd.f32 0.0, %v3533
      %v3535 = vpop.f32.mrf.mxu0
      %v3536 = vpop.f32.mrf.mxu0
      %v3537 = vadd.f32 0.0, %v3536
      %v3538 = vpop.f32.mrf.mxu0
      %3539 = vmatprep.mubr.bf16.mxu0 0
      %3540 = vmatmul.mubr.bf16.gmra.mxu0 %v3404
      %v3541 = vpop.f32.mrf.mxu0
      %v3542 = vadd.f32 0.0, %v3541
      %v3543 = vpop.f32.mrf.mxu0
      %v3544 = vpop.f32.mrf.mxu0
      %v3545 = vadd.f32 0.0, %v3544
      %v3546 = vpop.f32.mrf.mxu0
      %3547 = vmatprep.mubr.bf16.mxu0 0
      %3548 = vmatmul.mubr.bf16.gmra.mxu0 %v3405
      %v3549 = vpop.f32.mrf.mxu0
      %v3550 = vadd.f32 0.0, %v3549
      %v3551 = vpop.f32.mrf.mxu0
      %v3552 = vpop.f32.mrf.mxu0
      %v3553 = vadd.f32 0.0, %v3552
      %v3554 = vpop.f32.mrf.mxu0
      %3555 = vmatprep.mubr.bf16.mxu0 0
      %3556 = vmatmul.mubr.bf16.gmra.mxu0 %v3406
      %v3557 = vpop.f32.mrf.mxu0
      %v3558 = vadd.f32 0.0, %v3557
      %v3559 = vpop.f32.mrf.mxu0
      %v3560 = vpop.f32.mrf.mxu0
      %v3561 = vadd.f32 0.0, %v3560
      %v3562 = vpop.f32.mrf.mxu0
      %3563 = vmatprep.mubr.bf16.mxu0 0
      %3564 = vmatmul.mubr.bf16.gmra.mxu0 %v3407
      %v3565 = vpop.f32.mrf.mxu0
      %v3566 = vadd.f32 0.0, %v3565
      %v3567 = vpop.f32.mrf.mxu0
      %v3568 = vpop.f32.mrf.mxu0
      %v3569 = vadd.f32 0.0, %v3568
      %v3570 = vpop.f32.mrf.mxu0
      %3571 = vmatprep.mubr.bf16.mxu0 0
      %3572 = vmatmul.mubr.bf16.gmra.mxu0 %v3408
      %v3573 = vpop.f32.mrf.mxu0
      %v3574 = vadd.f32 0.0, %v3573
      %v3575 = vpop.f32.mrf.mxu0
      %v3576 = vpop.f32.mrf.mxu0
      %v3577 = vadd.f32 0.0, %v3576
      %v3578 = vpop.f32.mrf.mxu0
      %3579 = vdwg.mxu0
      %v3580 = vadd.f32 %v3232, %v3502
      %v3581 = vadd.f32 %v3233, %v3505
      %v3582 = vadd.f32 %v3234, %v3510
      %v3583 = vadd.f32 %v3235, %v3513
      %v3584 = vadd.f32 %v3236, %v3518
      %v3585 = vadd.f32 %v3237, %v3521
      %v3586 = vadd.f32 %v3238, %v3526
      %v3587 = vadd.f32 %v3239, %v3529
      %v3588 = vadd.f32 %v3240, %v3534
      %v3589 = vadd.f32 %v3241, %v3537
      %v3590 = vadd.f32 %v3242, %v3542
      %v3591 = vadd.f32 %v3243, %v3545
      %v3592 = vadd.f32 %v3244, %v3550
      %v3593 = vadd.f32 %v3245, %v3553
      %v3594 = vadd.f32 %v3246, %v3558
      %v3595 = vadd.f32 %v3247, %v3561
      %v3596 = vadd.f32 %v3248, %v3566
      %v3597 = vadd.f32 %v3249, %v3569
      %v3598 = vadd.f32 %v3250, %v3574
      %v3599 = vadd.f32 %v3251, %v3577
      %v3600 = vld [vmem:[%s2] sm:$0x1]
      %v3602 = vlaneseq
      %v3603 = vshrl.u32 %v3602, 7
      %v3604 = vsub.s32 0, %v3603
      %v3605 = vrot.slane %v3600, %v3604
      %v3607 = vadd.f32 %v3580, %v3605
      %v3608 = vadd.f32 %v3581, %v3605
      %v3609 = vadd.f32 %v3582, %v3605
      %v3610 = vadd.f32 %v3583, %v3605
      %v3611 = vadd.f32 %v3584, %v3605
      %v3612 = vadd.f32 %v3585, %v3605
      %v3613 = vadd.f32 %v3586, %v3605
      %v3614 = vadd.f32 %v3587, %v3605
      %v3615 = vadd.f32 %v3588, %v3605
      %v3616 = vadd.f32 %v3589, %v3605
      %v3617 = vadd.f32 %v3590, %v3605
      %v3618 = vadd.f32 %v3591, %v3605
      %v3619 = vadd.f32 %v3592, %v3605
      %v3620 = vadd.f32 %v3593, %v3605
      %v3621 = vadd.f32 %v3594, %v3605
      %v3622 = vadd.f32 %v3595, %v3605
      %v3623 = vadd.f32 %v3596, %v3605
      %v3624 = vadd.f32 %v3597, %v3605
      %v3625 = vadd.f32 %v3598, %v3605
      %v3626 = vadd.f32 %v3599, %v3605
      %v3627 = vmax.f32 %v3607, 0.0
      %v3628 = vmax.f32 %v3608, 0.0
      %v3629 = vmax.f32 %v3609, 0.0
      %v3630 = vmax.f32 %v3610, 0.0
      %v3631 = vmax.f32 %v3611, 0.0
      %v3632 = vmax.f32 %v3612, 0.0
      %v3633 = vmax.f32 %v3613, 0.0
      %v3634 = vmax.f32 %v3614, 0.0
      %v3635 = vmax.f32 %v3615, 0.0
      %v3636 = vmax.f32 %v3616, 0.0
      %v3637 = vmax.f32 %v3617, 0.0
      %v3638 = vmax.f32 %v3618, 0.0
      %v3639 = vmax.f32 %v3619, 0.0
      %v3640 = vmax.f32 %v3620, 0.0
      %v3641 = vmax.f32 %v3621, 0.0
      %v3642 = vmax.f32 %v3622, 0.0
      %v3643 = vmax.f32 %v3623, 0.0
      %v3644 = vmax.f32 %v3624, 0.0
      %v3645 = vmax.f32 %v3625, 0.0
      %v3646 = vmax.f32 %v3626, 0.0
      %v3647 = vpack.c.bf16 %v3628, %v3627
      %v3648 = vpack.c.bf16 %v3630, %v3629
      %v3649 = vpack.c.bf16 %v3632, %v3631
      %v3650 = vpack.c.bf16 %v3634, %v3633
      %v3651 = vpack.c.bf16 %v3636, %v3635
      %v3652 = vpack.c.bf16 %v3638, %v3637
      %v3653 = vpack.c.bf16 %v3640, %v3639
      %v3654 = vpack.c.bf16 %v3642, %v3641
      %v3655 = vpack.c.bf16 %v3644, %v3643
      %v3656 = vpack.c.bf16 %v3646, %v3645
      %v3667 = vunpack.c.l.b16 %v3647
      %v3668 = vunpack.c.h.b16 %v3647
      %v3669 = vunpack.c.l.b16 %v3648
      %v3670 = vunpack.c.h.b16 %v3648
      %v3671 = vunpack.c.l.b16 %v3649
      %v3672 = vunpack.c.h.b16 %v3649
      %v3673 = vunpack.c.l.b16 %v3650
      %v3674 = vunpack.c.h.b16 %v3650
      %v3675 = vunpack.c.l.b16 %v3651
      %v3676 = vunpack.c.h.b16 %v3651
      %v3677 = vunpack.c.l.b16 %v3652
      %v3678 = vunpack.c.h.b16 %v3652
      %v3679 = vunpack.c.l.b16 %v3653
      %v3680 = vunpack.c.h.b16 %v3653
      %v3681 = vunpack.c.l.b16 %v3654
      %v3682 = vunpack.c.h.b16 %v3654
      %v3683 = vunpack.c.l.b16 %v3655
      %v3684 = vunpack.c.h.b16 %v3655
      %v3685 = vunpack.c.l.b16 %v3656
      %v3686 = vunpack.c.h.b16 %v3656
      %v3687 = vpack.c.b16 %v3667, %v3667
      %v3688 = vpack.c.b16 %v3668, %v3668
      %v3689 = vpack.c.b16 %v3669, %v3669
      %v3690 = vpack.c.b16 %v3670, %v3670
      %v3691 = vpack.c.b16 %v3671, %v3671
      %v3692 = vpack.c.b16 %v3672, %v3672
      %v3693 = vpack.c.b16 %v3673, %v3673
      %v3694 = vpack.c.b16 %v3674, %v3674
      %v3695 = vpack.c.b16 %v3675, %v3675
      %v3696 = vpack.c.b16 %v3676, %v3676
      %v3697 = vpack.c.b16 %v3677, %v3677
      %v3698 = vpack.c.b16 %v3678, %v3678
      %v3699 = vpack.c.b16 %v3679, %v3679
      %v3700 = vpack.c.b16 %v3680, %v3680
      %v3701 = vpack.c.b16 %v3681, %v3681
      %v3702 = vpack.c.b16 %v3682, %v3682
      %v3703 = vpack.c.b16 %v3683, %v3683
      %v3704 = vpack.c.b16 %v3684, %v3684
      %v3705 = vpack.c.b16 %v3685, %v3685
      %v3706 = vpack.c.b16 %v3686, %v3686
      %vm3707 = vsmask.f32 256
      %vm3708 = vsmask.f32 4368
      %vm3709 = vmor %vm3707, %vm3708
      %v3711 = vshrl.u32 %v3687, 16
      %v3713 = vrot.slane %v3711, 7
      %v3714 = vshll.u32 %v3687, 16
      %v3716 = vor.u32 %v3713, %v3714
      %v3717 = vrot.slane %v3713, 4
      %v3719 = vshrl.u32 %v3688, 16
      %v3721 = vrot.slane %v3719, 7
      %v3722 = vshll.u32 %v3688, 16
      %v3724 = vor.u32 %v3721, %v3722
      %v3725 = vsel %vm3709, %v3717, %v3724
      %v3726 = vrot.slane %v3721, 4
      %v3728 = vshrl.u32 %v3689, 16
      %v3730 = vrot.slane %v3728, 7
      %v3731 = vshll.u32 %v3689, 16
      %v3733 = vor.u32 %v3730, %v3731
      %v3734 = vrot.slane %v3730, 4
      %v3736 = vshrl.u32 %v3690, 16
      %v3738 = vrot.slane %v3736, 7
      %v3739 = vshll.u32 %v3690, 16
      %v3741 = vor.u32 %v3738, %v3739
      %v3742 = vsel %vm3709, %v3734, %v3741
      %v3743 = vrot.slane %v3738, 4
      %v3745 = vshrl.u32 %v3691, 16
      %v3747 = vrot.slane %v3745, 7
      %v3748 = vshll.u32 %v3691, 16
      %v3750 = vor.u32 %v3747, %v3748
      %v3751 = vrot.slane %v3747, 4
      %v3753 = vshrl.u32 %v3692, 16
      %v3755 = vrot.slane %v3753, 7
      %v3756 = vshll.u32 %v3692, 16
      %v3758 = vor.u32 %v3755, %v3756
      %v3759 = vsel %vm3709, %v3751, %v3758
      %v3760 = vrot.slane %v3755, 4
      %v3762 = vshrl.u32 %v3693, 16
      %v3764 = vrot.slane %v3762, 7
      %v3765 = vshll.u32 %v3693, 16
      %v3767 = vor.u32 %v3764, %v3765
      %v3768 = vrot.slane %v3764, 4
      %v3770 = vshrl.u32 %v3694, 16
      %v3772 = vrot.slane %v3770, 7
      %v3773 = vshll.u32 %v3694, 16
      %v3775 = vor.u32 %v3772, %v3773
      %v3776 = vsel %vm3709, %v3768, %v3775
      %v3777 = vrot.slane %v3772, 4
      %v3779 = vshrl.u32 %v3695, 16
      %v3781 = vrot.slane %v3779, 7
      %v3782 = vshll.u32 %v3695, 16
      %v3784 = vor.u32 %v3781, %v3782
      %v3785 = vrot.slane %v3781, 4
      %v3787 = vshrl.u32 %v3696, 16
      %v3789 = vrot.slane %v3787, 7
      %v3790 = vshll.u32 %v3696, 16
      %v3792 = vor.u32 %v3789, %v3790
      %v3793 = vsel %vm3709, %v3785, %v3792
      %v3794 = vrot.slane %v3789, 4
      %v3796 = vshrl.u32 %v3697, 16
      %v3798 = vrot.slane %v3796, 7
      %v3799 = vshll.u32 %v3697, 16
      %v3801 = vor.u32 %v3798, %v3799
      %v3802 = vrot.slane %v3798, 4
      %v3804 = vshrl.u32 %v3698, 16
      %v3806 = vrot.slane %v3804, 7
      %v3807 = vshll.u32 %v3698, 16
      %v3809 = vor.u32 %v3806, %v3807
      %v3810 = vsel %vm3709, %v3802, %v3809
      %v3811 = vrot.slane %v3806, 4
      %v3813 = vshrl.u32 %v3699, 16
      %v3815 = vrot.slane %v3813, 7
      %v3816 = vshll.u32 %v3699, 16
      %v3818 = vor.u32 %v3815, %v3816
      %v3819 = vrot.slane %v3815, 4
      %v3821 = vshrl.u32 %v3700, 16
      %v3823 = vrot.slane %v3821, 7
      %v3824 = vshll.u32 %v3700, 16
      %v3826 = vor.u32 %v3823, %v3824
      %v3827 = vsel %vm3709, %v3819, %v3826
      %v3828 = vrot.slane %v3823, 4
      %v3830 = vshrl.u32 %v3701, 16
      %v3832 = vrot.slane %v3830, 7
      %v3833 = vshll.u32 %v3701, 16
      %v3835 = vor.u32 %v3832, %v3833
      %v3836 = vrot.slane %v3832, 4
      %v3838 = vshrl.u32 %v3702, 16
      %v3840 = vrot.slane %v3838, 7
      %v3841 = vshll.u32 %v3702, 16
      %v3843 = vor.u32 %v3840, %v3841
      %v3844 = vsel %vm3709, %v3836, %v3843
      %v3845 = vrot.slane %v3840, 4
      %v3847 = vshrl.u32 %v3703, 16
      %v3849 = vrot.slane %v3847, 7
      %v3850 = vshll.u32 %v3703, 16
      %v3852 = vor.u32 %v3849, %v3850
      %v3853 = vrot.slane %v3849, 4
      %v3855 = vshrl.u32 %v3704, 16
      %v3857 = vrot.slane %v3855, 7
      %v3858 = vshll.u32 %v3704, 16
      %v3860 = vor.u32 %v3857, %v3858
      %v3861 = vsel %vm3709, %v3853, %v3860
      %v3862 = vrot.slane %v3857, 4
      %v3864 = vshrl.u32 %v3705, 16
      %v3866 = vrot.slane %v3864, 7
      %v3867 = vshll.u32 %v3705, 16
      %v3869 = vor.u32 %v3866, %v3867
      %v3870 = vrot.slane %v3866, 4
      %v3872 = vshrl.u32 %v3706, 16
      %v3874 = vrot.slane %v3872, 7
      %v3875 = vshll.u32 %v3706, 16
      %v3877 = vor.u32 %v3874, %v3875
      %v3878 = vsel %vm3709, %v3870, %v3877
      %v3879 = vrot.slane %v3874, 4
      %vm3910 = vcmask 1043456
      %vm3911 = vsmask.f32 7938
      %vm3912 = vmand %vm3910, %vm3911
      %v3913 = vld [vmem:[#allocation2] sm:$0xf]
      %v3914 = vsel %vm3912, %v3716, %v3913
      %3915 = vst [vmem:[#allocation2] sm:$0xf] %v3914
      %3916 = vst [vmem:[#allocation2 + $0x4] sm:$0xf] %v3725
      %vm3917 = vcmask 1040384
      %vm3918 = vmand %vm3917, %vm3707
      %v3919 = vld [vmem:[#allocation2 + $0x8] sm:$0x1]
      %v3920 = vsel %vm3918, %v3726, %v3919
      %3921 = vst [vmem:[#allocation2 + $0x8] sm:$0x1] %v3920
      %v3922 = vld [vmem:[#allocation2 + $0xc] sm:$0xf]
      %v3923 = vsel %vm3912, %v3733, %v3922
      %3924 = vst [vmem:[#allocation2 + $0xc] sm:$0xf] %v3923
      %3925 = vst [vmem:[#allocation2 + $0x10] sm:$0xf] %v3742
      %v3926 = vld [vmem:[#allocation2 + $0x14] sm:$0x1]
      %v3927 = vsel %vm3918, %v3743, %v3926
      %3928 = vst [vmem:[#allocation2 + $0x14] sm:$0x1] %v3927
      %v3929 = vld [vmem:[#allocation2 + $0x18] sm:$0xf]
      %v3930 = vsel %vm3912, %v3750, %v3929
      %3931 = vst [vmem:[#allocation2 + $0x18] sm:$0xf] %v3930
      %3932 = vst [vmem:[#allocation2 + $0x1c] sm:$0xf] %v3759
      %v3933 = vld [vmem:[#allocation2 + $0x20] sm:$0x1]
      %v3934 = vsel %vm3918, %v3760, %v3933
      %3935 = vst [vmem:[#allocation2 + $0x20] sm:$0x1] %v3934
      %v3936 = vld [vmem:[#allocation2 + $0x24] sm:$0xf]
      %v3937 = vsel %vm3912, %v3767, %v3936
      %3938 = vst [vmem:[#allocation2 + $0x24] sm:$0xf] %v3937
      %3939 = vst [vmem:[#allocation2 + $0x28] sm:$0xf] %v3776
      %v3940 = vld [vmem:[#allocation2 + $0x2c] sm:$0x1]
      %v3941 = vsel %vm3918, %v3777, %v3940
      %3942 = vst [vmem:[#allocation2 + $0x2c] sm:$0x1] %v3941
      %v3943 = vld [vmem:[#allocation2 + $0x30] sm:$0xf]
      %v3944 = vsel %vm3912, %v3784, %v3943
      %3945 = vst [vmem:[#allocation2 + $0x30] sm:$0xf] %v3944
      %3946 = vst [vmem:[#allocation2 + $0x34] sm:$0xf] %v3793
      %v3947 = vld [vmem:[#allocation2 + $0x38] sm:$0x1]
      %v3948 = vsel %vm3918, %v3794, %v3947
      %3949 = vst [vmem:[#allocation2 + $0x38] sm:$0x1] %v3948
      %v3950 = vld [vmem:[#allocation2 + $0x3c] sm:$0xf]
      %v3951 = vsel %vm3912, %v3801, %v3950
      %3952 = vst [vmem:[#allocation2 + $0x3c] sm:$0xf] %v3951
      %3953 = vst [vmem:[#allocation2 + $0x40] sm:$0xf] %v3810
      %v3954 = vld [vmem:[#allocation2 + $0x44] sm:$0x1]
      %v3955 = vsel %vm3918, %v3811, %v3954
      %3956 = vst [vmem:[#allocation2 + $0x44] sm:$0x1] %v3955
      %v3957 = vld [vmem:[#allocation2 + $0x48] sm:$0xf]
      %v3958 = vsel %vm3912, %v3818, %v3957
      %3959 = vst [vmem:[#allocation2 + $0x48] sm:$0xf] %v3958
      %3960 = vst [vmem:[#allocation2 + $0x4c] sm:$0xf] %v3827
      %v3961 = vld [vmem:[#allocation2 + $0x50] sm:$0x1]
      %v3962 = vsel %vm3918, %v3828, %v3961
      %3963 = vst [vmem:[#allocation2 + $0x50] sm:$0x1] %v3962
      %v3964 = vld [vmem:[#allocation2 + $0x54] sm:$0xf]
      %v3965 = vsel %vm3912, %v3835, %v3964
      %3966 = vst [vmem:[#allocation2 + $0x54] sm:$0xf] %v3965
      %3967 = vst [vmem:[#allocation2 + $0x58] sm:$0xf] %v3844
      %v3968 = vld [vmem:[#allocation2 + $0x5c] sm:$0x1]
      %v3969 = vsel %vm3918, %v3845, %v3968
      %3970 = vst [vmem:[#allocation2 + $0x5c] sm:$0x1] %v3969
      %v3971 = vld [vmem:[#allocation2 + $0x60] sm:$0xf]
      %v3972 = vsel %vm3912, %v3852, %v3971
      %3973 = vst [vmem:[#allocation2 + $0x60] sm:$0xf] %v3972
      %3974 = vst [vmem:[#allocation2 + $0x64] sm:$0xf] %v3861
      %v3975 = vld [vmem:[#allocation2 + $0x68] sm:$0x1]
      %v3976 = vsel %vm3918, %v3862, %v3975
      %3977 = vst [vmem:[#allocation2 + $0x68] sm:$0x1] %v3976
      %v3978 = vld [vmem:[#allocation2 + $0x6c] sm:$0xf]
      %v3979 = vsel %vm3912, %v3869, %v3978
      %3980 = vst [vmem:[#allocation2 + $0x6c] sm:$0xf] %v3979
      %3981 = vst [vmem:[#allocation2 + $0x70] sm:$0xf] %v3878
      %v3982 = vld [vmem:[#allocation2 + $0x74] sm:$0x1]
      %v3983 = vsel %vm3918, %v3879, %v3982
      %3984 = vst [vmem:[#allocation2 + $0x74] sm:$0x1] %v3983
      %v3985 = vld [vmem:[#allocation2] sm:$0x1]
      %v3986 = vsel %vm3918, 0, %v3985
      %3987 = vst [vmem:[#allocation2] sm:$0x1] %v3986
      %v3988 = vld [vmem:[#allocation2 + $0xc] sm:$0x1]
      %v3989 = vsel %vm3918, 0, %v3988
      %3990 = vst [vmem:[#allocation2 + $0xc] sm:$0x1] %v3989
      %v3991 = vld [vmem:[#allocation2 + $0x18] sm:$0x1]
      %v3992 = vsel %vm3918, 0, %v3991
      %3993 = vst [vmem:[#allocation2 + $0x18] sm:$0x1] %v3992
      %v3994 = vld [vmem:[#allocation2 + $0x24] sm:$0x1]
      %v3995 = vsel %vm3918, 0, %v3994
      %3996 = vst [vmem:[#allocation2 + $0x24] sm:$0x1] %v3995
      %v3997 = vld [vmem:[#allocation2 + $0x30] sm:$0x1]
      %v3998 = vsel %vm3918, 0, %v3997
      %3999 = vst [vmem:[#allocation2 + $0x30] sm:$0x1] %v3998
      %v4000 = vld [vmem:[#allocation2 + $0x3c] sm:$0x1]
      %v4001 = vsel %vm3918, 0, %v4000
      %4002 = vst [vmem:[#allocation2 + $0x3c] sm:$0x1] %v4001
      %v4003 = vld [vmem:[#allocation2 + $0x48] sm:$0x1]
      %v4004 = vsel %vm3918, 0, %v4003
      %4005 = vst [vmem:[#allocation2 + $0x48] sm:$0x1] %v4004
      %v4006 = vld [vmem:[#allocation2 + $0x54] sm:$0x1]
      %v4007 = vsel %vm3918, 0, %v4006
      %4008 = vst [vmem:[#allocation2 + $0x54] sm:$0x1] %v4007
      %v4009 = vld [vmem:[#allocation2 + $0x60] sm:$0x1]
      %v4010 = vsel %vm3918, 0, %v4009
      %4011 = vst [vmem:[#allocation2 + $0x60] sm:$0x1] %v4010
      %v4012 = vld [vmem:[#allocation2 + $0x6c] sm:$0x1]
      %v4013 = vsel %vm3918, 0, %v4012
      %4014 = vst [vmem:[#allocation2 + $0x6c] sm:$0x1] %v4013
      %vm4015 = vmand %vm3917, %vm3911
      %v4016 = vld [vmem:[#allocation2 + $0x8] sm:$0x1]
      %v4017 = vsel %vm4015, 0, %v4016
      %4018 = vst [vmem:[#allocation2 + $0x8] sm:$0x1] %v4017
      %v4019 = vld [vmem:[#allocation2 + $0x14] sm:$0x1]
      %v4020 = vsel %vm4015, 0, %v4019
      %4021 = vst [vmem:[#allocation2 + $0x14] sm:$0x1] %v4020
      %v4022 = vld [vmem:[#allocation2 + $0x20] sm:$0x1]
      %v4023 = vsel %vm4015, 0, %v4022
      %4024 = vst [vmem:[#allocation2 + $0x20] sm:$0x1] %v4023
      %v4025 = vld [vmem:[#allocation2 + $0x2c] sm:$0x1]
      %v4026 = vsel %vm4015, 0, %v4025
      %4027 = vst [vmem:[#allocation2 + $0x2c] sm:$0x1] %v4026
      %v4028 = vld [vmem:[#allocation2 + $0x38] sm:$0x1]
      %v4029 = vsel %vm4015, 0, %v4028
      %4030 = vst [vmem:[#allocation2 + $0x38] sm:$0x1] %v4029
      %v4031 = vld [vmem:[#allocation2 + $0x44] sm:$0x1]
      %v4032 = vsel %vm4015, 0, %v4031
      %4033 = vst [vmem:[#allocation2 + $0x44] sm:$0x1] %v4032
      %v4034 = vld [vmem:[#allocation2 + $0x50] sm:$0x1]
      %v4035 = vsel %vm4015, 0, %v4034
      %4036 = vst [vmem:[#allocation2 + $0x50] sm:$0x1] %v4035
      %v4037 = vld [vmem:[#allocation2 + $0x5c] sm:$0x1]
      %v4038 = vsel %vm4015, 0, %v4037
      %4039 = vst [vmem:[#allocation2 + $0x5c] sm:$0x1] %v4038
      %v4040 = vld [vmem:[#allocation2 + $0x68] sm:$0x1]
      %v4041 = vsel %vm4015, 0, %v4040
      %4042 = vst [vmem:[#allocation2 + $0x68] sm:$0x1] %v4041
      %v4043 = vld [vmem:[#allocation2 + $0x74] sm:$0x1]
      %v4044 = vsel %vm4015, 0, %v4043
      %4045 = vst [vmem:[#allocation2 + $0x74] sm:$0x1] %v4044
      %p4046 = scmp.eq.s32.totalorder %s21, 0
      // Predicated region
      $region41: #{basic_block_forward.1} parent=39 // pred_check
        %p4047 = pneg %p4046
      $region42: #{basic_block_forward.1} parent=39 // pred_check_branch
        %4049 = sbr.rel (%p4047) target = $region44
      $region43: #{basic_block_forward.1} parent=39 // pred_region
        %4050 = vst [vmem:[#allocation2] sm:$0xf] 0
        %4051 = vst [vmem:[#allocation2 + $0x4] sm:$0xf] 0
        %4052 = vst [vmem:[#allocation2 + $0x8] sm:$0x1] 0
      $region44: #{basic_block_forward.1} parent=39 // pred_fallthru
        _
      %p4053 = scmp.eq.s32.totalorder %s21, 1
      // Predicated region
      $region45: #{basic_block_forward.1} parent=39 // pred_check
        %p4054 = pneg %p4053
      $region46: #{basic_block_forward.1} parent=39 // pred_check_branch
        %4056 = sbr.rel (%p4054) target = $region48
      $region47: #{basic_block_forward.1} parent=39 // pred_region
        %s4057 = scalar_lea.vmem [#allocation2], 108
        %4058 = vst [vmem:[%s4057] sm:$0xf] 0
        %4059 = vst [vmem:[%s4057 + $0x4] sm:$0xf] 0
        %4060 = vst [vmem:[%s4057 + $0x8] sm:$0x1] 0
      $region48: #{basic_block_forward.1} parent=39 // pred_fallthru
        _
      %v4061 = vld [vmem:[#allocation2] sm:$0xf]
      %v4062 = vld [vmem:[#allocation2 + $0x4] sm:$0xf]
      %v4063 = vld [vmem:[#allocation2 + $0xc] sm:$0xf]
      %v4064 = vld [vmem:[#allocation2 + $0x10] sm:$0xf]
      %v4065 = vld [vmem:[#allocation2 + $0x18] sm:$0xf]
      %v4066 = vld [vmem:[#allocation2 + $0x1c] sm:$0xf]
      %v4067 = vld [vmem:[#allocation2 + $0x24] sm:$0xf]
      %v4068 = vld [vmem:[#allocation2 + $0x28] sm:$0xf]
      %v4069 = vld [vmem:[#allocation2 + $0x30] sm:$0xf]
      %v4070 = vld [vmem:[#allocation2 + $0x34] sm:$0xf]
      %v4071 = vld [vmem:[#allocation2 + $0x3c] sm:$0xf]
      %v4072 = vld [vmem:[#allocation2 + $0x40] sm:$0xf]
      %v4073 = vld [vmem:[#allocation2 + $0x48] sm:$0xf]
      %v4074 = vld [vmem:[#allocation2 + $0x4c] sm:$0xf]
      %v4075 = vld [vmem:[#allocation2 + $0x54] sm:$0xf]
      %v4076 = vld [vmem:[#allocation2 + $0x58] sm:$0xf]
      %v4077 = vld [vmem:[%s3] sm:$0xf]
      %v4078 = vld [vmem:[%s3 + $0x4] sm:$0xf]
      %v4079 = vld [vmem:[%s3 + $0x8] sm:$0xf]
      %v4080 = vld [vmem:[%s3 + $0xc] sm:$0xf]
      %v4081 = vld [vmem:[%s3 + $0x10] sm:$0xf]
      %v4082 = vld [vmem:[%s3 + $0x14] sm:$0xf]
      %v4083 = vld [vmem:[%s3 + $0x18] sm:$0xf]
      %v4084 = vld [vmem:[%s3 + $0x1c] sm:$0xf]
      %v4085 = vld [vmem:[%s3 + $0x20] sm:$0xf]
      %v4086 = vld [vmem:[%s3 + $0x24] sm:$0xf]
      %v4087 = vld [vmem:[%s3 + $0x28] sm:$0xf]
      %v4088 = vld [vmem:[%s3 + $0x2c] sm:$0xf]
      %v4089 = vld [vmem:[%s3 + $0x30] sm:$0xf]
      %v4090 = vld [vmem:[%s3 + $0x34] sm:$0xf]
      %v4091 = vld [vmem:[%s3 + $0x38] sm:$0xf]
      %v4092 = vld [vmem:[%s3 + $0x3c] sm:$0xf]
      %v4093 = vld [vmem:[#allocation2 + $0x8] sm:$0x1]
      %v4094 = vld [vmem:[#allocation2 + $0x14] sm:$0x1]
      %v4095 = vld [vmem:[#allocation2 + $0x20] sm:$0x1]
      %v4096 = vld [vmem:[#allocation2 + $0x2c] sm:$0x1]
      %v4097 = vld [vmem:[#allocation2 + $0x38] sm:$0x1]
      %v4098 = vld [vmem:[#allocation2 + $0x44] sm:$0x1]
      %v4099 = vld [vmem:[#allocation2 + $0x50] sm:$0x1]
      %v4100 = vld [vmem:[#allocation2 + $0x5c] sm:$0x1]
      %v4102 = vshrl.u32 %v4061, 16
      %v4104 = vrot.slane %v4102, 4
      %v4105 = vshll.u32 %v4061, 16
      %v4107 = vrot.slane %v4105, 5
      %v4108 = vor.u32 %v4104, %v4107
      %v4109 = vrot.slane %v4108, 4
      %v4111 = vshll.u32 %v4062, 16
      %v4113 = vrot.slane %v4111, 5
      %v4114 = vsel %vm303, %v4109, %v4113
      %v4115 = vshrl.u32 %v4062, 16
      %v4117 = vrot.slane %v4115, 4
      %v4118 = vor.u32 %v4117, %v4113
      %v4119 = vrot.slane %v4118, 4
      %v4121 = vshll.u32 %v4093, 16
      %v4123 = vrot.slane %v4121, 5
      %v4124 = vsel %vm303, %v4119, %v4123
      %v4126 = vshrl.u32 %v4063, 16
      %v4128 = vrot.slane %v4126, 4
      %v4129 = vshll.u32 %v4063, 16
      %v4131 = vrot.slane %v4129, 5
      %v4132 = vor.u32 %v4128, %v4131
      %v4133 = vrot.slane %v4132, 4
      %v4135 = vshll.u32 %v4064, 16
      %v4137 = vrot.slane %v4135, 5
      %v4138 = vsel %vm303, %v4133, %v4137
      %v4139 = vshrl.u32 %v4064, 16
      %v4141 = vrot.slane %v4139, 4
      %v4142 = vor.u32 %v4141, %v4137
      %v4143 = vrot.slane %v4142, 4
      %v4145 = vshll.u32 %v4094, 16
      %v4147 = vrot.slane %v4145, 5
      %v4148 = vsel %vm303, %v4143, %v4147
      %v4150 = vshrl.u32 %v4065, 16
      %v4152 = vrot.slane %v4150, 4
      %v4153 = vshll.u32 %v4065, 16
      %v4155 = vrot.slane %v4153, 5
      %v4156 = vor.u32 %v4152, %v4155
      %v4157 = vrot.slane %v4156, 4
      %v4159 = vshll.u32 %v4066, 16
      %v4161 = vrot.slane %v4159, 5
      %v4162 = vsel %vm303, %v4157, %v4161
      %v4163 = vshrl.u32 %v4066, 16
      %v4165 = vrot.slane %v4163, 4
      %v4166 = vor.u32 %v4165, %v4161
      %v4167 = vrot.slane %v4166, 4
      %v4169 = vshll.u32 %v4095, 16
      %v4171 = vrot.slane %v4169, 5
      %v4172 = vsel %vm303, %v4167, %v4171
      %v4174 = vshrl.u32 %v4067, 16
      %v4176 = vrot.slane %v4174, 4
      %v4177 = vshll.u32 %v4067, 16
      %v4179 = vrot.slane %v4177, 5
      %v4180 = vor.u32 %v4176, %v4179
      %v4181 = vrot.slane %v4180, 4
      %v4183 = vshll.u32 %v4068, 16
      %v4185 = vrot.slane %v4183, 5
      %v4186 = vsel %vm303, %v4181, %v4185
      %v4187 = vshrl.u32 %v4068, 16
      %v4189 = vrot.slane %v4187, 4
      %v4190 = vor.u32 %v4189, %v4185
      %v4191 = vrot.slane %v4190, 4
      %v4193 = vshll.u32 %v4096, 16
      %v4195 = vrot.slane %v4193, 5
      %v4196 = vsel %vm303, %v4191, %v4195
      %v4198 = vshrl.u32 %v4069, 16
      %v4200 = vrot.slane %v4198, 4
      %v4201 = vshll.u32 %v4069, 16
      %v4203 = vrot.slane %v4201, 5
      %v4204 = vor.u32 %v4200, %v4203
      %v4205 = vrot.slane %v4204, 4
      %v4207 = vshll.u32 %v4070, 16
      %v4209 = vrot.slane %v4207, 5
      %v4210 = vsel %vm303, %v4205, %v4209
      %v4211 = vshrl.u32 %v4070, 16
      %v4213 = vrot.slane %v4211, 4
      %v4214 = vor.u32 %v4213, %v4209
      %v4215 = vrot.slane %v4214, 4
      %v4217 = vshll.u32 %v4097, 16
      %v4219 = vrot.slane %v4217, 5
      %v4220 = vsel %vm303, %v4215, %v4219
      %v4222 = vshrl.u32 %v4071, 16
      %v4224 = vrot.slane %v4222, 4
      %v4225 = vshll.u32 %v4071, 16
      %v4227 = vrot.slane %v4225, 5
      %v4228 = vor.u32 %v4224, %v4227
      %v4229 = vrot.slane %v4228, 4
      %v4231 = vshll.u32 %v4072, 16
      %v4233 = vrot.slane %v4231, 5
      %v4234 = vsel %vm303, %v4229, %v4233
      %v4235 = vshrl.u32 %v4072, 16
      %v4237 = vrot.slane %v4235, 4
      %v4238 = vor.u32 %v4237, %v4233
      %v4239 = vrot.slane %v4238, 4
      %v4241 = vshll.u32 %v4098, 16
      %v4243 = vrot.slane %v4241, 5
      %v4244 = vsel %vm303, %v4239, %v4243
      %v4246 = vshrl.u32 %v4073, 16
      %v4248 = vrot.slane %v4246, 4
      %v4249 = vshll.u32 %v4073, 16
      %v4251 = vrot.slane %v4249, 5
      %v4252 = vor.u32 %v4248, %v4251
      %v4253 = vrot.slane %v4252, 4
      %v4255 = vshll.u32 %v4074, 16
      %v4257 = vrot.slane %v4255, 5
      %v4258 = vsel %vm303, %v4253, %v4257
      %v4259 = vshrl.u32 %v4074, 16
      %v4261 = vrot.slane %v4259, 4
      %v4262 = vor.u32 %v4261, %v4257
      %v4263 = vrot.slane %v4262, 4
      %v4265 = vshll.u32 %v4099, 16
      %v4267 = vrot.slane %v4265, 5
      %v4268 = vsel %vm303, %v4263, %v4267
      %v4270 = vshrl.u32 %v4075, 16
      %v4272 = vrot.slane %v4270, 4
      %v4273 = vshll.u32 %v4075, 16
      %v4275 = vrot.slane %v4273, 5
      %v4276 = vor.u32 %v4272, %v4275
      %v4277 = vrot.slane %v4276, 4
      %v4279 = vshll.u32 %v4076, 16
      %v4281 = vrot.slane %v4279, 5
      %v4282 = vsel %vm303, %v4277, %v4281
      %v4283 = vshrl.u32 %v4076, 16
      %v4285 = vrot.slane %v4283, 4
      %v4286 = vor.u32 %v4285, %v4281
      %v4287 = vrot.slane %v4286, 4
      %v4289 = vshll.u32 %v4100, 16
      %v4291 = vrot.slane %v4289, 5
      %v4292 = vsel %vm303, %v4287, %v4291
      %s4293 = scalar_lea.vmem %s3, 64
      %v4294 = vld [vmem:[%s4293] sm:$0xf]
      %v4295 = vld [vmem:[%s4293 + $0x4] sm:$0xf]
      %v4296 = vld [vmem:[%s4293 + $0x8] sm:$0xf]
      %v4297 = vld [vmem:[%s4293 + $0xc] sm:$0xf]
      %v4298 = vld [vmem:[%s4293 + $0x10] sm:$0xf]
      %v4299 = vld [vmem:[%s4293 + $0x14] sm:$0xf]
      %v4300 = vld [vmem:[%s4293 + $0x18] sm:$0xf]
      %v4301 = vld [vmem:[%s4293 + $0x1c] sm:$0xf]
      %v4302 = vld [vmem:[%s4293 + $0x20] sm:$0xf]
      %v4303 = vld [vmem:[%s4293 + $0x24] sm:$0xf]
      %v4304 = vld [vmem:[%s4293 + $0x28] sm:$0xf]
      %v4305 = vld [vmem:[%s4293 + $0x2c] sm:$0xf]
      %v4306 = vld [vmem:[%s4293 + $0x30] sm:$0xf]
      %v4307 = vld [vmem:[%s4293 + $0x34] sm:$0xf]
      %v4308 = vld [vmem:[%s4293 + $0x38] sm:$0xf]
      %v4309 = vld [vmem:[%s4293 + $0x3c] sm:$0xf]
      %v4310 = vunpack.c.l.b16 %v4114
      %v4311 = vunpack.c.l.b16 %v4124
      %v4312 = vunpack.c.l.b16 %v4138
      %v4313 = vunpack.c.l.b16 %v4148
      %v4314 = vunpack.c.l.b16 %v4162
      %v4315 = vunpack.c.l.b16 %v4172
      %v4316 = vunpack.c.l.b16 %v4186
      %v4317 = vunpack.c.l.b16 %v4196
      %v4318 = vunpack.c.l.b16 %v4210
      %v4319 = vunpack.c.l.b16 %v4220
      %v4320 = vunpack.c.l.b16 %v4234
      %v4321 = vunpack.c.l.b16 %v4244
      %v4322 = vunpack.c.l.b16 %v4258
      %v4323 = vunpack.c.l.b16 %v4268
      %v4324 = vunpack.c.l.b16 %v4282
      %v4325 = vunpack.c.l.b16 %v4292
      %v4326 = vpack.c.b16 %v4311, %v4310
      %v4327 = vpack.c.b16 %v4313, %v4312
      %v4328 = vpack.c.b16 %v4315, %v4314
      %v4329 = vpack.c.b16 %v4317, %v4316
      %v4330 = vpack.c.b16 %v4319, %v4318
      %v4331 = vpack.c.b16 %v4321, %v4320
      %v4332 = vpack.c.b16 %v4323, %v4322
      %v4333 = vpack.c.b16 %v4325, %v4324
      %v4358 = vunpack.c.l.b16 %v4294
      %v4359 = vunpack.c.l.b16 %v4295
      %v4360 = vunpack.c.l.b16 %v4296
      %v4361 = vunpack.c.l.b16 %v4297
      %v4362 = vunpack.c.l.b16 %v4298
      %v4363 = vunpack.c.l.b16 %v4299
      %v4364 = vunpack.c.l.b16 %v4300
      %v4365 = vunpack.c.l.b16 %v4301
      %v4366 = vunpack.c.l.b16 %v4302
      %v4367 = vunpack.c.l.b16 %v4303
      %v4368 = vunpack.c.l.b16 %v4304
      %v4369 = vunpack.c.l.b16 %v4305
      %v4370 = vunpack.c.l.b16 %v4306
      %v4371 = vunpack.c.l.b16 %v4307
      %v4372 = vunpack.c.l.b16 %v4308
      %v4373 = vunpack.c.l.b16 %v4309
      %v4374 = vpack.c.b16 %v4359, %v4358
      %v4375 = vpack.c.b16 %v4361, %v4360
      %v4376 = vpack.c.b16 %v4363, %v4362
      %v4377 = vpack.c.b16 %v4365, %v4364
      %v4378 = vpack.c.b16 %v4367, %v4366
      %v4379 = vpack.c.b16 %v4369, %v4368
      %v4380 = vpack.c.b16 %v4371, %v4370
      %v4381 = vpack.c.b16 %v4373, %v4372
      %4390 = vmatprep.subr.bf16.mxu0 0
      %4391 = vmatpush1.bf16.msra.mxu0 %v4381
      %4392 = vmatprep.subr.bf16.mxu0 0
      %4393 = vmatpush1.bf16.msra.mxu0 %v4380
      %4394 = vmatprep.subr.bf16.mxu0 0
      %4395 = vmatpush1.bf16.msra.mxu0 %v4379
      %4396 = vmatprep.subr.bf16.mxu0 0
      %4397 = vmatpush1.bf16.msra.mxu0 %v4378
      %4398 = vmatprep.subr.bf16.mxu0 0
      %4399 = vmatpush1.bf16.msra.mxu0 %v4377
      %4400 = vmatprep.subr.bf16.mxu0 0
      %4401 = vmatpush1.bf16.msra.mxu0 %v4376
      %4402 = vmatprep.subr.bf16.mxu0 0
      %4403 = vmatpush1.bf16.msra.mxu0 %v4375
      %4404 = vmatprep.subr.bf16.mxu0 0
      %4405 = vmatpush1.bf16.msra.mxu0 %v4374
      %4406 = vmatprep.subr.bf16.mxu0 0
      %4407 = vmatpush2.bf16.msra.mxu0 0
      %4408 = vmatprep.subr.bf16.mxu0 0
      %4409 = vmatpush2.bf16.msra.mxu0 0
      %4410 = vmatprep.subr.bf16.mxu0 0
      %4411 = vmatpush2.bf16.msra.mxu0 0
      %4412 = vmatprep.subr.bf16.mxu0 0
      %4413 = vmatpush2.bf16.msra.mxu0 0
      %4414 = vmatprep.subr.bf16.mxu0 0
      %4415 = vmatpush2.bf16.msra.mxu0 0
      %4416 = vmatprep.subr.bf16.mxu0 0
      %4417 = vmatpush2.bf16.msra.mxu0 0
      %4418 = vmatprep.subr.bf16.mxu0 0
      %4419 = vmatpush2.bf16.msra.mxu0 0
      %4420 = vmatprep.subr.bf16.mxu0 0
      %4421 = vmatpush2.bf16.msra.mxu0 0
      %4422 = vmatprep.mubr.bf16.mxu0 0
      %4423 = vmatmul.mubr.bf16.gmra.mxu0 %v4326
      %v4424 = vpop.f32.mrf.mxu0
      %v4425 = vadd.f32 0.0, %v4424
      %v4426 = vpop.f32.mrf.mxu0
      %v4427 = vpop.f32.mrf.mxu0
      %v4428 = vadd.f32 0.0, %v4427
      %v4429 = vpop.f32.mrf.mxu0
      %4430 = vmatprep.mubr.bf16.mxu0 0
      %4431 = vmatmul.mubr.bf16.gmra.mxu0 %v4327
      %v4432 = vpop.f32.mrf.mxu0
      %v4433 = vadd.f32 0.0, %v4432
      %v4434 = vpop.f32.mrf.mxu0
      %v4435 = vpop.f32.mrf.mxu0
      %v4436 = vadd.f32 0.0, %v4435
      %v4437 = vpop.f32.mrf.mxu0
      %4438 = vmatprep.mubr.bf16.mxu0 0
      %4439 = vmatmul.mubr.bf16.gmra.mxu0 %v4328
      %v4440 = vpop.f32.mrf.mxu0
      %v4441 = vadd.f32 0.0, %v4440
      %v4442 = vpop.f32.mrf.mxu0
      %v4443 = vpop.f32.mrf.mxu0
      %v4444 = vadd.f32 0.0, %v4443
      %v4445 = vpop.f32.mrf.mxu0
      %4446 = vmatprep.mubr.bf16.mxu0 0
      %4447 = vmatmul.mubr.bf16.gmra.mxu0 %v4329
      %v4448 = vpop.f32.mrf.mxu0
      %v4449 = vadd.f32 0.0, %v4448
      %v4450 = vpop.f32.mrf.mxu0
      %v4451 = vpop.f32.mrf.mxu0
      %v4452 = vadd.f32 0.0, %v4451
      %v4453 = vpop.f32.mrf.mxu0
      %4454 = vmatprep.mubr.bf16.mxu0 0
      %4455 = vmatmul.mubr.bf16.gmra.mxu0 %v4330
      %v4456 = vpop.f32.mrf.mxu0
      %v4457 = vadd.f32 0.0, %v4456
      %v4458 = vpop.f32.mrf.mxu0
      %v4459 = vpop.f32.mrf.mxu0
      %v4460 = vadd.f32 0.0, %v4459
      %v4461 = vpop.f32.mrf.mxu0
      %4462 = vmatprep.mubr.bf16.mxu0 0
      %4463 = vmatmul.mubr.bf16.gmra.mxu0 %v4331
      %v4464 = vpop.f32.mrf.mxu0
      %v4465 = vadd.f32 0.0, %v4464
      %v4466 = vpop.f32.mrf.mxu0
      %v4467 = vpop.f32.mrf.mxu0
      %v4468 = vadd.f32 0.0, %v4467
      %v4469 = vpop.f32.mrf.mxu0
      %4470 = vmatprep.mubr.bf16.mxu0 0
      %4471 = vmatmul.mubr.bf16.gmra.mxu0 %v4332
      %v4472 = vpop.f32.mrf.mxu0
      %v4473 = vadd.f32 0.0, %v4472
      %v4474 = vpop.f32.mrf.mxu0
      %v4475 = vpop.f32.mrf.mxu0
      %v4476 = vadd.f32 0.0, %v4475
      %v4477 = vpop.f32.mrf.mxu0
      %4478 = vmatprep.mubr.bf16.mxu0 0
      %4479 = vmatmul.mubr.bf16.gmra.mxu0 %v4333
      %v4480 = vpop.f32.mrf.mxu0
      %v4481 = vadd.f32 0.0, %v4480
      %v4482 = vpop.f32.mrf.mxu0
      %v4483 = vpop.f32.mrf.mxu0
      %v4484 = vadd.f32 0.0, %v4483
      %v4485 = vpop.f32.mrf.mxu0
      %4486 = vdwg.mxu0
      %v4503 = vunpack.c.l.b16 %v4061
      %v4504 = vunpack.c.l.b16 %v4062
      %v4505 = vunpack.c.l.b16 %v4063
      %v4506 = vunpack.c.l.b16 %v4064
      %v4507 = vunpack.c.l.b16 %v4065
      %v4508 = vunpack.c.l.b16 %v4066
      %v4509 = vunpack.c.l.b16 %v4067
      %v4510 = vunpack.c.l.b16 %v4068
      %v4511 = vunpack.c.l.b16 %v4069
      %v4512 = vunpack.c.l.b16 %v4070
      %v4513 = vunpack.c.l.b16 %v4071
      %v4514 = vunpack.c.l.b16 %v4072
      %v4515 = vunpack.c.l.b16 %v4073
      %v4516 = vunpack.c.l.b16 %v4074
      %v4517 = vunpack.c.l.b16 %v4075
      %v4518 = vunpack.c.l.b16 %v4076
      %v4519 = vpack.c.b16 %v4504, %v4503
      %v4520 = vpack.c.b16 %v4506, %v4505
      %v4521 = vpack.c.b16 %v4508, %v4507
      %v4522 = vpack.c.b16 %v4510, %v4509
      %v4523 = vpack.c.b16 %v4512, %v4511
      %v4524 = vpack.c.b16 %v4514, %v4513
      %v4525 = vpack.c.b16 %v4516, %v4515
      %v4526 = vpack.c.b16 %v4518, %v4517
      %v4551 = vunpack.c.l.b16 %v4077
      %v4552 = vunpack.c.l.b16 %v4078
      %v4553 = vunpack.c.l.b16 %v4079
      %v4554 = vunpack.c.l.b16 %v4080
      %v4555 = vunpack.c.l.b16 %v4081
      %v4556 = vunpack.c.l.b16 %v4082
      %v4557 = vunpack.c.l.b16 %v4083
      %v4558 = vunpack.c.l.b16 %v4084
      %v4559 = vunpack.c.l.b16 %v4085
      %v4560 = vunpack.c.l.b16 %v4086
      %v4561 = vunpack.c.l.b16 %v4087
      %v4562 = vunpack.c.l.b16 %v4088
      %v4563 = vunpack.c.l.b16 %v4089
      %v4564 = vunpack.c.l.b16 %v4090
      %v4565 = vunpack.c.l.b16 %v4091
      %v4566 = vunpack.c.l.b16 %v4092
      %v4567 = vpack.c.b16 %v4552, %v4551
      %v4568 = vpack.c.b16 %v4554, %v4553
      %v4569 = vpack.c.b16 %v4556, %v4555
      %v4570 = vpack.c.b16 %v4558, %v4557
      %v4571 = vpack.c.b16 %v4560, %v4559
      %v4572 = vpack.c.b16 %v4562, %v4561
      %v4573 = vpack.c.b16 %v4564, %v4563
      %v4574 = vpack.c.b16 %v4566, %v4565
      %4583 = vmatprep.subr.bf16.mxu0 0
      %4584 = vmatpush1.bf16.msra.mxu0 %v4574
      %4585 = vmatprep.subr.bf16.mxu0 0
      %4586 = vmatpush1.bf16.msra.mxu0 %v4573
      %4587 = vmatprep.subr.bf16.mxu0 0
      %4588 = vmatpush1.bf16.msra.mxu0 %v4572
      %4589 = vmatprep.subr.bf16.mxu0 0
      %4590 = vmatpush1.bf16.msra.mxu0 %v4571
      %4591 = vmatprep.subr.bf16.mxu0 0
      %4592 = vmatpush1.bf16.msra.mxu0 %v4570
      %4593 = vmatprep.subr.bf16.mxu0 0
      %4594 = vmatpush1.bf16.msra.mxu0 %v4569
      %4595 = vmatprep.subr.bf16.mxu0 0
      %4596 = vmatpush1.bf16.msra.mxu0 %v4568
      %4597 = vmatprep.subr.bf16.mxu0 0
      %4598 = vmatpush1.bf16.msra.mxu0 %v4567
      %4599 = vmatprep.subr.bf16.mxu0 0
      %4600 = vmatpush2.bf16.msra.mxu0 0
      %4601 = vmatprep.subr.bf16.mxu0 0
      %4602 = vmatpush2.bf16.msra.mxu0 0
      %4603 = vmatprep.subr.bf16.mxu0 0
      %4604 = vmatpush2.bf16.msra.mxu0 0
      %4605 = vmatprep.subr.bf16.mxu0 0
      %4606 = vmatpush2.bf16.msra.mxu0 0
      %4607 = vmatprep.subr.bf16.mxu0 0
      %4608 = vmatpush2.bf16.msra.mxu0 0
      %4609 = vmatprep.subr.bf16.mxu0 0
      %4610 = vmatpush2.bf16.msra.mxu0 0
      %4611 = vmatprep.subr.bf16.mxu0 0
      %4612 = vmatpush2.bf16.msra.mxu0 0
      %4613 = vmatprep.subr.bf16.mxu0 0
      %4614 = vmatpush2.bf16.msra.mxu0 0
      %4615 = vmatprep.mubr.bf16.mxu0 0
      %4616 = vmatmul.mubr.bf16.gmra.mxu0 %v4519
      %v4617 = vpop.f32.mrf.mxu0
      %v4618 = vadd.f32 %v4425, %v4617
      %v4619 = vpop.f32.mrf.mxu0
      %v4620 = vpop.f32.mrf.mxu0
      %v4621 = vadd.f32 %v4428, %v4620
      %v4622 = vpop.f32.mrf.mxu0
      %4623 = vmatprep.mubr.bf16.mxu0 0
      %4624 = vmatmul.mubr.bf16.gmra.mxu0 %v4520
      %v4625 = vpop.f32.mrf.mxu0
      %v4626 = vadd.f32 %v4433, %v4625
      %v4627 = vpop.f32.mrf.mxu0
      %v4628 = vpop.f32.mrf.mxu0
      %v4629 = vadd.f32 %v4436, %v4628
      %v4630 = vpop.f32.mrf.mxu0
      %4631 = vmatprep.mubr.bf16.mxu0 0
      %4632 = vmatmul.mubr.bf16.gmra.mxu0 %v4521
      %v4633 = vpop.f32.mrf.mxu0
      %v4634 = vadd.f32 %v4441, %v4633
      %v4635 = vpop.f32.mrf.mxu0
      %v4636 = vpop.f32.mrf.mxu0
      %v4637 = vadd.f32 %v4444, %v4636
      %v4638 = vpop.f32.mrf.mxu0
      %4639 = vmatprep.mubr.bf16.mxu0 0
      %4640 = vmatmul.mubr.bf16.gmra.mxu0 %v4522
      %v4641 = vpop.f32.mrf.mxu0
      %v4642 = vadd.f32 %v4449, %v4641
      %v4643 = vpop.f32.mrf.mxu0
      %v4644 = vpop.f32.mrf.mxu0
      %v4645 = vadd.f32 %v4452, %v4644
      %v4646 = vpop.f32.mrf.mxu0
      %4647 = vmatprep.mubr.bf16.mxu0 0
      %4648 = vmatmul.mubr.bf16.gmra.mxu0 %v4523
      %v4649 = vpop.f32.mrf.mxu0
      %v4650 = vadd.f32 %v4457, %v4649
      %v4651 = vpop.f32.mrf.mxu0
      %v4652 = vpop.f32.mrf.mxu0
      %v4653 = vadd.f32 %v4460, %v4652
      %v4654 = vpop.f32.mrf.mxu0
      %4655 = vmatprep.mubr.bf16.mxu0 0
      %4656 = vmatmul.mubr.bf16.gmra.mxu0 %v4524
      %v4657 = vpop.f32.mrf.mxu0
      %v4658 = vadd.f32 %v4465, %v4657
      %v4659 = vpop.f32.mrf.mxu0
      %v4660 = vpop.f32.mrf.mxu0
      %v4661 = vadd.f32 %v4468, %v4660
      %v4662 = vpop.f32.mrf.mxu0
      %4663 = vmatprep.mubr.bf16.mxu0 0
      %4664 = vmatmul.mubr.bf16.gmra.mxu0 %v4525
      %v4665 = vpop.f32.mrf.mxu0
      %v4666 = vadd.f32 %v4473, %v4665
      %v4667 = vpop.f32.mrf.mxu0
      %v4668 = vpop.f32.mrf.mxu0
      %v4669 = vadd.f32 %v4476, %v4668
      %v4670 = vpop.f32.mrf.mxu0
      %4671 = vmatprep.mubr.bf16.mxu0 0
      %4672 = vmatmul.mubr.bf16.gmra.mxu0 %v4526
      %v4673 = vpop.f32.mrf.mxu0
      %v4674 = vadd.f32 %v4481, %v4673
      %v4675 = vpop.f32.mrf.mxu0
      %v4676 = vpop.f32.mrf.mxu0
      %v4677 = vadd.f32 %v4484, %v4676
      %v4678 = vpop.f32.mrf.mxu0
      %4679 = vdwg.mxu0
      %v4680 = vld [vmem:[#allocation2] sm:$0xe]
      %v4681 = vld [vmem:[#allocation2 + $0xc] sm:$0xe]
      %v4682 = vld [vmem:[#allocation2 + $0x18] sm:$0xe]
      %v4683 = vld [vmem:[#allocation2 + $0x24] sm:$0xe]
      %v4684 = vld [vmem:[#allocation2 + $0x30] sm:$0xe]
      %v4685 = vld [vmem:[#allocation2 + $0x3c] sm:$0xe]
      %v4686 = vld [vmem:[#allocation2 + $0x48] sm:$0xe]
      %v4687 = vld [vmem:[#allocation2 + $0x54] sm:$0xe]
      %v4704 = vrot.slane %v4680, 5
      %v4705 = vrot.slane %v4704, 4
      %v4706 = vrot.slane %v4062, 5
      %v4707 = vsel %vm1015, %v4705, %v4706
      %v4708 = vrot.slane %v4706, 4
      %v4709 = vrot.slane %v4093, 5
      %v4710 = vsel %vm1015, %v4708, %v4709
      %v4711 = vrot.slane %v4681, 5
      %v4712 = vrot.slane %v4711, 4
      %v4713 = vrot.slane %v4064, 5
      %v4714 = vsel %vm1015, %v4712, %v4713
      %v4715 = vrot.slane %v4713, 4
      %v4716 = vrot.slane %v4094, 5
      %v4717 = vsel %vm1015, %v4715, %v4716
      %v4718 = vrot.slane %v4682, 5
      %v4719 = vrot.slane %v4718, 4
      %v4720 = vrot.slane %v4066, 5
      %v4721 = vsel %vm1015, %v4719, %v4720
      %v4722 = vrot.slane %v4720, 4
      %v4723 = vrot.slane %v4095, 5
      %v4724 = vsel %vm1015, %v4722, %v4723
      %v4725 = vrot.slane %v4683, 5
      %v4726 = vrot.slane %v4725, 4
      %v4727 = vrot.slane %v4068, 5
      %v4728 = vsel %vm1015, %v4726, %v4727
      %v4729 = vrot.slane %v4727, 4
      %v4730 = vrot.slane %v4096, 5
      %v4731 = vsel %vm1015, %v4729, %v4730
      %v4732 = vrot.slane %v4684, 5
      %v4733 = vrot.slane %v4732, 4
      %v4734 = vrot.slane %v4070, 5
      %v4735 = vsel %vm1015, %v4733, %v4734
      %v4736 = vrot.slane %v4734, 4
      %v4737 = vrot.slane %v4097, 5
      %v4738 = vsel %vm1015, %v4736, %v4737
      %v4739 = vrot.slane %v4685, 5
      %v4740 = vrot.slane %v4739, 4
      %v4741 = vrot.slane %v4072, 5
      %v4742 = vsel %vm1015, %v4740, %v4741
      %v4743 = vrot.slane %v4741, 4
      %v4744 = vrot.slane %v4098, 5
      %v4745 = vsel %vm1015, %v4743, %v4744
      %v4746 = vrot.slane %v4686, 5
      %v4747 = vrot.slane %v4746, 4
      %v4748 = vrot.slane %v4074, 5
      %v4749 = vsel %vm1015, %v4747, %v4748
      %v4750 = vrot.slane %v4748, 4
      %v4751 = vrot.slane %v4099, 5
      %v4752 = vsel %vm1015, %v4750, %v4751
      %v4753 = vrot.slane %v4687, 5
      %v4754 = vrot.slane %v4753, 4
      %v4755 = vrot.slane %v4076, 5
      %v4756 = vsel %vm1015, %v4754, %v4755
      %v4757 = vrot.slane %v4755, 4
      %v4758 = vrot.slane %v4100, 5
      %v4759 = vsel %vm1015, %v4757, %v4758
      %s4760 = scalar_lea.vmem %s3, 128
      %v4761 = vld [vmem:[%s4760] sm:$0xf]
      %v4762 = vld [vmem:[%s4760 + $0x4] sm:$0xf]
      %v4763 = vld [vmem:[%s4760 + $0x8] sm:$0xf]
      %v4764 = vld [vmem:[%s4760 + $0xc] sm:$0xf]
      %v4765 = vld [vmem:[%s4760 + $0x10] sm:$0xf]
      %v4766 = vld [vmem:[%s4760 + $0x14] sm:$0xf]
      %v4767 = vld [vmem:[%s4760 + $0x18] sm:$0xf]
      %v4768 = vld [vmem:[%s4760 + $0x1c] sm:$0xf]
      %v4769 = vld [vmem:[%s4760 + $0x20] sm:$0xf]
      %v4770 = vld [vmem:[%s4760 + $0x24] sm:$0xf]
      %v4771 = vld [vmem:[%s4760 + $0x28] sm:$0xf]
      %v4772 = vld [vmem:[%s4760 + $0x2c] sm:$0xf]
      %v4773 = vld [vmem:[%s4760 + $0x30] sm:$0xf]
      %v4774 = vld [vmem:[%s4760 + $0x34] sm:$0xf]
      %v4775 = vld [vmem:[%s4760 + $0x38] sm:$0xf]
      %v4776 = vld [vmem:[%s4760 + $0x3c] sm:$0xf]
      %v4777 = vunpack.c.l.b16 %v4707
      %v4778 = vunpack.c.l.b16 %v4710
      %v4779 = vunpack.c.l.b16 %v4714
      %v4780 = vunpack.c.l.b16 %v4717
      %v4781 = vunpack.c.l.b16 %v4721
      %v4782 = vunpack.c.l.b16 %v4724
      %v4783 = vunpack.c.l.b16 %v4728
      %v4784 = vunpack.c.l.b16 %v4731
      %v4785 = vunpack.c.l.b16 %v4735
      %v4786 = vunpack.c.l.b16 %v4738
      %v4787 = vunpack.c.l.b16 %v4742
      %v4788 = vunpack.c.l.b16 %v4745
      %v4789 = vunpack.c.l.b16 %v4749
      %v4790 = vunpack.c.l.b16 %v4752
      %v4791 = vunpack.c.l.b16 %v4756
      %v4792 = vunpack.c.l.b16 %v4759
      %v4793 = vpack.c.b16 %v4778, %v4777
      %v4794 = vpack.c.b16 %v4780, %v4779
      %v4795 = vpack.c.b16 %v4782, %v4781
      %v4796 = vpack.c.b16 %v4784, %v4783
      %v4797 = vpack.c.b16 %v4786, %v4785
      %v4798 = vpack.c.b16 %v4788, %v4787
      %v4799 = vpack.c.b16 %v4790, %v4789
      %v4800 = vpack.c.b16 %v4792, %v4791
      %v4825 = vunpack.c.l.b16 %v4761
      %v4826 = vunpack.c.l.b16 %v4762
      %v4827 = vunpack.c.l.b16 %v4763
      %v4828 = vunpack.c.l.b16 %v4764
      %v4829 = vunpack.c.l.b16 %v4765
      %v4830 = vunpack.c.l.b16 %v4766
      %v4831 = vunpack.c.l.b16 %v4767
      %v4832 = vunpack.c.l.b16 %v4768
      %v4833 = vunpack.c.l.b16 %v4769
      %v4834 = vunpack.c.l.b16 %v4770
      %v4835 = vunpack.c.l.b16 %v4771
      %v4836 = vunpack.c.l.b16 %v4772
      %v4837 = vunpack.c.l.b16 %v4773
      %v4838 = vunpack.c.l.b16 %v4774
      %v4839 = vunpack.c.l.b16 %v4775
      %v4840 = vunpack.c.l.b16 %v4776
      %v4841 = vpack.c.b16 %v4826, %v4825
      %v4842 = vpack.c.b16 %v4828, %v4827
      %v4843 = vpack.c.b16 %v4830, %v4829
      %v4844 = vpack.c.b16 %v4832, %v4831
      %v4845 = vpack.c.b16 %v4834, %v4833
      %v4846 = vpack.c.b16 %v4836, %v4835
      %v4847 = vpack.c.b16 %v4838, %v4837
      %v4848 = vpack.c.b16 %v4840, %v4839
      %4857 = vmatprep.subr.bf16.mxu0 0
      %4858 = vmatpush1.bf16.msra.mxu0 %v4848
      %4859 = vmatprep.subr.bf16.mxu0 0
      %4860 = vmatpush1.bf16.msra.mxu0 %v4847
      %4861 = vmatprep.subr.bf16.mxu0 0
      %4862 = vmatpush1.bf16.msra.mxu0 %v4846
      %4863 = vmatprep.subr.bf16.mxu0 0
      %4864 = vmatpush1.bf16.msra.mxu0 %v4845
      %4865 = vmatprep.subr.bf16.mxu0 0
      %4866 = vmatpush1.bf16.msra.mxu0 %v4844
      %4867 = vmatprep.subr.bf16.mxu0 0
      %4868 = vmatpush1.bf16.msra.mxu0 %v4843
      %4869 = vmatprep.subr.bf16.mxu0 0
      %4870 = vmatpush1.bf16.msra.mxu0 %v4842
      %4871 = vmatprep.subr.bf16.mxu0 0
      %4872 = vmatpush1.bf16.msra.mxu0 %v4841
      %4873 = vmatprep.subr.bf16.mxu0 0
      %4874 = vmatpush2.bf16.msra.mxu0 0
      %4875 = vmatprep.subr.bf16.mxu0 0
      %4876 = vmatpush2.bf16.msra.mxu0 0
      %4877 = vmatprep.subr.bf16.mxu0 0
      %4878 = vmatpush2.bf16.msra.mxu0 0
      %4879 = vmatprep.subr.bf16.mxu0 0
      %4880 = vmatpush2.bf16.msra.mxu0 0
      %4881 = vmatprep.subr.bf16.mxu0 0
      %4882 = vmatpush2.bf16.msra.mxu0 0
      %4883 = vmatprep.subr.bf16.mxu0 0
      %4884 = vmatpush2.bf16.msra.mxu0 0
      %4885 = vmatprep.subr.bf16.mxu0 0
      %4886 = vmatpush2.bf16.msra.mxu0 0
      %4887 = vmatprep.subr.bf16.mxu0 0
      %4888 = vmatpush2.bf16.msra.mxu0 0
      %4889 = vmatprep.mubr.bf16.mxu0 0
      %4890 = vmatmul.mubr.bf16.gmra.mxu0 %v4793
      %v4891 = vpop.f32.mrf.mxu0
      %v4892 = vadd.f32 0.0, %v4891
      %v4893 = vpop.f32.mrf.mxu0
      %v4894 = vpop.f32.mrf.mxu0
      %v4895 = vadd.f32 0.0, %v4894
      %v4896 = vpop.f32.mrf.mxu0
      %4897 = vmatprep.mubr.bf16.mxu0 0
      %4898 = vmatmul.mubr.bf16.gmra.mxu0 %v4794
      %v4899 = vpop.f32.mrf.mxu0
      %v4900 = vadd.f32 0.0, %v4899
      %v4901 = vpop.f32.mrf.mxu0
      %v4902 = vpop.f32.mrf.mxu0
      %v4903 = vadd.f32 0.0, %v4902
      %v4904 = vpop.f32.mrf.mxu0
      %4905 = vmatprep.mubr.bf16.mxu0 0
      %4906 = vmatmul.mubr.bf16.gmra.mxu0 %v4795
      %v4907 = vpop.f32.mrf.mxu0
      %v4908 = vadd.f32 0.0, %v4907
      %v4909 = vpop.f32.mrf.mxu0
      %v4910 = vpop.f32.mrf.mxu0
      %v4911 = vadd.f32 0.0, %v4910
      %v4912 = vpop.f32.mrf.mxu0
      %4913 = vmatprep.mubr.bf16.mxu0 0
      %4914 = vmatmul.mubr.bf16.gmra.mxu0 %v4796
      %v4915 = vpop.f32.mrf.mxu0
      %v4916 = vadd.f32 0.0, %v4915
      %v4917 = vpop.f32.mrf.mxu0
      %v4918 = vpop.f32.mrf.mxu0
      %v4919 = vadd.f32 0.0, %v4918
      %v4920 = vpop.f32.mrf.mxu0
      %4921 = vmatprep.mubr.bf16.mxu0 0
      %4922 = vmatmul.mubr.bf16.gmra.mxu0 %v4797
      %v4923 = vpop.f32.mrf.mxu0
      %v4924 = vadd.f32 0.0, %v4923
      %v4925 = vpop.f32.mrf.mxu0
      %v4926 = vpop.f32.mrf.mxu0
      %v4927 = vadd.f32 0.0, %v4926
      %v4928 = vpop.f32.mrf.mxu0
      %4929 = vmatprep.mubr.bf16.mxu0 0
      %4930 = vmatmul.mubr.bf16.gmra.mxu0 %v4798
      %v4931 = vpop.f32.mrf.mxu0
      %v4932 = vadd.f32 0.0, %v4931
      %v4933 = vpop.f32.mrf.mxu0
      %v4934 = vpop.f32.mrf.mxu0
      %v4935 = vadd.f32 0.0, %v4934
      %v4936 = vpop.f32.mrf.mxu0
      %4937 = vmatprep.mubr.bf16.mxu0 0
      %4938 = vmatmul.mubr.bf16.gmra.mxu0 %v4799
      %v4939 = vpop.f32.mrf.mxu0
      %v4940 = vadd.f32 0.0, %v4939
      %v4941 = vpop.f32.mrf.mxu0
      %v4942 = vpop.f32.mrf.mxu0
      %v4943 = vadd.f32 0.0, %v4942
      %v4944 = vpop.f32.mrf.mxu0
      %4945 = vmatprep.mubr.bf16.mxu0 0
      %4946 = vmatmul.mubr.bf16.gmra.mxu0 %v4800
      %v4947 = vpop.f32.mrf.mxu0
      %v4948 = vadd.f32 0.0, %v4947
      %v4949 = vpop.f32.mrf.mxu0
      %v4950 = vpop.f32.mrf.mxu0
      %v4951 = vadd.f32 0.0, %v4950
      %v4952 = vpop.f32.mrf.mxu0
      %4953 = vdwg.mxu0
      %v4954 = vadd.f32 %v4618, %v4892
      %v4955 = vadd.f32 %v4621, %v4895
      %v4956 = vadd.f32 %v4626, %v4900
      %v4957 = vadd.f32 %v4629, %v4903
      %v4958 = vadd.f32 %v4634, %v4908
      %v4959 = vadd.f32 %v4637, %v4911
      %v4960 = vadd.f32 %v4642, %v4916
      %v4961 = vadd.f32 %v4645, %v4919
      %v4962 = vadd.f32 %v4650, %v4924
      %v4963 = vadd.f32 %v4653, %v4927
      %v4964 = vadd.f32 %v4658, %v4932
      %v4965 = vadd.f32 %v4661, %v4935
      %v4966 = vadd.f32 %v4666, %v4940
      %v4967 = vadd.f32 %v4669, %v4943
      %v4968 = vadd.f32 %v4674, %v4948
      %v4969 = vadd.f32 %v4677, %v4951
      %s4970 = scalar_lea.vmem [#allocation2], 12
      %v4971 = vld [vmem:[%s4970] sm:$0xf]
      %v4972 = vld [vmem:[%s4970 + $0x4] sm:$0xf]
      %v4973 = vld [vmem:[%s4970 + $0xc] sm:$0xf]
      %v4974 = vld [vmem:[%s4970 + $0x10] sm:$0xf]
      %v4975 = vld [vmem:[%s4970 + $0x18] sm:$0xf]
      %v4976 = vld [vmem:[%s4970 + $0x1c] sm:$0xf]
      %v4977 = vld [vmem:[%s4970 + $0x24] sm:$0xf]
      %v4978 = vld [vmem:[%s4970 + $0x28] sm:$0xf]
      %v4979 = vld [vmem:[%s4970 + $0x30] sm:$0xf]
      %v4980 = vld [vmem:[%s4970 + $0x34] sm:$0xf]
      %v4981 = vld [vmem:[%s4970 + $0x3c] sm:$0xf]
      %v4982 = vld [vmem:[%s4970 + $0x40] sm:$0xf]
      %v4983 = vld [vmem:[%s4970 + $0x48] sm:$0xf]
      %v4984 = vld [vmem:[%s4970 + $0x4c] sm:$0xf]
      %v4985 = vld [vmem:[%s4970 + $0x54] sm:$0xf]
      %v4986 = vld [vmem:[%s4970 + $0x58] sm:$0xf]
      %s4987 = scalar_lea.vmem %s3, 192
      %v4988 = vld [vmem:[%s4987] sm:$0xf]
      %v4989 = vld [vmem:[%s4987 + $0x4] sm:$0xf]
      %v4990 = vld [vmem:[%s4987 + $0x8] sm:$0xf]
      %v4991 = vld [vmem:[%s4987 + $0xc] sm:$0xf]
      %v4992 = vld [vmem:[%s4987 + $0x10] sm:$0xf]
      %v4993 = vld [vmem:[%s4987 + $0x14] sm:$0xf]
      %v4994 = vld [vmem:[%s4987 + $0x18] sm:$0xf]
      %v4995 = vld [vmem:[%s4987 + $0x1c] sm:$0xf]
      %v4996 = vld [vmem:[%s4987 + $0x20] sm:$0xf]
      %v4997 = vld [vmem:[%s4987 + $0x24] sm:$0xf]
      %v4998 = vld [vmem:[%s4987 + $0x28] sm:$0xf]
      %v4999 = vld [vmem:[%s4987 + $0x2c] sm:$0xf]
      %v5000 = vld [vmem:[%s4987 + $0x30] sm:$0xf]
      %v5001 = vld [vmem:[%s4987 + $0x34] sm:$0xf]
      %v5002 = vld [vmem:[%s4987 + $0x38] sm:$0xf]
      %v5003 = vld [vmem:[%s4987 + $0x3c] sm:$0xf]
      %v5020 = vunpack.c.l.b16 %v4971
      %v5021 = vunpack.c.l.b16 %v4972
      %v5022 = vunpack.c.l.b16 %v4973
      %v5023 = vunpack.c.l.b16 %v4974
      %v5024 = vunpack.c.l.b16 %v4975
      %v5025 = vunpack.c.l.b16 %v4976
      %v5026 = vunpack.c.l.b16 %v4977
      %v5027 = vunpack.c.l.b16 %v4978
      %v5028 = vunpack.c.l.b16 %v4979
      %v5029 = vunpack.c.l.b16 %v4980
      %v5030 = vunpack.c.l.b16 %v4981
      %v5031 = vunpack.c.l.b16 %v4982
      %v5032 = vunpack.c.l.b16 %v4983
      %v5033 = vunpack.c.l.b16 %v4984
      %v5034 = vunpack.c.l.b16 %v4985
      %v5035 = vunpack.c.l.b16 %v4986
      %v5036 = vpack.c.b16 %v5021, %v5020
      %v5037 = vpack.c.b16 %v5023, %v5022
      %v5038 = vpack.c.b16 %v5025, %v5024
      %v5039 = vpack.c.b16 %v5027, %v5026
      %v5040 = vpack.c.b16 %v5029, %v5028
      %v5041 = vpack.c.b16 %v5031, %v5030
      %v5042 = vpack.c.b16 %v5033, %v5032
      %v5043 = vpack.c.b16 %v5035, %v5034
      %v5068 = vunpack.c.l.b16 %v4988
      %v5069 = vunpack.c.l.b16 %v4989
      %v5070 = vunpack.c.l.b16 %v4990
      %v5071 = vunpack.c.l.b16 %v4991
      %v5072 = vunpack.c.l.b16 %v4992
      %v5073 = vunpack.c.l.b16 %v4993
      %v5074 = vunpack.c.l.b16 %v4994
      %v5075 = vunpack.c.l.b16 %v4995
      %v5076 = vunpack.c.l.b16 %v4996
      %v5077 = vunpack.c.l.b16 %v4997
      %v5078 = vunpack.c.l.b16 %v4998
      %v5079 = vunpack.c.l.b16 %v4999
      %v5080 = vunpack.c.l.b16 %v5000
      %v5081 = vunpack.c.l.b16 %v5001
      %v5082 = vunpack.c.l.b16 %v5002
      %v5083 = vunpack.c.l.b16 %v5003
      %v5084 = vpack.c.b16 %v5069, %v5068
      %v5085 = vpack.c.b16 %v5071, %v5070
      %v5086 = vpack.c.b16 %v5073, %v5072
      %v5087 = vpack.c.b16 %v5075, %v5074
      %v5088 = vpack.c.b16 %v5077, %v5076
      %v5089 = vpack.c.b16 %v5079, %v5078
      %v5090 = vpack.c.b16 %v5081, %v5080
      %v5091 = vpack.c.b16 %v5083, %v5082
      %5100 = vmatprep.subr.bf16.mxu0 0
      %5101 = vmatpush1.bf16.msra.mxu0 %v5091
      %5102 = vmatprep.subr.bf16.mxu0 0
      %5103 = vmatpush1.bf16.msra.mxu0 %v5090
      %5104 = vmatprep.subr.bf16.mxu0 0
      %5105 = vmatpush1.bf16.msra.mxu0 %v5089
      %5106 = vmatprep.subr.bf16.mxu0 0
      %5107 = vmatpush1.bf16.msra.mxu0 %v5088
      %5108 = vmatprep.subr.bf16.mxu0 0
      %5109 = vmatpush1.bf16.msra.mxu0 %v5087
      %5110 = vmatprep.subr.bf16.mxu0 0
      %5111 = vmatpush1.bf16.msra.mxu0 %v5086
      %5112 = vmatprep.subr.bf16.mxu0 0
      %5113 = vmatpush1.bf16.msra.mxu0 %v5085
      %5114 = vmatprep.subr.bf16.mxu0 0
      %5115 = vmatpush1.bf16.msra.mxu0 %v5084
      %5116 = vmatprep.subr.bf16.mxu0 0
      %5117 = vmatpush2.bf16.msra.mxu0 0
      %5118 = vmatprep.subr.bf16.mxu0 0
      %5119 = vmatpush2.bf16.msra.mxu0 0
      %5120 = vmatprep.subr.bf16.mxu0 0
      %5121 = vmatpush2.bf16.msra.mxu0 0
      %5122 = vmatprep.subr.bf16.mxu0 0
      %5123 = vmatpush2.bf16.msra.mxu0 0
      %5124 = vmatprep.subr.bf16.mxu0 0
      %5125 = vmatpush2.bf16.msra.mxu0 0
      %5126 = vmatprep.subr.bf16.mxu0 0
      %5127 = vmatpush2.bf16.msra.mxu0 0
      %5128 = vmatprep.subr.bf16.mxu0 0
      %5129 = vmatpush2.bf16.msra.mxu0 0
      %5130 = vmatprep.subr.bf16.mxu0 0
      %5131 = vmatpush2.bf16.msra.mxu0 0
      %5132 = vmatprep.mubr.bf16.mxu0 0
      %5133 = vmatmul.mubr.bf16.gmra.mxu0 %v5036
      %v5134 = vpop.f32.mrf.mxu0
      %v5135 = vadd.f32 0.0, %v5134
      %v5136 = vpop.f32.mrf.mxu0
      %v5137 = vpop.f32.mrf.mxu0
      %v5138 = vadd.f32 0.0, %v5137
      %v5139 = vpop.f32.mrf.mxu0
      %5140 = vmatprep.mubr.bf16.mxu0 0
      %5141 = vmatmul.mubr.bf16.gmra.mxu0 %v5037
      %v5142 = vpop.f32.mrf.mxu0
      %v5143 = vadd.f32 0.0, %v5142
      %v5144 = vpop.f32.mrf.mxu0
      %v5145 = vpop.f32.mrf.mxu0
      %v5146 = vadd.f32 0.0, %v5145
      %v5147 = vpop.f32.mrf.mxu0
      %5148 = vmatprep.mubr.bf16.mxu0 0
      %5149 = vmatmul.mubr.bf16.gmra.mxu0 %v5038
      %v5150 = vpop.f32.mrf.mxu0
      %v5151 = vadd.f32 0.0, %v5150
      %v5152 = vpop.f32.mrf.mxu0
      %v5153 = vpop.f32.mrf.mxu0
      %v5154 = vadd.f32 0.0, %v5153
      %v5155 = vpop.f32.mrf.mxu0
      %5156 = vmatprep.mubr.bf16.mxu0 0
      %5157 = vmatmul.mubr.bf16.gmra.mxu0 %v5039
      %v5158 = vpop.f32.mrf.mxu0
      %v5159 = vadd.f32 0.0, %v5158
      %v5160 = vpop.f32.mrf.mxu0
      %v5161 = vpop.f32.mrf.mxu0
      %v5162 = vadd.f32 0.0, %v5161
      %v5163 = vpop.f32.mrf.mxu0
      %5164 = vmatprep.mubr.bf16.mxu0 0
      %5165 = vmatmul.mubr.bf16.gmra.mxu0 %v5040
      %v5166 = vpop.f32.mrf.mxu0
      %v5167 = vadd.f32 0.0, %v5166
      %v5168 = vpop.f32.mrf.mxu0
      %v5169 = vpop.f32.mrf.mxu0
      %v5170 = vadd.f32 0.0, %v5169
      %v5171 = vpop.f32.mrf.mxu0
      %5172 = vmatprep.mubr.bf16.mxu0 0
      %5173 = vmatmul.mubr.bf16.gmra.mxu0 %v5041
      %v5174 = vpop.f32.mrf.mxu0
      %v5175 = vadd.f32 0.0, %v5174
      %v5176 = vpop.f32.mrf.mxu0
      %v5177 = vpop.f32.mrf.mxu0
      %v5178 = vadd.f32 0.0, %v5177
      %v5179 = vpop.f32.mrf.mxu0
      %5180 = vmatprep.mubr.bf16.mxu0 0
      %5181 = vmatmul.mubr.bf16.gmra.mxu0 %v5042
      %v5182 = vpop.f32.mrf.mxu0
      %v5183 = vadd.f32 0.0, %v5182
      %v5184 = vpop.f32.mrf.mxu0
      %v5185 = vpop.f32.mrf.mxu0
      %v5186 = vadd.f32 0.0, %v5185
      %v5187 = vpop.f32.mrf.mxu0
      %5188 = vmatprep.mubr.bf16.mxu0 0
      %5189 = vmatmul.mubr.bf16.gmra.mxu0 %v5043
      %v5190 = vpop.f32.mrf.mxu0
      %v5191 = vadd.f32 0.0, %v5190
      %v5192 = vpop.f32.mrf.mxu0
      %v5193 = vpop.f32.mrf.mxu0
      %v5194 = vadd.f32 0.0, %v5193
      %v5195 = vpop.f32.mrf.mxu0
      %5196 = vdwg.mxu0
      %v5197 = vadd.f32 %v4954, %v5135
      %v5198 = vadd.f32 %v4955, %v5138
      %v5199 = vadd.f32 %v4956, %v5143
      %v5200 = vadd.f32 %v4957, %v5146
      %v5201 = vadd.f32 %v4958, %v5151
      %v5202 = vadd.f32 %v4959, %v5154
      %v5203 = vadd.f32 %v4960, %v5159
      %v5204 = vadd.f32 %v4961, %v5162
      %v5205 = vadd.f32 %v4962, %v5167
      %v5206 = vadd.f32 %v4963, %v5170
      %v5207 = vadd.f32 %v4964, %v5175
      %v5208 = vadd.f32 %v4965, %v5178
      %v5209 = vadd.f32 %v4966, %v5183
      %v5210 = vadd.f32 %v4967, %v5186
      %v5211 = vadd.f32 %v4968, %v5191
      %v5212 = vadd.f32 %v4969, %v5194
      %v5213 = vld [vmem:[%s4970] sm:$0xf]
      %v5214 = vld [vmem:[%s4970 + $0x4] sm:$0xf]
      %v5215 = vld [vmem:[%s4970 + $0x8] sm:$0x1]
      %v5216 = vld [vmem:[%s4970 + $0xc] sm:$0xf]
      %v5217 = vld [vmem:[%s4970 + $0x10] sm:$0xf]
      %v5218 = vld [vmem:[%s4970 + $0x14] sm:$0x1]
      %v5219 = vld [vmem:[%s4970 + $0x18] sm:$0xf]
      %v5220 = vld [vmem:[%s4970 + $0x1c] sm:$0xf]
      %v5221 = vld [vmem:[%s4970 + $0x20] sm:$0x1]
      %v5222 = vld [vmem:[%s4970 + $0x24] sm:$0xf]
      %v5223 = vld [vmem:[%s4970 + $0x28] sm:$0xf]
      %v5224 = vld [vmem:[%s4970 + $0x2c] sm:$0x1]
      %v5225 = vld [vmem:[%s4970 + $0x30] sm:$0xf]
      %v5226 = vld [vmem:[%s4970 + $0x34] sm:$0xf]
      %v5227 = vld [vmem:[%s4970 + $0x38] sm:$0x1]
      %v5228 = vld [vmem:[%s4970 + $0x3c] sm:$0xf]
      %v5229 = vld [vmem:[%s4970 + $0x40] sm:$0xf]
      %v5230 = vld [vmem:[%s4970 + $0x44] sm:$0x1]
      %v5231 = vld [vmem:[%s4970 + $0x48] sm:$0xf]
      %v5232 = vld [vmem:[%s4970 + $0x4c] sm:$0xf]
      %v5233 = vld [vmem:[%s4970 + $0x50] sm:$0x1]
      %v5234 = vld [vmem:[%s4970 + $0x54] sm:$0xf]
      %v5235 = vld [vmem:[%s4970 + $0x58] sm:$0xf]
      %v5236 = vld [vmem:[%s4970 + $0x5c] sm:$0x1]
      %v5238 = vshrl.u32 %v5213, 16
      %v5240 = vrot.slane %v5238, 4
      %v5241 = vshll.u32 %v5213, 16
      %v5243 = vrot.slane %v5241, 5
      %v5244 = vor.u32 %v5240, %v5243
      %v5245 = vrot.slane %v5244, 4
      %v5247 = vshll.u32 %v5214, 16
      %v5249 = vrot.slane %v5247, 5
      %v5250 = vsel %vm303, %v5245, %v5249
      %v5251 = vshrl.u32 %v5214, 16
      %v5253 = vrot.slane %v5251, 4
      %v5254 = vor.u32 %v5253, %v5249
      %v5255 = vrot.slane %v5254, 4
      %v5257 = vshll.u32 %v5215, 16
      %v5259 = vrot.slane %v5257, 5
      %v5260 = vsel %vm303, %v5255, %v5259
      %v5262 = vshrl.u32 %v5216, 16
      %v5264 = vrot.slane %v5262, 4
      %v5265 = vshll.u32 %v5216, 16
      %v5267 = vrot.slane %v5265, 5
      %v5268 = vor.u32 %v5264, %v5267
      %v5269 = vrot.slane %v5268, 4
      %v5271 = vshll.u32 %v5217, 16
      %v5273 = vrot.slane %v5271, 5
      %v5274 = vsel %vm303, %v5269, %v5273
      %v5275 = vshrl.u32 %v5217, 16
      %v5277 = vrot.slane %v5275, 4
      %v5278 = vor.u32 %v5277, %v5273
      %v5279 = vrot.slane %v5278, 4
      %v5281 = vshll.u32 %v5218, 16
      %v5283 = vrot.slane %v5281, 5
      %v5284 = vsel %vm303, %v5279, %v5283
      %v5286 = vshrl.u32 %v5219, 16
      %v5288 = vrot.slane %v5286, 4
      %v5289 = vshll.u32 %v5219, 16
      %v5291 = vrot.slane %v5289, 5
      %v5292 = vor.u32 %v5288, %v5291
      %v5293 = vrot.slane %v5292, 4
      %v5295 = vshll.u32 %v5220, 16
      %v5297 = vrot.slane %v5295, 5
      %v5298 = vsel %vm303, %v5293, %v5297
      %v5299 = vshrl.u32 %v5220, 16
      %v5301 = vrot.slane %v5299, 4
      %v5302 = vor.u32 %v5301, %v5297
      %v5303 = vrot.slane %v5302, 4
      %v5305 = vshll.u32 %v5221, 16
      %v5307 = vrot.slane %v5305, 5
      %v5308 = vsel %vm303, %v5303, %v5307
      %v5310 = vshrl.u32 %v5222, 16
      %v5312 = vrot.slane %v5310, 4
      %v5313 = vshll.u32 %v5222, 16
      %v5315 = vrot.slane %v5313, 5
      %v5316 = vor.u32 %v5312, %v5315
      %v5317 = vrot.slane %v5316, 4
      %v5319 = vshll.u32 %v5223, 16
      %v5321 = vrot.slane %v5319, 5
      %v5322 = vsel %vm303, %v5317, %v5321
      %v5323 = vshrl.u32 %v5223, 16
      %v5325 = vrot.slane %v5323, 4
      %v5326 = vor.u32 %v5325, %v5321
      %v5327 = vrot.slane %v5326, 4
      %v5329 = vshll.u32 %v5224, 16
      %v5331 = vrot.slane %v5329, 5
      %v5332 = vsel %vm303, %v5327, %v5331
      %v5334 = vshrl.u32 %v5225, 16
      %v5336 = vrot.slane %v5334, 4
      %v5337 = vshll.u32 %v5225, 16
      %v5339 = vrot.slane %v5337, 5
      %v5340 = vor.u32 %v5336, %v5339
      %v5341 = vrot.slane %v5340, 4
      %v5343 = vshll.u32 %v5226, 16
      %v5345 = vrot.slane %v5343, 5
      %v5346 = vsel %vm303, %v5341, %v5345
      %v5347 = vshrl.u32 %v5226, 16
      %v5349 = vrot.slane %v5347, 4
      %v5350 = vor.u32 %v5349, %v5345
      %v5351 = vrot.slane %v5350, 4
      %v5353 = vshll.u32 %v5227, 16
      %v5355 = vrot.slane %v5353, 5
      %v5356 = vsel %vm303, %v5351, %v5355
      %v5358 = vshrl.u32 %v5228, 16
      %v5360 = vrot.slane %v5358, 4
      %v5361 = vshll.u32 %v5228, 16
      %v5363 = vrot.slane %v5361, 5
      %v5364 = vor.u32 %v5360, %v5363
      %v5365 = vrot.slane %v5364, 4
      %v5367 = vshll.u32 %v5229, 16
      %v5369 = vrot.slane %v5367, 5
      %v5370 = vsel %vm303, %v5365, %v5369
      %v5371 = vshrl.u32 %v5229, 16
      %v5373 = vrot.slane %v5371, 4
      %v5374 = vor.u32 %v5373, %v5369
      %v5375 = vrot.slane %v5374, 4
      %v5377 = vshll.u32 %v5230, 16
      %v5379 = vrot.slane %v5377, 5
      %v5380 = vsel %vm303, %v5375, %v5379
      %v5382 = vshrl.u32 %v5231, 16
      %v5384 = vrot.slane %v5382, 4
      %v5385 = vshll.u32 %v5231, 16
      %v5387 = vrot.slane %v5385, 5
      %v5388 = vor.u32 %v5384, %v5387
      %v5389 = vrot.slane %v5388, 4
      %v5391 = vshll.u32 %v5232, 16
      %v5393 = vrot.slane %v5391, 5
      %v5394 = vsel %vm303, %v5389, %v5393
      %v5395 = vshrl.u32 %v5232, 16
      %v5397 = vrot.slane %v5395, 4
      %v5398 = vor.u32 %v5397, %v5393
      %v5399 = vrot.slane %v5398, 4
      %v5401 = vshll.u32 %v5233, 16
      %v5403 = vrot.slane %v5401, 5
      %v5404 = vsel %vm303, %v5399, %v5403
      %v5406 = vshrl.u32 %v5234, 16
      %v5408 = vrot.slane %v5406, 4
      %v5409 = vshll.u32 %v5234, 16
      %v5411 = vrot.slane %v5409, 5
      %v5412 = vor.u32 %v5408, %v5411
      %v5413 = vrot.slane %v5412, 4
      %v5415 = vshll.u32 %v5235, 16
      %v5417 = vrot.slane %v5415, 5
      %v5418 = vsel %vm303, %v5413, %v5417
      %v5419 = vshrl.u32 %v5235, 16
      %v5421 = vrot.slane %v5419, 4
      %v5422 = vor.u32 %v5421, %v5417
      %v5423 = vrot.slane %v5422, 4
      %v5425 = vshll.u32 %v5236, 16
      %v5427 = vrot.slane %v5425, 5
      %v5428 = vsel %vm303, %v5423, %v5427
      %s5429 = scalar_lea.vmem %s3, 256
      %v5430 = vld [vmem:[%s5429] sm:$0xf]
      %v5431 = vld [vmem:[%s5429 + $0x4] sm:$0xf]
      %v5432 = vld [vmem:[%s5429 + $0x8] sm:$0xf]
      %v5433 = vld [vmem:[%s5429 + $0xc] sm:$0xf]
      %v5434 = vld [vmem:[%s5429 + $0x10] sm:$0xf]
      %v5435 = vld [vmem:[%s5429 + $0x14] sm:$0xf]
      %v5436 = vld [vmem:[%s5429 + $0x18] sm:$0xf]
      %v5437 = vld [vmem:[%s5429 + $0x1c] sm:$0xf]
      %v5438 = vld [vmem:[%s5429 + $0x20] sm:$0xf]
      %v5439 = vld [vmem:[%s5429 + $0x24] sm:$0xf]
      %v5440 = vld [vmem:[%s5429 + $0x28] sm:$0xf]
      %v5441 = vld [vmem:[%s5429 + $0x2c] sm:$0xf]
      %v5442 = vld [vmem:[%s5429 + $0x30] sm:$0xf]
      %v5443 = vld [vmem:[%s5429 + $0x34] sm:$0xf]
      %v5444 = vld [vmem:[%s5429 + $0x38] sm:$0xf]
      %v5445 = vld [vmem:[%s5429 + $0x3c] sm:$0xf]
      %v5446 = vunpack.c.l.b16 %v5250
      %v5447 = vunpack.c.l.b16 %v5260
      %v5448 = vunpack.c.l.b16 %v5274
      %v5449 = vunpack.c.l.b16 %v5284
      %v5450 = vunpack.c.l.b16 %v5298
      %v5451 = vunpack.c.l.b16 %v5308
      %v5452 = vunpack.c.l.b16 %v5322
      %v5453 = vunpack.c.l.b16 %v5332
      %v5454 = vunpack.c.l.b16 %v5346
      %v5455 = vunpack.c.l.b16 %v5356
      %v5456 = vunpack.c.l.b16 %v5370
      %v5457 = vunpack.c.l.b16 %v5380
      %v5458 = vunpack.c.l.b16 %v5394
      %v5459 = vunpack.c.l.b16 %v5404
      %v5460 = vunpack.c.l.b16 %v5418
      %v5461 = vunpack.c.l.b16 %v5428
      %v5462 = vpack.c.b16 %v5447, %v5446
      %v5463 = vpack.c.b16 %v5449, %v5448
      %v5464 = vpack.c.b16 %v5451, %v5450
      %v5465 = vpack.c.b16 %v5453, %v5452
      %v5466 = vpack.c.b16 %v5455, %v5454
      %v5467 = vpack.c.b16 %v5457, %v5456
      %v5468 = vpack.c.b16 %v5459, %v5458
      %v5469 = vpack.c.b16 %v5461, %v5460
      %v5494 = vunpack.c.l.b16 %v5430
      %v5495 = vunpack.c.l.b16 %v5431
      %v5496 = vunpack.c.l.b16 %v5432
      %v5497 = vunpack.c.l.b16 %v5433
      %v5498 = vunpack.c.l.b16 %v5434
      %v5499 = vunpack.c.l.b16 %v5435
      %v5500 = vunpack.c.l.b16 %v5436
      %v5501 = vunpack.c.l.b16 %v5437
      %v5502 = vunpack.c.l.b16 %v5438
      %v5503 = vunpack.c.l.b16 %v5439
      %v5504 = vunpack.c.l.b16 %v5440
      %v5505 = vunpack.c.l.b16 %v5441
      %v5506 = vunpack.c.l.b16 %v5442
      %v5507 = vunpack.c.l.b16 %v5443
      %v5508 = vunpack.c.l.b16 %v5444
      %v5509 = vunpack.c.l.b16 %v5445
      %v5510 = vpack.c.b16 %v5495, %v5494
      %v5511 = vpack.c.b16 %v5497, %v5496
      %v5512 = vpack.c.b16 %v5499, %v5498
      %v5513 = vpack.c.b16 %v5501, %v5500
      %v5514 = vpack.c.b16 %v5503, %v5502
      %v5515 = vpack.c.b16 %v5505, %v5504
      %v5516 = vpack.c.b16 %v5507, %v5506
      %v5517 = vpack.c.b16 %v5509, %v5508
      %5526 = vmatprep.subr.bf16.mxu0 0
      %5527 = vmatpush1.bf16.msra.mxu0 %v5517
      %5528 = vmatprep.subr.bf16.mxu0 0
      %5529 = vmatpush1.bf16.msra.mxu0 %v5516
      %5530 = vmatprep.subr.bf16.mxu0 0
      %5531 = vmatpush1.bf16.msra.mxu0 %v5515
      %5532 = vmatprep.subr.bf16.mxu0 0
      %5533 = vmatpush1.bf16.msra.mxu0 %v5514
      %5534 = vmatprep.subr.bf16.mxu0 0
      %5535 = vmatpush1.bf16.msra.mxu0 %v5513
      %5536 = vmatprep.subr.bf16.mxu0 0
      %5537 = vmatpush1.bf16.msra.mxu0 %v5512
      %5538 = vmatprep.subr.bf16.mxu0 0
      %5539 = vmatpush1.bf16.msra.mxu0 %v5511
      %5540 = vmatprep.subr.bf16.mxu0 0
      %5541 = vmatpush1.bf16.msra.mxu0 %v5510
      %5542 = vmatprep.subr.bf16.mxu0 0
      %5543 = vmatpush2.bf16.msra.mxu0 0
      %5544 = vmatprep.subr.bf16.mxu0 0
      %5545 = vmatpush2.bf16.msra.mxu0 0
      %5546 = vmatprep.subr.bf16.mxu0 0
      %5547 = vmatpush2.bf16.msra.mxu0 0
      %5548 = vmatprep.subr.bf16.mxu0 0
      %5549 = vmatpush2.bf16.msra.mxu0 0
      %5550 = vmatprep.subr.bf16.mxu0 0
      %5551 = vmatpush2.bf16.msra.mxu0 0
      %5552 = vmatprep.subr.bf16.mxu0 0
      %5553 = vmatpush2.bf16.msra.mxu0 0
      %5554 = vmatprep.subr.bf16.mxu0 0
      %5555 = vmatpush2.bf16.msra.mxu0 0
      %5556 = vmatprep.subr.bf16.mxu0 0
      %5557 = vmatpush2.bf16.msra.mxu0 0
      %5558 = vmatprep.mubr.bf16.mxu0 0
      %5559 = vmatmul.mubr.bf16.gmra.mxu0 %v5462
      %v5560 = vpop.f32.mrf.mxu0
      %v5561 = vadd.f32 0.0, %v5560
      %v5562 = vpop.f32.mrf.mxu0
      %v5563 = vpop.f32.mrf.mxu0
      %v5564 = vadd.f32 0.0, %v5563
      %v5565 = vpop.f32.mrf.mxu0
      %5566 = vmatprep.mubr.bf16.mxu0 0
      %5567 = vmatmul.mubr.bf16.gmra.mxu0 %v5463
      %v5568 = vpop.f32.mrf.mxu0
      %v5569 = vadd.f32 0.0, %v5568
      %v5570 = vpop.f32.mrf.mxu0
      %v5571 = vpop.f32.mrf.mxu0
      %v5572 = vadd.f32 0.0, %v5571
      %v5573 = vpop.f32.mrf.mxu0
      %5574 = vmatprep.mubr.bf16.mxu0 0
      %5575 = vmatmul.mubr.bf16.gmra.mxu0 %v5464
      %v5576 = vpop.f32.mrf.mxu0
      %v5577 = vadd.f32 0.0, %v5576
      %v5578 = vpop.f32.mrf.mxu0
      %v5579 = vpop.f32.mrf.mxu0
      %v5580 = vadd.f32 0.0, %v5579
      %v5581 = vpop.f32.mrf.mxu0
      %5582 = vmatprep.mubr.bf16.mxu0 0
      %5583 = vmatmul.mubr.bf16.gmra.mxu0 %v5465
      %v5584 = vpop.f32.mrf.mxu0
      %v5585 = vadd.f32 0.0, %v5584
      %v5586 = vpop.f32.mrf.mxu0
      %v5587 = vpop.f32.mrf.mxu0
      %v5588 = vadd.f32 0.0, %v5587
      %v5589 = vpop.f32.mrf.mxu0
      %5590 = vmatprep.mubr.bf16.mxu0 0
      %5591 = vmatmul.mubr.bf16.gmra.mxu0 %v5466
      %v5592 = vpop.f32.mrf.mxu0
      %v5593 = vadd.f32 0.0, %v5592
      %v5594 = vpop.f32.mrf.mxu0
      %v5595 = vpop.f32.mrf.mxu0
      %v5596 = vadd.f32 0.0, %v5595
      %v5597 = vpop.f32.mrf.mxu0
      %5598 = vmatprep.mubr.bf16.mxu0 0
      %5599 = vmatmul.mubr.bf16.gmra.mxu0 %v5467
      %v5600 = vpop.f32.mrf.mxu0
      %v5601 = vadd.f32 0.0, %v5600
      %v5602 = vpop.f32.mrf.mxu0
      %v5603 = vpop.f32.mrf.mxu0
      %v5604 = vadd.f32 0.0, %v5603
      %v5605 = vpop.f32.mrf.mxu0
      %5606 = vmatprep.mubr.bf16.mxu0 0
      %5607 = vmatmul.mubr.bf16.gmra.mxu0 %v5468
      %v5608 = vpop.f32.mrf.mxu0
      %v5609 = vadd.f32 0.0, %v5608
      %v5610 = vpop.f32.mrf.mxu0
      %v5611 = vpop.f32.mrf.mxu0
      %v5612 = vadd.f32 0.0, %v5611
      %v5613 = vpop.f32.mrf.mxu0
      %5614 = vmatprep.mubr.bf16.mxu0 0
      %5615 = vmatmul.mubr.bf16.gmra.mxu0 %v5469
      %v5616 = vpop.f32.mrf.mxu0
      %v5617 = vadd.f32 0.0, %v5616
      %v5618 = vpop.f32.mrf.mxu0
      %v5619 = vpop.f32.mrf.mxu0
      %v5620 = vadd.f32 0.0, %v5619
      %v5621 = vpop.f32.mrf.mxu0
      %5622 = vdwg.mxu0
      %v5623 = vadd.f32 %v5197, %v5561
      %v5624 = vadd.f32 %v5198, %v5564
      %v5625 = vadd.f32 %v5199, %v5569
      %v5626 = vadd.f32 %v5200, %v5572
      %v5627 = vadd.f32 %v5201, %v5577
      %v5628 = vadd.f32 %v5202, %v5580
      %v5629 = vadd.f32 %v5203, %v5585
      %v5630 = vadd.f32 %v5204, %v5588
      %v5631 = vadd.f32 %v5205, %v5593
      %v5632 = vadd.f32 %v5206, %v5596
      %v5633 = vadd.f32 %v5207, %v5601
      %v5634 = vadd.f32 %v5208, %v5604
      %v5635 = vadd.f32 %v5209, %v5609
      %v5636 = vadd.f32 %v5210, %v5612
      %v5637 = vadd.f32 %v5211, %v5617
      %v5638 = vadd.f32 %v5212, %v5620
      %v5639 = vld [vmem:[%s4970] sm:$0xe]
      %v5640 = vld [vmem:[%s4970 + $0xc] sm:$0xe]
      %v5641 = vld [vmem:[%s4970 + $0x18] sm:$0xe]
      %v5642 = vld [vmem:[%s4970 + $0x24] sm:$0xe]
      %v5643 = vld [vmem:[%s4970 + $0x30] sm:$0xe]
      %v5644 = vld [vmem:[%s4970 + $0x3c] sm:$0xe]
      %v5645 = vld [vmem:[%s4970 + $0x48] sm:$0xe]
      %v5646 = vld [vmem:[%s4970 + $0x54] sm:$0xe]
      %v5671 = vrot.slane %v5639, 5
      %v5672 = vrot.slane %v5671, 4
      %v5673 = vrot.slane %v5214, 5
      %v5674 = vsel %vm1015, %v5672, %v5673
      %v5675 = vrot.slane %v5673, 4
      %v5676 = vrot.slane %v5215, 5
      %v5677 = vsel %vm1015, %v5675, %v5676
      %v5678 = vrot.slane %v5640, 5
      %v5679 = vrot.slane %v5678, 4
      %v5680 = vrot.slane %v5217, 5
      %v5681 = vsel %vm1015, %v5679, %v5680
      %v5682 = vrot.slane %v5680, 4
      %v5683 = vrot.slane %v5218, 5
      %v5684 = vsel %vm1015, %v5682, %v5683
      %v5685 = vrot.slane %v5641, 5
      %v5686 = vrot.slane %v5685, 4
      %v5687 = vrot.slane %v5220, 5
      %v5688 = vsel %vm1015, %v5686, %v5687
      %v5689 = vrot.slane %v5687, 4
      %v5690 = vrot.slane %v5221, 5
      %v5691 = vsel %vm1015, %v5689, %v5690
      %v5692 = vrot.slane %v5642, 5
      %v5693 = vrot.slane %v5692, 4
      %v5694 = vrot.slane %v5223, 5
      %v5695 = vsel %vm1015, %v5693, %v5694
      %v5696 = vrot.slane %v5694, 4
      %v5697 = vrot.slane %v5224, 5
      %v5698 = vsel %vm1015, %v5696, %v5697
      %v5699 = vrot.slane %v5643, 5
      %v5700 = vrot.slane %v5699, 4
      %v5701 = vrot.slane %v5226, 5
      %v5702 = vsel %vm1015, %v5700, %v5701
      %v5703 = vrot.slane %v5701, 4
      %v5704 = vrot.slane %v5227, 5
      %v5705 = vsel %vm1015, %v5703, %v5704
      %v5706 = vrot.slane %v5644, 5
      %v5707 = vrot.slane %v5706, 4
      %v5708 = vrot.slane %v5229, 5
      %v5709 = vsel %vm1015, %v5707, %v5708
      %v5710 = vrot.slane %v5708, 4
      %v5711 = vrot.slane %v5230, 5
      %v5712 = vsel %vm1015, %v5710, %v5711
      %v5713 = vrot.slane %v5645, 5
      %v5714 = vrot.slane %v5713, 4
      %v5715 = vrot.slane %v5232, 5
      %v5716 = vsel %vm1015, %v5714, %v5715
      %v5717 = vrot.slane %v5715, 4
      %v5718 = vrot.slane %v5233, 5
      %v5719 = vsel %vm1015, %v5717, %v5718
      %v5720 = vrot.slane %v5646, 5
      %v5721 = vrot.slane %v5720, 4
      %v5722 = vrot.slane %v5235, 5
      %v5723 = vsel %vm1015, %v5721, %v5722
      %v5724 = vrot.slane %v5722, 4
      %v5725 = vrot.slane %v5236, 5
      %v5726 = vsel %vm1015, %v5724, %v5725
      %s5727 = scalar_lea.vmem %s3, 320
      %v5728 = vld [vmem:[%s5727] sm:$0xf]
      %v5729 = vld [vmem:[%s5727 + $0x4] sm:$0xf]
      %v5730 = vld [vmem:[%s5727 + $0x8] sm:$0xf]
      %v5731 = vld [vmem:[%s5727 + $0xc] sm:$0xf]
      %v5732 = vld [vmem:[%s5727 + $0x10] sm:$0xf]
      %v5733 = vld [vmem:[%s5727 + $0x14] sm:$0xf]
      %v5734 = vld [vmem:[%s5727 + $0x18] sm:$0xf]
      %v5735 = vld [vmem:[%s5727 + $0x1c] sm:$0xf]
      %v5736 = vld [vmem:[%s5727 + $0x20] sm:$0xf]
      %v5737 = vld [vmem:[%s5727 + $0x24] sm:$0xf]
      %v5738 = vld [vmem:[%s5727 + $0x28] sm:$0xf]
      %v5739 = vld [vmem:[%s5727 + $0x2c] sm:$0xf]
      %v5740 = vld [vmem:[%s5727 + $0x30] sm:$0xf]
      %v5741 = vld [vmem:[%s5727 + $0x34] sm:$0xf]
      %v5742 = vld [vmem:[%s5727 + $0x38] sm:$0xf]
      %v5743 = vld [vmem:[%s5727 + $0x3c] sm:$0xf]
      %v5744 = vunpack.c.l.b16 %v5674
      %v5745 = vunpack.c.l.b16 %v5677
      %v5746 = vunpack.c.l.b16 %v5681
      %v5747 = vunpack.c.l.b16 %v5684
      %v5748 = vunpack.c.l.b16 %v5688
      %v5749 = vunpack.c.l.b16 %v5691
      %v5750 = vunpack.c.l.b16 %v5695
      %v5751 = vunpack.c.l.b16 %v5698
      %v5752 = vunpack.c.l.b16 %v5702
      %v5753 = vunpack.c.l.b16 %v5705
      %v5754 = vunpack.c.l.b16 %v5709
      %v5755 = vunpack.c.l.b16 %v5712
      %v5756 = vunpack.c.l.b16 %v5716
      %v5757 = vunpack.c.l.b16 %v5719
      %v5758 = vunpack.c.l.b16 %v5723
      %v5759 = vunpack.c.l.b16 %v5726
      %v5760 = vpack.c.b16 %v5745, %v5744
      %v5761 = vpack.c.b16 %v5747, %v5746
      %v5762 = vpack.c.b16 %v5749, %v5748
      %v5763 = vpack.c.b16 %v5751, %v5750
      %v5764 = vpack.c.b16 %v5753, %v5752
      %v5765 = vpack.c.b16 %v5755, %v5754
      %v5766 = vpack.c.b16 %v5757, %v5756
      %v5767 = vpack.c.b16 %v5759, %v5758
      %v5792 = vunpack.c.l.b16 %v5728
      %v5793 = vunpack.c.l.b16 %v5729
      %v5794 = vunpack.c.l.b16 %v5730
      %v5795 = vunpack.c.l.b16 %v5731
      %v5796 = vunpack.c.l.b16 %v5732
      %v5797 = vunpack.c.l.b16 %v5733
      %v5798 = vunpack.c.l.b16 %v5734
      %v5799 = vunpack.c.l.b16 %v5735
      %v5800 = vunpack.c.l.b16 %v5736
      %v5801 = vunpack.c.l.b16 %v5737
      %v5802 = vunpack.c.l.b16 %v5738
      %v5803 = vunpack.c.l.b16 %v5739
      %v5804 = vunpack.c.l.b16 %v5740
      %v5805 = vunpack.c.l.b16 %v5741
      %v5806 = vunpack.c.l.b16 %v5742
      %v5807 = vunpack.c.l.b16 %v5743
      %v5808 = vpack.c.b16 %v5793, %v5792
      %v5809 = vpack.c.b16 %v5795, %v5794
      %v5810 = vpack.c.b16 %v5797, %v5796
      %v5811 = vpack.c.b16 %v5799, %v5798
      %v5812 = vpack.c.b16 %v5801, %v5800
      %v5813 = vpack.c.b16 %v5803, %v5802
      %v5814 = vpack.c.b16 %v5805, %v5804
      %v5815 = vpack.c.b16 %v5807, %v5806
      %5824 = vmatprep.subr.bf16.mxu0 0
      %5825 = vmatpush1.bf16.msra.mxu0 %v5815
      %5826 = vmatprep.subr.bf16.mxu0 0
      %5827 = vmatpush1.bf16.msra.mxu0 %v5814
      %5828 = vmatprep.subr.bf16.mxu0 0
      %5829 = vmatpush1.bf16.msra.mxu0 %v5813
      %5830 = vmatprep.subr.bf16.mxu0 0
      %5831 = vmatpush1.bf16.msra.mxu0 %v5812
      %5832 = vmatprep.subr.bf16.mxu0 0
      %5833 = vmatpush1.bf16.msra.mxu0 %v5811
      %5834 = vmatprep.subr.bf16.mxu0 0
      %5835 = vmatpush1.bf16.msra.mxu0 %v5810
      %5836 = vmatprep.subr.bf16.mxu0 0
      %5837 = vmatpush1.bf16.msra.mxu0 %v5809
      %5838 = vmatprep.subr.bf16.mxu0 0
      %5839 = vmatpush1.bf16.msra.mxu0 %v5808
      %5840 = vmatprep.subr.bf16.mxu0 0
      %5841 = vmatpush2.bf16.msra.mxu0 0
      %5842 = vmatprep.subr.bf16.mxu0 0
      %5843 = vmatpush2.bf16.msra.mxu0 0
      %5844 = vmatprep.subr.bf16.mxu0 0
      %5845 = vmatpush2.bf16.msra.mxu0 0
      %5846 = vmatprep.subr.bf16.mxu0 0
      %5847 = vmatpush2.bf16.msra.mxu0 0
      %5848 = vmatprep.subr.bf16.mxu0 0
      %5849 = vmatpush2.bf16.msra.mxu0 0
      %5850 = vmatprep.subr.bf16.mxu0 0
      %5851 = vmatpush2.bf16.msra.mxu0 0
      %5852 = vmatprep.subr.bf16.mxu0 0
      %5853 = vmatpush2.bf16.msra.mxu0 0
      %5854 = vmatprep.subr.bf16.mxu0 0
      %5855 = vmatpush2.bf16.msra.mxu0 0
      %5856 = vmatprep.mubr.bf16.mxu0 0
      %5857 = vmatmul.mubr.bf16.gmra.mxu0 %v5760
      %v5858 = vpop.f32.mrf.mxu0
      %v5859 = vadd.f32 0.0, %v5858
      %v5860 = vpop.f32.mrf.mxu0
      %v5861 = vpop.f32.mrf.mxu0
      %v5862 = vadd.f32 0.0, %v5861
      %v5863 = vpop.f32.mrf.mxu0
      %5864 = vmatprep.mubr.bf16.mxu0 0
      %5865 = vmatmul.mubr.bf16.gmra.mxu0 %v5761
      %v5866 = vpop.f32.mrf.mxu0
      %v5867 = vadd.f32 0.0, %v5866
      %v5868 = vpop.f32.mrf.mxu0
      %v5869 = vpop.f32.mrf.mxu0
      %v5870 = vadd.f32 0.0, %v5869
      %v5871 = vpop.f32.mrf.mxu0
      %5872 = vmatprep.mubr.bf16.mxu0 0
      %5873 = vmatmul.mubr.bf16.gmra.mxu0 %v5762
      %v5874 = vpop.f32.mrf.mxu0
      %v5875 = vadd.f32 0.0, %v5874
      %v5876 = vpop.f32.mrf.mxu0
      %v5877 = vpop.f32.mrf.mxu0
      %v5878 = vadd.f32 0.0, %v5877
      %v5879 = vpop.f32.mrf.mxu0
      %5880 = vmatprep.mubr.bf16.mxu0 0
      %5881 = vmatmul.mubr.bf16.gmra.mxu0 %v5763
      %v5882 = vpop.f32.mrf.mxu0
      %v5883 = vadd.f32 0.0, %v5882
      %v5884 = vpop.f32.mrf.mxu0
      %v5885 = vpop.f32.mrf.mxu0
      %v5886 = vadd.f32 0.0, %v5885
      %v5887 = vpop.f32.mrf.mxu0
      %5888 = vmatprep.mubr.bf16.mxu0 0
      %5889 = vmatmul.mubr.bf16.gmra.mxu0 %v5764
      %v5890 = vpop.f32.mrf.mxu0
      %v5891 = vadd.f32 0.0, %v5890
      %v5892 = vpop.f32.mrf.mxu0
      %v5893 = vpop.f32.mrf.mxu0
      %v5894 = vadd.f32 0.0, %v5893
      %v5895 = vpop.f32.mrf.mxu0
      %5896 = vmatprep.mubr.bf16.mxu0 0
      %5897 = vmatmul.mubr.bf16.gmra.mxu0 %v5765
      %v5898 = vpop.f32.mrf.mxu0
      %v5899 = vadd.f32 0.0, %v5898
      %v5900 = vpop.f32.mrf.mxu0
      %v5901 = vpop.f32.mrf.mxu0
      %v5902 = vadd.f32 0.0, %v5901
      %v5903 = vpop.f32.mrf.mxu0
      %5904 = vmatprep.mubr.bf16.mxu0 0
      %5905 = vmatmul.mubr.bf16.gmra.mxu0 %v5766
      %v5906 = vpop.f32.mrf.mxu0
      %v5907 = vadd.f32 0.0, %v5906
      %v5908 = vpop.f32.mrf.mxu0
      %v5909 = vpop.f32.mrf.mxu0
      %v5910 = vadd.f32 0.0, %v5909
      %v5911 = vpop.f32.mrf.mxu0
      %5912 = vmatprep.mubr.bf16.mxu0 0
      %5913 = vmatmul.mubr.bf16.gmra.mxu0 %v5767
      %v5914 = vpop.f32.mrf.mxu0
      %v5915 = vadd.f32 0.0, %v5914
      %v5916 = vpop.f32.mrf.mxu0
      %v5917 = vpop.f32.mrf.mxu0
      %v5918 = vadd.f32 0.0, %v5917
      %v5919 = vpop.f32.mrf.mxu0
      %5920 = vdwg.mxu0
      %v5921 = vadd.f32 %v5623, %v5859
      %v5922 = vadd.f32 %v5624, %v5862
      %v5923 = vadd.f32 %v5625, %v5867
      %v5924 = vadd.f32 %v5626, %v5870
      %v5925 = vadd.f32 %v5627, %v5875
      %v5926 = vadd.f32 %v5628, %v5878
      %v5927 = vadd.f32 %v5629, %v5883
      %v5928 = vadd.f32 %v5630, %v5886
      %v5929 = vadd.f32 %v5631, %v5891
      %v5930 = vadd.f32 %v5632, %v5894
      %v5931 = vadd.f32 %v5633, %v5899
      %v5932 = vadd.f32 %v5634, %v5902
      %v5933 = vadd.f32 %v5635, %v5907
      %v5934 = vadd.f32 %v5636, %v5910
      %v5935 = vadd.f32 %v5637, %v5915
      %v5936 = vadd.f32 %v5638, %v5918
      %s5937 = scalar_lea.vmem [#allocation2], 24
      %v5938 = vld [vmem:[%s5937] sm:$0xf]
      %v5939 = vld [vmem:[%s5937 + $0x4] sm:$0xf]
      %v5940 = vld [vmem:[%s5937 + $0xc] sm:$0xf]
      %v5941 = vld [vmem:[%s5937 + $0x10] sm:$0xf]
      %v5942 = vld [vmem:[%s5937 + $0x18] sm:$0xf]
      %v5943 = vld [vmem:[%s5937 + $0x1c] sm:$0xf]
      %v5944 = vld [vmem:[%s5937 + $0x24] sm:$0xf]
      %v5945 = vld [vmem:[%s5937 + $0x28] sm:$0xf]
      %v5946 = vld [vmem:[%s5937 + $0x30] sm:$0xf]
      %v5947 = vld [vmem:[%s5937 + $0x34] sm:$0xf]
      %v5948 = vld [vmem:[%s5937 + $0x3c] sm:$0xf]
      %v5949 = vld [vmem:[%s5937 + $0x40] sm:$0xf]
      %v5950 = vld [vmem:[%s5937 + $0x48] sm:$0xf]
      %v5951 = vld [vmem:[%s5937 + $0x4c] sm:$0xf]
      %v5952 = vld [vmem:[%s5937 + $0x54] sm:$0xf]
      %v5953 = vld [vmem:[%s5937 + $0x58] sm:$0xf]
      %s5954 = scalar_lea.vmem %s3, 384
      %v5955 = vld [vmem:[%s5954] sm:$0xf]
      %v5956 = vld [vmem:[%s5954 + $0x4] sm:$0xf]
      %v5957 = vld [vmem:[%s5954 + $0x8] sm:$0xf]
      %v5958 = vld [vmem:[%s5954 + $0xc] sm:$0xf]
      %v5959 = vld [vmem:[%s5954 + $0x10] sm:$0xf]
      %v5960 = vld [vmem:[%s5954 + $0x14] sm:$0xf]
      %v5961 = vld [vmem:[%s5954 + $0x18] sm:$0xf]
      %v5962 = vld [vmem:[%s5954 + $0x1c] sm:$0xf]
      %v5963 = vld [vmem:[%s5954 + $0x20] sm:$0xf]
      %v5964 = vld [vmem:[%s5954 + $0x24] sm:$0xf]
      %v5965 = vld [vmem:[%s5954 + $0x28] sm:$0xf]
      %v5966 = vld [vmem:[%s5954 + $0x2c] sm:$0xf]
      %v5967 = vld [vmem:[%s5954 + $0x30] sm:$0xf]
      %v5968 = vld [vmem:[%s5954 + $0x34] sm:$0xf]
      %v5969 = vld [vmem:[%s5954 + $0x38] sm:$0xf]
      %v5970 = vld [vmem:[%s5954 + $0x3c] sm:$0xf]
      %v5987 = vunpack.c.l.b16 %v5938
      %v5988 = vunpack.c.l.b16 %v5939
      %v5989 = vunpack.c.l.b16 %v5940
      %v5990 = vunpack.c.l.b16 %v5941
      %v5991 = vunpack.c.l.b16 %v5942
      %v5992 = vunpack.c.l.b16 %v5943
      %v5993 = vunpack.c.l.b16 %v5944
      %v5994 = vunpack.c.l.b16 %v5945
      %v5995 = vunpack.c.l.b16 %v5946
      %v5996 = vunpack.c.l.b16 %v5947
      %v5997 = vunpack.c.l.b16 %v5948
      %v5998 = vunpack.c.l.b16 %v5949
      %v5999 = vunpack.c.l.b16 %v5950
      %v6000 = vunpack.c.l.b16 %v5951
      %v6001 = vunpack.c.l.b16 %v5952
      %v6002 = vunpack.c.l.b16 %v5953
      %v6003 = vpack.c.b16 %v5988, %v5987
      %v6004 = vpack.c.b16 %v5990, %v5989
      %v6005 = vpack.c.b16 %v5992, %v5991
      %v6006 = vpack.c.b16 %v5994, %v5993
      %v6007 = vpack.c.b16 %v5996, %v5995
      %v6008 = vpack.c.b16 %v5998, %v5997
      %v6009 = vpack.c.b16 %v6000, %v5999
      %v6010 = vpack.c.b16 %v6002, %v6001
      %v6035 = vunpack.c.l.b16 %v5955
      %v6036 = vunpack.c.l.b16 %v5956
      %v6037 = vunpack.c.l.b16 %v5957
      %v6038 = vunpack.c.l.b16 %v5958
      %v6039 = vunpack.c.l.b16 %v5959
      %v6040 = vunpack.c.l.b16 %v5960
      %v6041 = vunpack.c.l.b16 %v5961
      %v6042 = vunpack.c.l.b16 %v5962
      %v6043 = vunpack.c.l.b16 %v5963
      %v6044 = vunpack.c.l.b16 %v5964
      %v6045 = vunpack.c.l.b16 %v5965
      %v6046 = vunpack.c.l.b16 %v5966
      %v6047 = vunpack.c.l.b16 %v5967
      %v6048 = vunpack.c.l.b16 %v5968
      %v6049 = vunpack.c.l.b16 %v5969
      %v6050 = vunpack.c.l.b16 %v5970
      %v6051 = vpack.c.b16 %v6036, %v6035
      %v6052 = vpack.c.b16 %v6038, %v6037
      %v6053 = vpack.c.b16 %v6040, %v6039
      %v6054 = vpack.c.b16 %v6042, %v6041
      %v6055 = vpack.c.b16 %v6044, %v6043
      %v6056 = vpack.c.b16 %v6046, %v6045
      %v6057 = vpack.c.b16 %v6048, %v6047
      %v6058 = vpack.c.b16 %v6050, %v6049
      %6067 = vmatprep.subr.bf16.mxu0 0
      %6068 = vmatpush1.bf16.msra.mxu0 %v6058
      %6069 = vmatprep.subr.bf16.mxu0 0
      %6070 = vmatpush1.bf16.msra.mxu0 %v6057
      %6071 = vmatprep.subr.bf16.mxu0 0
      %6072 = vmatpush1.bf16.msra.mxu0 %v6056
      %6073 = vmatprep.subr.bf16.mxu0 0
      %6074 = vmatpush1.bf16.msra.mxu0 %v6055
      %6075 = vmatprep.subr.bf16.mxu0 0
      %6076 = vmatpush1.bf16.msra.mxu0 %v6054
      %6077 = vmatprep.subr.bf16.mxu0 0
      %6078 = vmatpush1.bf16.msra.mxu0 %v6053
      %6079 = vmatprep.subr.bf16.mxu0 0
      %6080 = vmatpush1.bf16.msra.mxu0 %v6052
      %6081 = vmatprep.subr.bf16.mxu0 0
      %6082 = vmatpush1.bf16.msra.mxu0 %v6051
      %6083 = vmatprep.subr.bf16.mxu0 0
      %6084 = vmatpush2.bf16.msra.mxu0 0
      %6085 = vmatprep.subr.bf16.mxu0 0
      %6086 = vmatpush2.bf16.msra.mxu0 0
      %6087 = vmatprep.subr.bf16.mxu0 0
      %6088 = vmatpush2.bf16.msra.mxu0 0
      %6089 = vmatprep.subr.bf16.mxu0 0
      %6090 = vmatpush2.bf16.msra.mxu0 0
      %6091 = vmatprep.subr.bf16.mxu0 0
      %6092 = vmatpush2.bf16.msra.mxu0 0
      %6093 = vmatprep.subr.bf16.mxu0 0
      %6094 = vmatpush2.bf16.msra.mxu0 0
      %6095 = vmatprep.subr.bf16.mxu0 0
      %6096 = vmatpush2.bf16.msra.mxu0 0
      %6097 = vmatprep.subr.bf16.mxu0 0
      %6098 = vmatpush2.bf16.msra.mxu0 0
      %6099 = vmatprep.mubr.bf16.mxu0 0
      %6100 = vmatmul.mubr.bf16.gmra.mxu0 %v6003
      %v6101 = vpop.f32.mrf.mxu0
      %v6102 = vadd.f32 0.0, %v6101
      %v6103 = vpop.f32.mrf.mxu0
      %v6104 = vpop.f32.mrf.mxu0
      %v6105 = vadd.f32 0.0, %v6104
      %v6106 = vpop.f32.mrf.mxu0
      %6107 = vmatprep.mubr.bf16.mxu0 0
      %6108 = vmatmul.mubr.bf16.gmra.mxu0 %v6004
      %v6109 = vpop.f32.mrf.mxu0
      %v6110 = vadd.f32 0.0, %v6109
      %v6111 = vpop.f32.mrf.mxu0
      %v6112 = vpop.f32.mrf.mxu0
      %v6113 = vadd.f32 0.0, %v6112
      %v6114 = vpop.f32.mrf.mxu0
      %6115 = vmatprep.mubr.bf16.mxu0 0
      %6116 = vmatmul.mubr.bf16.gmra.mxu0 %v6005
      %v6117 = vpop.f32.mrf.mxu0
      %v6118 = vadd.f32 0.0, %v6117
      %v6119 = vpop.f32.mrf.mxu0
      %v6120 = vpop.f32.mrf.mxu0
      %v6121 = vadd.f32 0.0, %v6120
      %v6122 = vpop.f32.mrf.mxu0
      %6123 = vmatprep.mubr.bf16.mxu0 0
      %6124 = vmatmul.mubr.bf16.gmra.mxu0 %v6006
      %v6125 = vpop.f32.mrf.mxu0
      %v6126 = vadd.f32 0.0, %v6125
      %v6127 = vpop.f32.mrf.mxu0
      %v6128 = vpop.f32.mrf.mxu0
      %v6129 = vadd.f32 0.0, %v6128
      %v6130 = vpop.f32.mrf.mxu0
      %6131 = vmatprep.mubr.bf16.mxu0 0
      %6132 = vmatmul.mubr.bf16.gmra.mxu0 %v6007
      %v6133 = vpop.f32.mrf.mxu0
      %v6134 = vadd.f32 0.0, %v6133
      %v6135 = vpop.f32.mrf.mxu0
      %v6136 = vpop.f32.mrf.mxu0
      %v6137 = vadd.f32 0.0, %v6136
      %v6138 = vpop.f32.mrf.mxu0
      %6139 = vmatprep.mubr.bf16.mxu0 0
      %6140 = vmatmul.mubr.bf16.gmra.mxu0 %v6008
      %v6141 = vpop.f32.mrf.mxu0
      %v6142 = vadd.f32 0.0, %v6141
      %v6143 = vpop.f32.mrf.mxu0
      %v6144 = vpop.f32.mrf.mxu0
      %v6145 = vadd.f32 0.0, %v6144
      %v6146 = vpop.f32.mrf.mxu0
      %6147 = vmatprep.mubr.bf16.mxu0 0
      %6148 = vmatmul.mubr.bf16.gmra.mxu0 %v6009
      %v6149 = vpop.f32.mrf.mxu0
      %v6150 = vadd.f32 0.0, %v6149
      %v6151 = vpop.f32.mrf.mxu0
      %v6152 = vpop.f32.mrf.mxu0
      %v6153 = vadd.f32 0.0, %v6152
      %v6154 = vpop.f32.mrf.mxu0
      %6155 = vmatprep.mubr.bf16.mxu0 0
      %6156 = vmatmul.mubr.bf16.gmra.mxu0 %v6010
      %v6157 = vpop.f32.mrf.mxu0
      %v6158 = vadd.f32 0.0, %v6157
      %v6159 = vpop.f32.mrf.mxu0
      %v6160 = vpop.f32.mrf.mxu0
      %v6161 = vadd.f32 0.0, %v6160
      %v6162 = vpop.f32.mrf.mxu0
      %6163 = vdwg.mxu0
      %v6164 = vadd.f32 %v5921, %v6102
      %v6165 = vadd.f32 %v5922, %v6105
      %v6166 = vadd.f32 %v5923, %v6110
      %v6167 = vadd.f32 %v5924, %v6113
      %v6168 = vadd.f32 %v5925, %v6118
      %v6169 = vadd.f32 %v5926, %v6121
      %v6170 = vadd.f32 %v5927, %v6126
      %v6171 = vadd.f32 %v5928, %v6129
      %v6172 = vadd.f32 %v5929, %v6134
      %v6173 = vadd.f32 %v5930, %v6137
      %v6174 = vadd.f32 %v5931, %v6142
      %v6175 = vadd.f32 %v5932, %v6145
      %v6176 = vadd.f32 %v5933, %v6150
      %v6177 = vadd.f32 %v5934, %v6153
      %v6178 = vadd.f32 %v5935, %v6158
      %v6179 = vadd.f32 %v5936, %v6161
      %v6180 = vld [vmem:[%s5937] sm:$0xf]
      %v6181 = vld [vmem:[%s5937 + $0x4] sm:$0xf]
      %v6182 = vld [vmem:[%s5937 + $0x8] sm:$0x1]
      %v6183 = vld [vmem:[%s5937 + $0xc] sm:$0xf]
      %v6184 = vld [vmem:[%s5937 + $0x10] sm:$0xf]
      %v6185 = vld [vmem:[%s5937 + $0x14] sm:$0x1]
      %v6186 = vld [vmem:[%s5937 + $0x18] sm:$0xf]
      %v6187 = vld [vmem:[%s5937 + $0x1c] sm:$0xf]
      %v6188 = vld [vmem:[%s5937 + $0x20] sm:$0x1]
      %v6189 = vld [vmem:[%s5937 + $0x24] sm:$0xf]
      %v6190 = vld [vmem:[%s5937 + $0x28] sm:$0xf]
      %v6191 = vld [vmem:[%s5937 + $0x2c] sm:$0x1]
      %v6192 = vld [vmem:[%s5937 + $0x30] sm:$0xf]
      %v6193 = vld [vmem:[%s5937 + $0x34] sm:$0xf]
      %v6194 = vld [vmem:[%s5937 + $0x38] sm:$0x1]
      %v6195 = vld [vmem:[%s5937 + $0x3c] sm:$0xf]
      %v6196 = vld [vmem:[%s5937 + $0x40] sm:$0xf]
      %v6197 = vld [vmem:[%s5937 + $0x44] sm:$0x1]
      %v6198 = vld [vmem:[%s5937 + $0x48] sm:$0xf]
      %v6199 = vld [vmem:[%s5937 + $0x4c] sm:$0xf]
      %v6200 = vld [vmem:[%s5937 + $0x50] sm:$0x1]
      %v6201 = vld [vmem:[%s5937 + $0x54] sm:$0xf]
      %v6202 = vld [vmem:[%s5937 + $0x58] sm:$0xf]
      %v6203 = vld [vmem:[%s5937 + $0x5c] sm:$0x1]
      %v6205 = vshrl.u32 %v6180, 16
      %v6207 = vrot.slane %v6205, 4
      %v6208 = vshll.u32 %v6180, 16
      %v6210 = vrot.slane %v6208, 5
      %v6211 = vor.u32 %v6207, %v6210
      %v6212 = vrot.slane %v6211, 4
      %v6214 = vshll.u32 %v6181, 16
      %v6216 = vrot.slane %v6214, 5
      %v6217 = vsel %vm303, %v6212, %v6216
      %v6218 = vshrl.u32 %v6181, 16
      %v6220 = vrot.slane %v6218, 4
      %v6221 = vor.u32 %v6220, %v6216
      %v6222 = vrot.slane %v6221, 4
      %v6224 = vshll.u32 %v6182, 16
      %v6226 = vrot.slane %v6224, 5
      %v6227 = vsel %vm303, %v6222, %v6226
      %v6229 = vshrl.u32 %v6183, 16
      %v6231 = vrot.slane %v6229, 4
      %v6232 = vshll.u32 %v6183, 16
      %v6234 = vrot.slane %v6232, 5
      %v6235 = vor.u32 %v6231, %v6234
      %v6236 = vrot.slane %v6235, 4
      %v6238 = vshll.u32 %v6184, 16
      %v6240 = vrot.slane %v6238, 5
      %v6241 = vsel %vm303, %v6236, %v6240
      %v6242 = vshrl.u32 %v6184, 16
      %v6244 = vrot.slane %v6242, 4
      %v6245 = vor.u32 %v6244, %v6240
      %v6246 = vrot.slane %v6245, 4
      %v6248 = vshll.u32 %v6185, 16
      %v6250 = vrot.slane %v6248, 5
      %v6251 = vsel %vm303, %v6246, %v6250
      %v6253 = vshrl.u32 %v6186, 16
      %v6255 = vrot.slane %v6253, 4
      %v6256 = vshll.u32 %v6186, 16
      %v6258 = vrot.slane %v6256, 5
      %v6259 = vor.u32 %v6255, %v6258
      %v6260 = vrot.slane %v6259, 4
      %v6262 = vshll.u32 %v6187, 16
      %v6264 = vrot.slane %v6262, 5
      %v6265 = vsel %vm303, %v6260, %v6264
      %v6266 = vshrl.u32 %v6187, 16
      %v6268 = vrot.slane %v6266, 4
      %v6269 = vor.u32 %v6268, %v6264
      %v6270 = vrot.slane %v6269, 4
      %v6272 = vshll.u32 %v6188, 16
      %v6274 = vrot.slane %v6272, 5
      %v6275 = vsel %vm303, %v6270, %v6274
      %v6277 = vshrl.u32 %v6189, 16
      %v6279 = vrot.slane %v6277, 4
      %v6280 = vshll.u32 %v6189, 16
      %v6282 = vrot.slane %v6280, 5
      %v6283 = vor.u32 %v6279, %v6282
      %v6284 = vrot.slane %v6283, 4
      %v6286 = vshll.u32 %v6190, 16
      %v6288 = vrot.slane %v6286, 5
      %v6289 = vsel %vm303, %v6284, %v6288
      %v6290 = vshrl.u32 %v6190, 16
      %v6292 = vrot.slane %v6290, 4
      %v6293 = vor.u32 %v6292, %v6288
      %v6294 = vrot.slane %v6293, 4
      %v6296 = vshll.u32 %v6191, 16
      %v6298 = vrot.slane %v6296, 5
      %v6299 = vsel %vm303, %v6294, %v6298
      %v6301 = vshrl.u32 %v6192, 16
      %v6303 = vrot.slane %v6301, 4
      %v6304 = vshll.u32 %v6192, 16
      %v6306 = vrot.slane %v6304, 5
      %v6307 = vor.u32 %v6303, %v6306
      %v6308 = vrot.slane %v6307, 4
      %v6310 = vshll.u32 %v6193, 16
      %v6312 = vrot.slane %v6310, 5
      %v6313 = vsel %vm303, %v6308, %v6312
      %v6314 = vshrl.u32 %v6193, 16
      %v6316 = vrot.slane %v6314, 4
      %v6317 = vor.u32 %v6316, %v6312
      %v6318 = vrot.slane %v6317, 4
      %v6320 = vshll.u32 %v6194, 16
      %v6322 = vrot.slane %v6320, 5
      %v6323 = vsel %vm303, %v6318, %v6322
      %v6325 = vshrl.u32 %v6195, 16
      %v6327 = vrot.slane %v6325, 4
      %v6328 = vshll.u32 %v6195, 16
      %v6330 = vrot.slane %v6328, 5
      %v6331 = vor.u32 %v6327, %v6330
      %v6332 = vrot.slane %v6331, 4
      %v6334 = vshll.u32 %v6196, 16
      %v6336 = vrot.slane %v6334, 5
      %v6337 = vsel %vm303, %v6332, %v6336
      %v6338 = vshrl.u32 %v6196, 16
      %v6340 = vrot.slane %v6338, 4
      %v6341 = vor.u32 %v6340, %v6336
      %v6342 = vrot.slane %v6341, 4
      %v6344 = vshll.u32 %v6197, 16
      %v6346 = vrot.slane %v6344, 5
      %v6347 = vsel %vm303, %v6342, %v6346
      %v6349 = vshrl.u32 %v6198, 16
      %v6351 = vrot.slane %v6349, 4
      %v6352 = vshll.u32 %v6198, 16
      %v6354 = vrot.slane %v6352, 5
      %v6355 = vor.u32 %v6351, %v6354
      %v6356 = vrot.slane %v6355, 4
      %v6358 = vshll.u32 %v6199, 16
      %v6360 = vrot.slane %v6358, 5
      %v6361 = vsel %vm303, %v6356, %v6360
      %v6362 = vshrl.u32 %v6199, 16
      %v6364 = vrot.slane %v6362, 4
      %v6365 = vor.u32 %v6364, %v6360
      %v6366 = vrot.slane %v6365, 4
      %v6368 = vshll.u32 %v6200, 16
      %v6370 = vrot.slane %v6368, 5
      %v6371 = vsel %vm303, %v6366, %v6370
      %v6373 = vshrl.u32 %v6201, 16
      %v6375 = vrot.slane %v6373, 4
      %v6376 = vshll.u32 %v6201, 16
      %v6378 = vrot.slane %v6376, 5
      %v6379 = vor.u32 %v6375, %v6378
      %v6380 = vrot.slane %v6379, 4
      %v6382 = vshll.u32 %v6202, 16
      %v6384 = vrot.slane %v6382, 5
      %v6385 = vsel %vm303, %v6380, %v6384
      %v6386 = vshrl.u32 %v6202, 16
      %v6388 = vrot.slane %v6386, 4
      %v6389 = vor.u32 %v6388, %v6384
      %v6390 = vrot.slane %v6389, 4
      %v6392 = vshll.u32 %v6203, 16
      %v6394 = vrot.slane %v6392, 5
      %v6395 = vsel %vm303, %v6390, %v6394
      %s6396 = scalar_lea.vmem %s3, 448
      %v6397 = vld [vmem:[%s6396] sm:$0xf]
      %v6398 = vld [vmem:[%s6396 + $0x4] sm:$0xf]
      %v6399 = vld [vmem:[%s6396 + $0x8] sm:$0xf]
      %v6400 = vld [vmem:[%s6396 + $0xc] sm:$0xf]
      %v6401 = vld [vmem:[%s6396 + $0x10] sm:$0xf]
      %v6402 = vld [vmem:[%s6396 + $0x14] sm:$0xf]
      %v6403 = vld [vmem:[%s6396 + $0x18] sm:$0xf]
      %v6404 = vld [vmem:[%s6396 + $0x1c] sm:$0xf]
      %v6405 = vld [vmem:[%s6396 + $0x20] sm:$0xf]
      %v6406 = vld [vmem:[%s6396 + $0x24] sm:$0xf]
      %v6407 = vld [vmem:[%s6396 + $0x28] sm:$0xf]
      %v6408 = vld [vmem:[%s6396 + $0x2c] sm:$0xf]
      %v6409 = vld [vmem:[%s6396 + $0x30] sm:$0xf]
      %v6410 = vld [vmem:[%s6396 + $0x34] sm:$0xf]
      %v6411 = vld [vmem:[%s6396 + $0x38] sm:$0xf]
      %v6412 = vld [vmem:[%s6396 + $0x3c] sm:$0xf]
      %v6413 = vunpack.c.l.b16 %v6217
      %v6414 = vunpack.c.l.b16 %v6227
      %v6415 = vunpack.c.l.b16 %v6241
      %v6416 = vunpack.c.l.b16 %v6251
      %v6417 = vunpack.c.l.b16 %v6265
      %v6418 = vunpack.c.l.b16 %v6275
      %v6419 = vunpack.c.l.b16 %v6289
      %v6420 = vunpack.c.l.b16 %v6299
      %v6421 = vunpack.c.l.b16 %v6313
      %v6422 = vunpack.c.l.b16 %v6323
      %v6423 = vunpack.c.l.b16 %v6337
      %v6424 = vunpack.c.l.b16 %v6347
      %v6425 = vunpack.c.l.b16 %v6361
      %v6426 = vunpack.c.l.b16 %v6371
      %v6427 = vunpack.c.l.b16 %v6385
      %v6428 = vunpack.c.l.b16 %v6395
      %v6429 = vpack.c.b16 %v6414, %v6413
      %v6430 = vpack.c.b16 %v6416, %v6415
      %v6431 = vpack.c.b16 %v6418, %v6417
      %v6432 = vpack.c.b16 %v6420, %v6419
      %v6433 = vpack.c.b16 %v6422, %v6421
      %v6434 = vpack.c.b16 %v6424, %v6423
      %v6435 = vpack.c.b16 %v6426, %v6425
      %v6436 = vpack.c.b16 %v6428, %v6427
      %v6461 = vunpack.c.l.b16 %v6397
      %v6462 = vunpack.c.l.b16 %v6398
      %v6463 = vunpack.c.l.b16 %v6399
      %v6464 = vunpack.c.l.b16 %v6400
      %v6465 = vunpack.c.l.b16 %v6401
      %v6466 = vunpack.c.l.b16 %v6402
      %v6467 = vunpack.c.l.b16 %v6403
      %v6468 = vunpack.c.l.b16 %v6404
      %v6469 = vunpack.c.l.b16 %v6405
      %v6470 = vunpack.c.l.b16 %v6406
      %v6471 = vunpack.c.l.b16 %v6407
      %v6472 = vunpack.c.l.b16 %v6408
      %v6473 = vunpack.c.l.b16 %v6409
      %v6474 = vunpack.c.l.b16 %v6410
      %v6475 = vunpack.c.l.b16 %v6411
      %v6476 = vunpack.c.l.b16 %v6412
      %v6477 = vpack.c.b16 %v6462, %v6461
      %v6478 = vpack.c.b16 %v6464, %v6463
      %v6479 = vpack.c.b16 %v6466, %v6465
      %v6480 = vpack.c.b16 %v6468, %v6467
      %v6481 = vpack.c.b16 %v6470, %v6469
      %v6482 = vpack.c.b16 %v6472, %v6471
      %v6483 = vpack.c.b16 %v6474, %v6473
      %v6484 = vpack.c.b16 %v6476, %v6475
      %6493 = vmatprep.subr.bf16.mxu0 0
      %6494 = vmatpush1.bf16.msra.mxu0 %v6484
      %6495 = vmatprep.subr.bf16.mxu0 0
      %6496 = vmatpush1.bf16.msra.mxu0 %v6483
      %6497 = vmatprep.subr.bf16.mxu0 0
      %6498 = vmatpush1.bf16.msra.mxu0 %v6482
      %6499 = vmatprep.subr.bf16.mxu0 0
      %6500 = vmatpush1.bf16.msra.mxu0 %v6481
      %6501 = vmatprep.subr.bf16.mxu0 0
      %6502 = vmatpush1.bf16.msra.mxu0 %v6480
      %6503 = vmatprep.subr.bf16.mxu0 0
      %6504 = vmatpush1.bf16.msra.mxu0 %v6479
      %6505 = vmatprep.subr.bf16.mxu0 0
      %6506 = vmatpush1.bf16.msra.mxu0 %v6478
      %6507 = vmatprep.subr.bf16.mxu0 0
      %6508 = vmatpush1.bf16.msra.mxu0 %v6477
      %6509 = vmatprep.subr.bf16.mxu0 0
      %6510 = vmatpush2.bf16.msra.mxu0 0
      %6511 = vmatprep.subr.bf16.mxu0 0
      %6512 = vmatpush2.bf16.msra.mxu0 0
      %6513 = vmatprep.subr.bf16.mxu0 0
      %6514 = vmatpush2.bf16.msra.mxu0 0
      %6515 = vmatprep.subr.bf16.mxu0 0
      %6516 = vmatpush2.bf16.msra.mxu0 0
      %6517 = vmatprep.subr.bf16.mxu0 0
      %6518 = vmatpush2.bf16.msra.mxu0 0
      %6519 = vmatprep.subr.bf16.mxu0 0
      %6520 = vmatpush2.bf16.msra.mxu0 0
      %6521 = vmatprep.subr.bf16.mxu0 0
      %6522 = vmatpush2.bf16.msra.mxu0 0
      %6523 = vmatprep.subr.bf16.mxu0 0
      %6524 = vmatpush2.bf16.msra.mxu0 0
      %6525 = vmatprep.mubr.bf16.mxu0 0
      %6526 = vmatmul.mubr.bf16.gmra.mxu0 %v6429
      %v6527 = vpop.f32.mrf.mxu0
      %v6528 = vadd.f32 0.0, %v6527
      %v6529 = vpop.f32.mrf.mxu0
      %v6530 = vpop.f32.mrf.mxu0
      %v6531 = vadd.f32 0.0, %v6530
      %v6532 = vpop.f32.mrf.mxu0
      %6533 = vmatprep.mubr.bf16.mxu0 0
      %6534 = vmatmul.mubr.bf16.gmra.mxu0 %v6430
      %v6535 = vpop.f32.mrf.mxu0
      %v6536 = vadd.f32 0.0, %v6535
      %v6537 = vpop.f32.mrf.mxu0
      %v6538 = vpop.f32.mrf.mxu0
      %v6539 = vadd.f32 0.0, %v6538
      %v6540 = vpop.f32.mrf.mxu0
      %6541 = vmatprep.mubr.bf16.mxu0 0
      %6542 = vmatmul.mubr.bf16.gmra.mxu0 %v6431
      %v6543 = vpop.f32.mrf.mxu0
      %v6544 = vadd.f32 0.0, %v6543
      %v6545 = vpop.f32.mrf.mxu0
      %v6546 = vpop.f32.mrf.mxu0
      %v6547 = vadd.f32 0.0, %v6546
      %v6548 = vpop.f32.mrf.mxu0
      %6549 = vmatprep.mubr.bf16.mxu0 0
      %6550 = vmatmul.mubr.bf16.gmra.mxu0 %v6432
      %v6551 = vpop.f32.mrf.mxu0
      %v6552 = vadd.f32 0.0, %v6551
      %v6553 = vpop.f32.mrf.mxu0
      %v6554 = vpop.f32.mrf.mxu0
      %v6555 = vadd.f32 0.0, %v6554
      %v6556 = vpop.f32.mrf.mxu0
      %6557 = vmatprep.mubr.bf16.mxu0 0
      %6558 = vmatmul.mubr.bf16.gmra.mxu0 %v6433
      %v6559 = vpop.f32.mrf.mxu0
      %v6560 = vadd.f32 0.0, %v6559
      %v6561 = vpop.f32.mrf.mxu0
      %v6562 = vpop.f32.mrf.mxu0
      %v6563 = vadd.f32 0.0, %v6562
      %v6564 = vpop.f32.mrf.mxu0
      %6565 = vmatprep.mubr.bf16.mxu0 0
      %6566 = vmatmul.mubr.bf16.gmra.mxu0 %v6434
      %v6567 = vpop.f32.mrf.mxu0
      %v6568 = vadd.f32 0.0, %v6567
      %v6569 = vpop.f32.mrf.mxu0
      %v6570 = vpop.f32.mrf.mxu0
      %v6571 = vadd.f32 0.0, %v6570
      %v6572 = vpop.f32.mrf.mxu0
      %6573 = vmatprep.mubr.bf16.mxu0 0
      %6574 = vmatmul.mubr.bf16.gmra.mxu0 %v6435
      %v6575 = vpop.f32.mrf.mxu0
      %v6576 = vadd.f32 0.0, %v6575
      %v6577 = vpop.f32.mrf.mxu0
      %v6578 = vpop.f32.mrf.mxu0
      %v6579 = vadd.f32 0.0, %v6578
      %v6580 = vpop.f32.mrf.mxu0
      %6581 = vmatprep.mubr.bf16.mxu0 0
      %6582 = vmatmul.mubr.bf16.gmra.mxu0 %v6436
      %v6583 = vpop.f32.mrf.mxu0
      %v6584 = vadd.f32 0.0, %v6583
      %v6585 = vpop.f32.mrf.mxu0
      %v6586 = vpop.f32.mrf.mxu0
      %v6587 = vadd.f32 0.0, %v6586
      %v6588 = vpop.f32.mrf.mxu0
      %6589 = vdwg.mxu0
      %v6590 = vadd.f32 %v6164, %v6528
      %v6591 = vadd.f32 %v6165, %v6531
      %v6592 = vadd.f32 %v6166, %v6536
      %v6593 = vadd.f32 %v6167, %v6539
      %v6594 = vadd.f32 %v6168, %v6544
      %v6595 = vadd.f32 %v6169, %v6547
      %v6596 = vadd.f32 %v6170, %v6552
      %v6597 = vadd.f32 %v6171, %v6555
      %v6598 = vadd.f32 %v6172, %v6560
      %v6599 = vadd.f32 %v6173, %v6563
      %v6600 = vadd.f32 %v6174, %v6568
      %v6601 = vadd.f32 %v6175, %v6571
      %v6602 = vadd.f32 %v6176, %v6576
      %v6603 = vadd.f32 %v6177, %v6579
      %v6604 = vadd.f32 %v6178, %v6584
      %v6605 = vadd.f32 %v6179, %v6587
      %v6606 = vld [vmem:[%s5937] sm:$0xe]
      %v6607 = vld [vmem:[%s5937 + $0xc] sm:$0xe]
      %v6608 = vld [vmem:[%s5937 + $0x18] sm:$0xe]
      %v6609 = vld [vmem:[%s5937 + $0x24] sm:$0xe]
      %v6610 = vld [vmem:[%s5937 + $0x30] sm:$0xe]
      %v6611 = vld [vmem:[%s5937 + $0x3c] sm:$0xe]
      %v6612 = vld [vmem:[%s5937 + $0x48] sm:$0xe]
      %v6613 = vld [vmem:[%s5937 + $0x54] sm:$0xe]
      %v6638 = vrot.slane %v6606, 5
      %v6639 = vrot.slane %v6638, 4
      %v6640 = vrot.slane %v6181, 5
      %v6641 = vsel %vm1015, %v6639, %v6640
      %v6642 = vrot.slane %v6640, 4
      %v6643 = vrot.slane %v6182, 5
      %v6644 = vsel %vm1015, %v6642, %v6643
      %v6645 = vrot.slane %v6607, 5
      %v6646 = vrot.slane %v6645, 4
      %v6647 = vrot.slane %v6184, 5
      %v6648 = vsel %vm1015, %v6646, %v6647
      %v6649 = vrot.slane %v6647, 4
      %v6650 = vrot.slane %v6185, 5
      %v6651 = vsel %vm1015, %v6649, %v6650
      %v6652 = vrot.slane %v6608, 5
      %v6653 = vrot.slane %v6652, 4
      %v6654 = vrot.slane %v6187, 5
      %v6655 = vsel %vm1015, %v6653, %v6654
      %v6656 = vrot.slane %v6654, 4
      %v6657 = vrot.slane %v6188, 5
      %v6658 = vsel %vm1015, %v6656, %v6657
      %v6659 = vrot.slane %v6609, 5
      %v6660 = vrot.slane %v6659, 4
      %v6661 = vrot.slane %v6190, 5
      %v6662 = vsel %vm1015, %v6660, %v6661
      %v6663 = vrot.slane %v6661, 4
      %v6664 = vrot.slane %v6191, 5
      %v6665 = vsel %vm1015, %v6663, %v6664
      %v6666 = vrot.slane %v6610, 5
      %v6667 = vrot.slane %v6666, 4
      %v6668 = vrot.slane %v6193, 5
      %v6669 = vsel %vm1015, %v6667, %v6668
      %v6670 = vrot.slane %v6668, 4
      %v6671 = vrot.slane %v6194, 5
      %v6672 = vsel %vm1015, %v6670, %v6671
      %v6673 = vrot.slane %v6611, 5
      %v6674 = vrot.slane %v6673, 4
      %v6675 = vrot.slane %v6196, 5
      %v6676 = vsel %vm1015, %v6674, %v6675
      %v6677 = vrot.slane %v6675, 4
      %v6678 = vrot.slane %v6197, 5
      %v6679 = vsel %vm1015, %v6677, %v6678
      %v6680 = vrot.slane %v6612, 5
      %v6681 = vrot.slane %v6680, 4
      %v6682 = vrot.slane %v6199, 5
      %v6683 = vsel %vm1015, %v6681, %v6682
      %v6684 = vrot.slane %v6682, 4
      %v6685 = vrot.slane %v6200, 5
      %v6686 = vsel %vm1015, %v6684, %v6685
      %v6687 = vrot.slane %v6613, 5
      %v6688 = vrot.slane %v6687, 4
      %v6689 = vrot.slane %v6202, 5
      %v6690 = vsel %vm1015, %v6688, %v6689
      %v6691 = vrot.slane %v6689, 4
      %v6692 = vrot.slane %v6203, 5
      %v6693 = vsel %vm1015, %v6691, %v6692
      %s6694 = scalar_lea.vmem %s3, 512
      %v6695 = vld [vmem:[%s6694] sm:$0xf]
      %v6696 = vld [vmem:[%s6694 + $0x4] sm:$0xf]
      %v6697 = vld [vmem:[%s6694 + $0x8] sm:$0xf]
      %v6698 = vld [vmem:[%s6694 + $0xc] sm:$0xf]
      %v6699 = vld [vmem:[%s6694 + $0x10] sm:$0xf]
      %v6700 = vld [vmem:[%s6694 + $0x14] sm:$0xf]
      %v6701 = vld [vmem:[%s6694 + $0x18] sm:$0xf]
      %v6702 = vld [vmem:[%s6694 + $0x1c] sm:$0xf]
      %v6703 = vld [vmem:[%s6694 + $0x20] sm:$0xf]
      %v6704 = vld [vmem:[%s6694 + $0x24] sm:$0xf]
      %v6705 = vld [vmem:[%s6694 + $0x28] sm:$0xf]
      %v6706 = vld [vmem:[%s6694 + $0x2c] sm:$0xf]
      %v6707 = vld [vmem:[%s6694 + $0x30] sm:$0xf]
      %v6708 = vld [vmem:[%s6694 + $0x34] sm:$0xf]
      %v6709 = vld [vmem:[%s6694 + $0x38] sm:$0xf]
      %v6710 = vld [vmem:[%s6694 + $0x3c] sm:$0xf]
      %v6711 = vunpack.c.l.b16 %v6641
      %v6712 = vunpack.c.l.b16 %v6644
      %v6713 = vunpack.c.l.b16 %v6648
      %v6714 = vunpack.c.l.b16 %v6651
      %v6715 = vunpack.c.l.b16 %v6655
      %v6716 = vunpack.c.l.b16 %v6658
      %v6717 = vunpack.c.l.b16 %v6662
      %v6718 = vunpack.c.l.b16 %v6665
      %v6719 = vunpack.c.l.b16 %v6669
      %v6720 = vunpack.c.l.b16 %v6672
      %v6721 = vunpack.c.l.b16 %v6676
      %v6722 = vunpack.c.l.b16 %v6679
      %v6723 = vunpack.c.l.b16 %v6683
      %v6724 = vunpack.c.l.b16 %v6686
      %v6725 = vunpack.c.l.b16 %v6690
      %v6726 = vunpack.c.l.b16 %v6693
      %v6727 = vpack.c.b16 %v6712, %v6711
      %v6728 = vpack.c.b16 %v6714, %v6713
      %v6729 = vpack.c.b16 %v6716, %v6715
      %v6730 = vpack.c.b16 %v6718, %v6717
      %v6731 = vpack.c.b16 %v6720, %v6719
      %v6732 = vpack.c.b16 %v6722, %v6721
      %v6733 = vpack.c.b16 %v6724, %v6723
      %v6734 = vpack.c.b16 %v6726, %v6725
      %v6759 = vunpack.c.l.b16 %v6695
      %v6760 = vunpack.c.l.b16 %v6696
      %v6761 = vunpack.c.l.b16 %v6697
      %v6762 = vunpack.c.l.b16 %v6698
      %v6763 = vunpack.c.l.b16 %v6699
      %v6764 = vunpack.c.l.b16 %v6700
      %v6765 = vunpack.c.l.b16 %v6701
      %v6766 = vunpack.c.l.b16 %v6702
      %v6767 = vunpack.c.l.b16 %v6703
      %v6768 = vunpack.c.l.b16 %v6704
      %v6769 = vunpack.c.l.b16 %v6705
      %v6770 = vunpack.c.l.b16 %v6706
      %v6771 = vunpack.c.l.b16 %v6707
      %v6772 = vunpack.c.l.b16 %v6708
      %v6773 = vunpack.c.l.b16 %v6709
      %v6774 = vunpack.c.l.b16 %v6710
      %v6775 = vpack.c.b16 %v6760, %v6759
      %v6776 = vpack.c.b16 %v6762, %v6761
      %v6777 = vpack.c.b16 %v6764, %v6763
      %v6778 = vpack.c.b16 %v6766, %v6765
      %v6779 = vpack.c.b16 %v6768, %v6767
      %v6780 = vpack.c.b16 %v6770, %v6769
      %v6781 = vpack.c.b16 %v6772, %v6771
      %v6782 = vpack.c.b16 %v6774, %v6773
      %6791 = vmatprep.subr.bf16.mxu0 0
      %6792 = vmatpush1.bf16.msra.mxu0 %v6782
      %6793 = vmatprep.subr.bf16.mxu0 0
      %6794 = vmatpush1.bf16.msra.mxu0 %v6781
      %6795 = vmatprep.subr.bf16.mxu0 0
      %6796 = vmatpush1.bf16.msra.mxu0 %v6780
      %6797 = vmatprep.subr.bf16.mxu0 0
      %6798 = vmatpush1.bf16.msra.mxu0 %v6779
      %6799 = vmatprep.subr.bf16.mxu0 0
      %6800 = vmatpush1.bf16.msra.mxu0 %v6778
      %6801 = vmatprep.subr.bf16.mxu0 0
      %6802 = vmatpush1.bf16.msra.mxu0 %v6777
      %6803 = vmatprep.subr.bf16.mxu0 0
      %6804 = vmatpush1.bf16.msra.mxu0 %v6776
      %6805 = vmatprep.subr.bf16.mxu0 0
      %6806 = vmatpush1.bf16.msra.mxu0 %v6775
      %6807 = vmatprep.subr.bf16.mxu0 0
      %6808 = vmatpush2.bf16.msra.mxu0 0
      %6809 = vmatprep.subr.bf16.mxu0 0
      %6810 = vmatpush2.bf16.msra.mxu0 0
      %6811 = vmatprep.subr.bf16.mxu0 0
      %6812 = vmatpush2.bf16.msra.mxu0 0
      %6813 = vmatprep.subr.bf16.mxu0 0
      %6814 = vmatpush2.bf16.msra.mxu0 0
      %6815 = vmatprep.subr.bf16.mxu0 0
      %6816 = vmatpush2.bf16.msra.mxu0 0
      %6817 = vmatprep.subr.bf16.mxu0 0
      %6818 = vmatpush2.bf16.msra.mxu0 0
      %6819 = vmatprep.subr.bf16.mxu0 0
      %6820 = vmatpush2.bf16.msra.mxu0 0
      %6821 = vmatprep.subr.bf16.mxu0 0
      %6822 = vmatpush2.bf16.msra.mxu0 0
      %6823 = vmatprep.mubr.bf16.mxu0 0
      %6824 = vmatmul.mubr.bf16.gmra.mxu0 %v6727
      %v6825 = vpop.f32.mrf.mxu0
      %v6826 = vadd.f32 0.0, %v6825
      %v6827 = vpop.f32.mrf.mxu0
      %v6828 = vpop.f32.mrf.mxu0
      %v6829 = vadd.f32 0.0, %v6828
      %v6830 = vpop.f32.mrf.mxu0
      %6831 = vmatprep.mubr.bf16.mxu0 0
      %6832 = vmatmul.mubr.bf16.gmra.mxu0 %v6728
      %v6833 = vpop.f32.mrf.mxu0
      %v6834 = vadd.f32 0.0, %v6833
      %v6835 = vpop.f32.mrf.mxu0
      %v6836 = vpop.f32.mrf.mxu0
      %v6837 = vadd.f32 0.0, %v6836
      %v6838 = vpop.f32.mrf.mxu0
      %6839 = vmatprep.mubr.bf16.mxu0 0
      %6840 = vmatmul.mubr.bf16.gmra.mxu0 %v6729
      %v6841 = vpop.f32.mrf.mxu0
      %v6842 = vadd.f32 0.0, %v6841
      %v6843 = vpop.f32.mrf.mxu0
      %v6844 = vpop.f32.mrf.mxu0
      %v6845 = vadd.f32 0.0, %v6844
      %v6846 = vpop.f32.mrf.mxu0
      %6847 = vmatprep.mubr.bf16.mxu0 0
      %6848 = vmatmul.mubr.bf16.gmra.mxu0 %v6730
      %v6849 = vpop.f32.mrf.mxu0
      %v6850 = vadd.f32 0.0, %v6849
      %v6851 = vpop.f32.mrf.mxu0
      %v6852 = vpop.f32.mrf.mxu0
      %v6853 = vadd.f32 0.0, %v6852
      %v6854 = vpop.f32.mrf.mxu0
      %6855 = vmatprep.mubr.bf16.mxu0 0
      %6856 = vmatmul.mubr.bf16.gmra.mxu0 %v6731
      %v6857 = vpop.f32.mrf.mxu0
      %v6858 = vadd.f32 0.0, %v6857
      %v6859 = vpop.f32.mrf.mxu0
      %v6860 = vpop.f32.mrf.mxu0
      %v6861 = vadd.f32 0.0, %v6860
      %v6862 = vpop.f32.mrf.mxu0
      %6863 = vmatprep.mubr.bf16.mxu0 0
      %6864 = vmatmul.mubr.bf16.gmra.mxu0 %v6732
      %v6865 = vpop.f32.mrf.mxu0
      %v6866 = vadd.f32 0.0, %v6865
      %v6867 = vpop.f32.mrf.mxu0
      %v6868 = vpop.f32.mrf.mxu0
      %v6869 = vadd.f32 0.0, %v6868
      %v6870 = vpop.f32.mrf.mxu0
      %6871 = vmatprep.mubr.bf16.mxu0 0
      %6872 = vmatmul.mubr.bf16.gmra.mxu0 %v6733
      %v6873 = vpop.f32.mrf.mxu0
      %v6874 = vadd.f32 0.0, %v6873
      %v6875 = vpop.f32.mrf.mxu0
      %v6876 = vpop.f32.mrf.mxu0
      %v6877 = vadd.f32 0.0, %v6876
      %v6878 = vpop.f32.mrf.mxu0
      %6879 = vmatprep.mubr.bf16.mxu0 0
      %6880 = vmatmul.mubr.bf16.gmra.mxu0 %v6734
      %v6881 = vpop.f32.mrf.mxu0
      %v6882 = vadd.f32 0.0, %v6881
      %v6883 = vpop.f32.mrf.mxu0
      %v6884 = vpop.f32.mrf.mxu0
      %v6885 = vadd.f32 0.0, %v6884
      %v6886 = vpop.f32.mrf.mxu0
      %6887 = vdwg.mxu0
      %v6888 = vadd.f32 %v6590, %v6826
      %v6889 = vadd.f32 %v6591, %v6829
      %v6890 = vadd.f32 %v6592, %v6834
      %v6891 = vadd.f32 %v6593, %v6837
      %v6892 = vadd.f32 %v6594, %v6842
      %v6893 = vadd.f32 %v6595, %v6845
      %v6894 = vadd.f32 %v6596, %v6850
      %v6895 = vadd.f32 %v6597, %v6853
      %v6896 = vadd.f32 %v6598, %v6858
      %v6897 = vadd.f32 %v6599, %v6861
      %v6898 = vadd.f32 %v6600, %v6866
      %v6899 = vadd.f32 %v6601, %v6869
      %v6900 = vadd.f32 %v6602, %v6874
      %v6901 = vadd.f32 %v6603, %v6877
      %v6902 = vadd.f32 %v6604, %v6882
      %v6903 = vadd.f32 %v6605, %v6885
      %v6904 = vld [vmem:[%s2465] sm:$0xf]
      %v6905 = vld [vmem:[%s2465 + $0x4] sm:$0xf]
      %v6906 = vld [vmem:[%s2465 + $0x8] sm:$0x1]
      %v6907 = vld [vmem:[%s2465 + $0xc] sm:$0xf]
      %v6908 = vld [vmem:[%s2465 + $0x10] sm:$0xf]
      %v6909 = vld [vmem:[%s2465 + $0x14] sm:$0x1]
      %v6910 = vld [vmem:[%s2465 + $0x18] sm:$0xf]
      %v6911 = vld [vmem:[%s2465 + $0x1c] sm:$0xf]
      %v6912 = vld [vmem:[%s2465 + $0x20] sm:$0x1]
      %v6913 = vld [vmem:[%s2465 + $0x24] sm:$0xf]
      %v6914 = vld [vmem:[%s2465 + $0x28] sm:$0xf]
      %v6915 = vld [vmem:[%s2465 + $0x2c] sm:$0x1]
      %v6916 = vld [vmem:[%s2465 + $0x30] sm:$0xf]
      %v6917 = vld [vmem:[%s2465 + $0x34] sm:$0xf]
      %v6918 = vld [vmem:[%s2465 + $0x38] sm:$0x1]
      %v6919 = vld [vmem:[%s2465 + $0x3c] sm:$0xf]
      %v6920 = vld [vmem:[%s2465 + $0x40] sm:$0xf]
      %v6921 = vld [vmem:[%s2465 + $0x44] sm:$0x1]
      %v6922 = vld [vmem:[%s2465 + $0x48] sm:$0xf]
      %v6923 = vld [vmem:[%s2465 + $0x4c] sm:$0xf]
      %v6924 = vld [vmem:[%s2465 + $0x50] sm:$0x1]
      %v6925 = vld [vmem:[%s2465 + $0x54] sm:$0xf]
      %v6926 = vld [vmem:[%s2465 + $0x58] sm:$0xf]
      %v6927 = vld [vmem:[%s2465 + $0x5c] sm:$0x1]
      %v6929 = vshrl.u32 %v6904, 16
      %v6931 = vrot.slane %v6929, 4
      %v6932 = vshll.u32 %v6904, 16
      %v6934 = vrot.slane %v6932, 5
      %v6935 = vor.u32 %v6931, %v6934
      %v6936 = vrot.slane %v6935, 4
      %v6938 = vshll.u32 %v6905, 16
      %v6940 = vrot.slane %v6938, 5
      %v6941 = vsel %vm303, %v6936, %v6940
      %v6942 = vshrl.u32 %v6905, 16
      %v6944 = vrot.slane %v6942, 4
      %v6945 = vor.u32 %v6944, %v6940
      %v6946 = vrot.slane %v6945, 4
      %v6948 = vshll.u32 %v6906, 16
      %v6950 = vrot.slane %v6948, 5
      %v6951 = vsel %vm303, %v6946, %v6950
      %v6953 = vshrl.u32 %v6907, 16
      %v6955 = vrot.slane %v6953, 4
      %v6956 = vshll.u32 %v6907, 16
      %v6958 = vrot.slane %v6956, 5
      %v6959 = vor.u32 %v6955, %v6958
      %v6960 = vrot.slane %v6959, 4
      %v6962 = vshll.u32 %v6908, 16
      %v6964 = vrot.slane %v6962, 5
      %v6965 = vsel %vm303, %v6960, %v6964
      %v6966 = vshrl.u32 %v6908, 16
      %v6968 = vrot.slane %v6966, 4
      %v6969 = vor.u32 %v6968, %v6964
      %v6970 = vrot.slane %v6969, 4
      %v6972 = vshll.u32 %v6909, 16
      %v6974 = vrot.slane %v6972, 5
      %v6975 = vsel %vm303, %v6970, %v6974
      %v6977 = vshrl.u32 %v6910, 16
      %v6979 = vrot.slane %v6977, 4
      %v6980 = vshll.u32 %v6910, 16
      %v6982 = vrot.slane %v6980, 5
      %v6983 = vor.u32 %v6979, %v6982
      %v6984 = vrot.slane %v6983, 4
      %v6986 = vshll.u32 %v6911, 16
      %v6988 = vrot.slane %v6986, 5
      %v6989 = vsel %vm303, %v6984, %v6988
      %v6990 = vshrl.u32 %v6911, 16
      %v6992 = vrot.slane %v6990, 4
      %v6993 = vor.u32 %v6992, %v6988
      %v6994 = vrot.slane %v6993, 4
      %v6996 = vshll.u32 %v6912, 16
      %v6998 = vrot.slane %v6996, 5
      %v6999 = vsel %vm303, %v6994, %v6998
      %v7001 = vshrl.u32 %v6913, 16
      %v7003 = vrot.slane %v7001, 4
      %v7004 = vshll.u32 %v6913, 16
      %v7006 = vrot.slane %v7004, 5
      %v7007 = vor.u32 %v7003, %v7006
      %v7008 = vrot.slane %v7007, 4
      %v7010 = vshll.u32 %v6914, 16
      %v7012 = vrot.slane %v7010, 5
      %v7013 = vsel %vm303, %v7008, %v7012
      %v7014 = vshrl.u32 %v6914, 16
      %v7016 = vrot.slane %v7014, 4
      %v7017 = vor.u32 %v7016, %v7012
      %v7018 = vrot.slane %v7017, 4
      %v7020 = vshll.u32 %v6915, 16
      %v7022 = vrot.slane %v7020, 5
      %v7023 = vsel %vm303, %v7018, %v7022
      %v7025 = vshrl.u32 %v6916, 16
      %v7027 = vrot.slane %v7025, 4
      %v7028 = vshll.u32 %v6916, 16
      %v7030 = vrot.slane %v7028, 5
      %v7031 = vor.u32 %v7027, %v7030
      %v7032 = vrot.slane %v7031, 4
      %v7034 = vshll.u32 %v6917, 16
      %v7036 = vrot.slane %v7034, 5
      %v7037 = vsel %vm303, %v7032, %v7036
      %v7038 = vshrl.u32 %v6917, 16
      %v7040 = vrot.slane %v7038, 4
      %v7041 = vor.u32 %v7040, %v7036
      %v7042 = vrot.slane %v7041, 4
      %v7044 = vshll.u32 %v6918, 16
      %v7046 = vrot.slane %v7044, 5
      %v7047 = vsel %vm303, %v7042, %v7046
      %v7049 = vshrl.u32 %v6919, 16
      %v7051 = vrot.slane %v7049, 4
      %v7052 = vshll.u32 %v6919, 16
      %v7054 = vrot.slane %v7052, 5
      %v7055 = vor.u32 %v7051, %v7054
      %v7056 = vrot.slane %v7055, 4
      %v7058 = vshll.u32 %v6920, 16
      %v7060 = vrot.slane %v7058, 5
      %v7061 = vsel %vm303, %v7056, %v7060
      %v7062 = vshrl.u32 %v6920, 16
      %v7064 = vrot.slane %v7062, 4
      %v7065 = vor.u32 %v7064, %v7060
      %v7066 = vrot.slane %v7065, 4
      %v7068 = vshll.u32 %v6921, 16
      %v7070 = vrot.slane %v7068, 5
      %v7071 = vsel %vm303, %v7066, %v7070
      %v7073 = vshrl.u32 %v6922, 16
      %v7075 = vrot.slane %v7073, 4
      %v7076 = vshll.u32 %v6922, 16
      %v7078 = vrot.slane %v7076, 5
      %v7079 = vor.u32 %v7075, %v7078
      %v7080 = vrot.slane %v7079, 4
      %v7082 = vshll.u32 %v6923, 16
      %v7084 = vrot.slane %v7082, 5
      %v7085 = vsel %vm303, %v7080, %v7084
      %v7086 = vshrl.u32 %v6923, 16
      %v7088 = vrot.slane %v7086, 4
      %v7089 = vor.u32 %v7088, %v7084
      %v7090 = vrot.slane %v7089, 4
      %v7092 = vshll.u32 %v6924, 16
      %v7094 = vrot.slane %v7092, 5
      %v7095 = vsel %vm303, %v7090, %v7094
      %v7097 = vshrl.u32 %v6925, 16
      %v7099 = vrot.slane %v7097, 4
      %v7100 = vshll.u32 %v6925, 16
      %v7102 = vrot.slane %v7100, 5
      %v7103 = vor.u32 %v7099, %v7102
      %v7104 = vrot.slane %v7103, 4
      %v7106 = vshll.u32 %v6926, 16
      %v7108 = vrot.slane %v7106, 5
      %v7109 = vsel %vm303, %v7104, %v7108
      %v7110 = vshrl.u32 %v6926, 16
      %v7112 = vrot.slane %v7110, 4
      %v7113 = vor.u32 %v7112, %v7108
      %v7114 = vrot.slane %v7113, 4
      %v7116 = vshll.u32 %v6927, 16
      %v7118 = vrot.slane %v7116, 5
      %v7119 = vsel %vm303, %v7114, %v7118
      %v7136 = vunpack.c.l.bf16 %v6941
      %v7137 = vunpack.c.l.bf16 %v6951
      %v7138 = vunpack.c.l.bf16 %v6965
      %v7139 = vunpack.c.l.bf16 %v6975
      %v7140 = vunpack.c.l.bf16 %v6989
      %v7141 = vunpack.c.l.bf16 %v6999
      %v7142 = vunpack.c.l.bf16 %v7013
      %v7143 = vunpack.c.l.bf16 %v7023
      %v7144 = vunpack.c.l.bf16 %v7037
      %v7145 = vunpack.c.l.bf16 %v7047
      %v7146 = vunpack.c.l.bf16 %v7061
      %v7147 = vunpack.c.l.bf16 %v7071
      %v7148 = vunpack.c.l.bf16 %v7085
      %v7149 = vunpack.c.l.bf16 %v7095
      %v7150 = vunpack.c.l.bf16 %v7109
      %v7151 = vunpack.c.l.bf16 %v7119
      %v7152 = vld [vmem:[%s4] sm:$0x1]
      %v7154 = vlaneseq
      %v7155 = vshrl.u32 %v7154, 7
      %v7156 = vsub.s32 0, %v7155
      %v7157 = vrot.slane %v7152, %v7156
      %v7159 = vadd.f32 %v6888, %v7157
      %v7160 = vadd.f32 %v6889, %v7157
      %v7161 = vadd.f32 %v6890, %v7157
      %v7162 = vadd.f32 %v6891, %v7157
      %v7163 = vadd.f32 %v6892, %v7157
      %v7164 = vadd.f32 %v6893, %v7157
      %v7165 = vadd.f32 %v6894, %v7157
      %v7166 = vadd.f32 %v6895, %v7157
      %v7167 = vadd.f32 %v6896, %v7157
      %v7168 = vadd.f32 %v6897, %v7157
      %v7169 = vadd.f32 %v6898, %v7157
      %v7170 = vadd.f32 %v6899, %v7157
      %v7171 = vadd.f32 %v6900, %v7157
      %v7172 = vadd.f32 %v6901, %v7157
      %v7173 = vadd.f32 %v6902, %v7157
      %v7174 = vadd.f32 %v6903, %v7157
      %v7175 = vadd.f32 %v7159, %v7136
      %v7176 = vadd.f32 %v7160, %v7137
      %v7177 = vadd.f32 %v7161, %v7138
      %v7178 = vadd.f32 %v7162, %v7139
      %v7179 = vadd.f32 %v7163, %v7140
      %v7180 = vadd.f32 %v7164, %v7141
      %v7181 = vadd.f32 %v7165, %v7142
      %v7182 = vadd.f32 %v7166, %v7143
      %v7183 = vadd.f32 %v7167, %v7144
      %v7184 = vadd.f32 %v7168, %v7145
      %v7185 = vadd.f32 %v7169, %v7146
      %v7186 = vadd.f32 %v7170, %v7147
      %v7187 = vadd.f32 %v7171, %v7148
      %v7188 = vadd.f32 %v7172, %v7149
      %v7189 = vadd.f32 %v7173, %v7150
      %v7190 = vadd.f32 %v7174, %v7151
      %v7191 = vmax.f32 %v7175, 0.0
      %v7192 = vmax.f32 %v7176, 0.0
      %v7193 = vmax.f32 %v7177, 0.0
      %v7194 = vmax.f32 %v7178, 0.0
      %v7195 = vmax.f32 %v7179, 0.0
      %v7196 = vmax.f32 %v7180, 0.0
      %v7197 = vmax.f32 %v7181, 0.0
      %v7198 = vmax.f32 %v7182, 0.0
      %v7199 = vmax.f32 %v7183, 0.0
      %v7200 = vmax.f32 %v7184, 0.0
      %v7201 = vmax.f32 %v7185, 0.0
      %v7202 = vmax.f32 %v7186, 0.0
      %v7203 = vmax.f32 %v7187, 0.0
      %v7204 = vmax.f32 %v7188, 0.0
      %v7205 = vmax.f32 %v7189, 0.0
      %v7206 = vmax.f32 %v7190, 0.0
      %7207 = vst [vmem:[%s248] sm:$0xff] %v7191
      %7208 = vst [vmem:[%s248 + $0x8] sm:$0xff] %v7192
      %7209 = vst [vmem:[%s248 + $0x10] sm:$0xff] %v7193
      %7210 = vst [vmem:[%s248 + $0x18] sm:$0xff] %v7194
      %7211 = vst [vmem:[%s248 + $0x20] sm:$0xff] %v7195
      %7212 = vst [vmem:[%s248 + $0x28] sm:$0xff] %v7196
      %7213 = vst [vmem:[%s248 + $0x30] sm:$0xff] %v7197
      %7214 = vst [vmem:[%s248 + $0x38] sm:$0xff] %v7198
      %7215 = vst [vmem:[%s248 + $0x40] sm:$0xff] %v7199
      %7216 = vst [vmem:[%s248 + $0x48] sm:$0xff] %v7200
      %7217 = vst [vmem:[%s248 + $0x50] sm:$0xff] %v7201
      %7218 = vst [vmem:[%s248 + $0x58] sm:$0xff] %v7202
      %7219 = vst [vmem:[%s248 + $0x60] sm:$0xff] %v7203
      %7220 = vst [vmem:[%s248 + $0x68] sm:$0xff] %v7204
      %7221 = vst [vmem:[%s248 + $0x70] sm:$0xff] %v7205
      %7222 = vst [vmem:[%s248 + $0x78] sm:$0xff] %v7206
      %s7223 = smul.u32 8, %s21
      %p7224 = scmp.lt.s32.totalorder %s20, 1
      %s7225 = scalar_select %p7224, %s20, 1
      %p7226 = scmp.lt.s32.totalorder %s7223, 15
      %s7227 = scalar_select %p7226, %s7223, 15
      %s7228 = smul.addr %s7227, 2
      %s7229 = smul.addr %s7225, 32
      %s7230 = sadd.s32 %s7228, %s7229
      %s7231 = smul.addr %s7230, 8
      %s7232 = scalar_lea.vmem %s5, %s7231
      // Predicated region
      $region49: #{basic_block_forward.1} parent=39 // pred_check
        %p7233 = pneg %p158
      $region50: #{basic_block_forward.1} parent=39 // pred_check_branch
        %7235 = sbr.rel (%p7233) target = $region52
      $region51: #{basic_block_forward.1} parent=39 // pred_region
        %s7236 = smul.u32 8, %s21
      $region52: #{basic_block_forward.1} parent=39 // pred_fallthru
        _
    $region40: #{basic_block_forward.1} parent=5 // pred_fallthru
      _
    %p7237 = scmp.le.s32.totalorder 2, %s11
    // Predicated region
    $region53: #{basic_block_forward.1} parent=5 // pred_check
      %p7238 = pneg %p7237
    $region54: #{basic_block_forward.1} parent=5 // pred_check_branch
      %7240 = sbr.rel (%p7238) target = $region56
    $region55: #{basic_block_forward.1} parent=5 // pred_region
      %s7241 = ssub.s32 %s11, 2
      // Predicated region
      $region57: #{basic_block_forward.1} parent=55 // pred_check
        %p7242 = pneg %p164
      $region58: #{basic_block_forward.1} parent=55 // pred_check_branch
        %7244 = sbr.rel (%p7242) target = $region60
      $region59: #{basic_block_forward.1} parent=55 // pred_region
        %s7245 = smul.u32 8, %s23
        %p7246 = scmp.lt.s32.totalorder %s22, 1
        %s7247 = scalar_select %p7246, %s22, 1
        %p7248 = scmp.lt.s32.totalorder %s7245, 15
        %s7249 = scalar_select %p7248, %s7245, 15
        %s7250 = smul.addr %s7249, 2
        %s7251 = smul.addr %s7247, 32
        %s7252 = sadd.s32 %s7250, %s7251
        %s7253 = smul.addr %s7252, 8
        %s7254 = scalar_lea.vmem %s5, %s7253
      $region60: #{basic_block_forward.1} parent=55 // pred_fallthru
        _
    $region56: #{basic_block_forward.1} parent=5 // pred_fallthru
      _
  $region6: #{basic_block_forward.1} parent=0 // loop_footer
    %s15 = sadd.s32 1, %s11
  $region7: #{basic_block_forward.1} parent=0 // loop_footer_branch
    %10 = sbr.rel target = $region3
  $region8: #{basic_block_forward.1} parent=0 // loop_exit
    _

</llo_original>
